<compile_context>
chip_gen: v5e
topology: v5e:2x2
jax: 0.10.0
libtpu: 0.0.40
codegen_flags: <defaults>
</compile_context>

<pallas_src>
import jax
import jax.numpy as jnp
from jax.experimental import pallas as pl
from jax.experimental.pallas import tpu as pltpu

D_IN = 453        # fc1 input / fc4 output (logical)
D_H = 256         # hidden width
D_Z = 20          # latent width
D_IN_PAD = 512    # 453 padded to a lane-dense multiple of 128
D_HEAD = 128      # fused mu|logvar head width (cols 0:20 = mu, 20:40 = logvar)


def _vae_kernel(x_ref,
                w1_ref, b1_ref,
                wh_ref, bh_ref,
                w3_ref, b3_ref,
                w4_ref, b4_ref,
                eps_ref,
                recon_ref, ml_ref):
    cdt = w1_ref.dtype            # matmul operand dtype (f32 or bf16); acc is f32

    x = x_ref[...]                                                     # (TB, 512)

    # ---- encode ----
    h1 = jnp.dot(x, w1_ref[...], preferred_element_type=jnp.float32) + b1_ref[...]
    h1 = jnp.maximum(h1, 0.0)                                          # (TB, 256) f32

    # fused mu/logvar head: one lane-dense (256,128) matmul instead of two (256,20)
    ml = jnp.dot(h1.astype(cdt), wh_ref[...],
                 preferred_element_type=jnp.float32) + bh_ref[...]     # (TB, 128)
    mu = ml[:, :D_Z]                                                   # (TB, 20)
    logvar = ml[:, D_Z:2 * D_Z]                                        # (TB, 20)

    # ---- reparameterize (f32 elementwise; exp goes to EUP) ----
    z = mu + eps_ref[:, :D_Z] * jnp.exp(0.5 * logvar)                  # (TB, 20)

    # ---- decode ----
    h3 = jnp.dot(z.astype(cdt), w3_ref[...],
                 preferred_element_type=jnp.float32) + b3_ref[...]
    h3 = jnp.maximum(h3, 0.0)                                          # (TB, 256) f32

    logits = jnp.dot(h3.astype(cdt), w4_ref[...],
                     preferred_element_type=jnp.float32) + b4_ref[...]  # (TB, 512)

    # lane-dense output stores (no masked vst on 453/20-wide tails)
    recon_ref[...] = jax.nn.sigmoid(logits).astype(recon_ref.dtype)
    ml_ref[...] = ml.astype(ml_ref.dtype)


def pack_params(params, compute_dtype=jnp.float32):
    """Pad / fuse the logical (in,out) params into lane-dense kernel operands."""
    f32 = jnp.float32
    w1 = jnp.zeros((D_IN_PAD, D_H), f32).at[:D_IN, :].set(params["w1"])
    wh = (jnp.zeros((D_H, D_HEAD), f32)
          .at[:, :D_Z].set(params["w21"])
          .at[:, D_Z:2 * D_Z].set(params["w22"]))
    bh = (jnp.zeros((1, D_HEAD), f32)
          .at[:, :D_Z].set(params["b21"])
          .at[:, D_Z:2 * D_Z].set(params["b22"]))
    w4 = jnp.zeros((D_H, D_IN_PAD), f32).at[:, :D_IN].set(params["w4"])
    b4 = jnp.zeros((1, D_IN_PAD), f32).at[:, :D_IN].set(params["b4"])
    return dict(
        w1=w1.astype(compute_dtype), b1=params["b1"].astype(f32),
        wh=wh.astype(compute_dtype), bh=bh,
        w3=params["w3"].astype(compute_dtype), b3=params["b3"].astype(f32),
        w4=w4.astype(compute_dtype), b4=b4,
    )


def vae_forward(x, params, eps, *, tb=128, compute_dtype=jnp.float32):
    """x: (B, 453); eps: (B, 20); params: logical (in,out)/(1,out) dict."""
    B = x.shape[0]
    n_tiles = pl.cdiv(B, tb)
    B_pad = n_tiles * tb

    p = pack_params(params, compute_dtype)

    # host-side zero-padding of the batch-tiled operands
    x_pad = jnp.zeros((B_pad, D_IN_PAD), compute_dtype)
    x_pad = x_pad.at[:B, :D_IN].set(x.astype(compute_dtype))
    eps_pad = jnp.zeros((B_pad, D_HEAD), jnp.float32)
    eps_pad = eps_pad.at[:B, :D_Z].set(eps.astype(jnp.float32))

    def _tile(shape):        # per-batch-tile operand
        return pl.BlockSpec(shape, lambda i: (i, 0))

    def _resident(shape):    # VMEM-resident across all batch tiles
        return pl.BlockSpec(shape, lambda i: (0, 0))

    in_specs = [
        _tile((tb, D_IN_PAD)),                              # x
        _resident((D_IN_PAD, D_H)), _resident((1, D_H)),    # w1, b1
        _resident((D_H, D_HEAD)), _resident((1, D_HEAD)),   # fused head
        _resident((D_Z, D_H)), _resident((1, D_H)),         # w3, b3
        _resident((D_H, D_IN_PAD)), _resident((1, D_IN_PAD)),  # w4, b4
        _tile((tb, D_HEAD)),                                # eps
    ]
    out_specs = (
        _tile((tb, D_IN_PAD)),                              # recon (padded)
        _tile((tb, D_HEAD)),                                # mu|logvar (padded)
    )
    out_shape = (
        jax.ShapeDtypeStruct((B_pad, D_IN_PAD), jnp.float32),
        jax.ShapeDtypeStruct((B_pad, D_HEAD), jnp.float32),
    )

    flops = 2 * B_pad * (D_IN_PAD * D_H + D_H * D_HEAD + D_Z * D_H + D_H * D_IN_PAD)
    transcendentals = B_pad * (D_Z + D_IN_PAD)              # exp + sigmoid
    param_bytes = sum(int(v.size) * v.dtype.itemsize for v in p.values())
    io_bytes = (int(x_pad.size) * x_pad.dtype.itemsize
                + int(eps_pad.size) * eps_pad.dtype.itemsize
                + B_pad * (D_IN_PAD + D_HEAD) * 4)
    cost = pl.CostEstimate(flops=flops, transcendentals=transcendentals,
                           bytes_accessed=param_bytes + io_bytes)

    recon_pad, ml = pl.pallas_call(
        _vae_kernel,
        out_shape=out_shape,
        grid=(n_tiles,),
        in_specs=in_specs,
        out_specs=out_specs,
        compiler_params=pltpu.CompilerParams(
            dimension_semantics=("parallel",),   # batch tiles are independent
            vmem_limit_bytes=8 << 20,            # safe on v7x's 64 MiB VMEM
        ),
        cost_estimate=cost,
    )(x_pad,
      p["w1"], p["b1"],
      p["wh"], p["bh"],
      p["w3"], p["b3"],
      p["w4"], p["b4"],
      eps_pad)

    recon = recon_pad[:B, :D_IN]
    mu = ml[:B, :D_Z]
    logvar = ml[:B, D_Z:2 * D_Z]
    return recon, mu, logvar


def init_params(key):
    """Deterministic synthetic parameters (shapes match the nn.Linear layers)."""
    ks = jax.random.split(key, 10)

    def linear(kw, kb, fan_in, fan_out):
        bound = 1.0 / jnp.sqrt(fan_in)
        w = jax.random.uniform(kw, (fan_in, fan_out), jnp.float32, -bound, bound)
        b = jax.random.uniform(kb, (1, fan_out), jnp.float32, -bound, bound)
        return w, b

    w1, b1 = linear(ks[0], ks[1], D_IN, D_H)
    w21, b21 = linear(ks[2], ks[3], D_H, D_Z)
    w22, b22 = linear(ks[4], ks[5], D_H, D_Z)
    w3, b3 = linear(ks[6], ks[7], D_Z, D_H)
    w4, b4 = linear(ks[8], ks[9], D_H, D_IN)
    return dict(w1=w1, b1=b1, w21=w21, b21=b21, w22=w22, b22=b22,
                w3=w3, b3=b3, w4=w4, b4=b4)


def vae_reference(x, params, eps):
    """Pure-JAX reference (unpadded) for correctness checking."""
    h1 = jax.nn.relu(x @ params["w1"] + params["b1"])
    mu = h1 @ params["w21"] + params["b21"]
    logvar = h1 @ params["w22"] + params["b22"]
    z = mu + eps * jnp.exp(0.5 * logvar)
    h3 = jax.nn.relu(z @ params["w3"] + params["b3"])
    recon = jax.nn.sigmoid(h3 @ params["w4"] + params["b4"])
    return recon, mu, logvar


if __name__ == "__main__":
    key = jax.random.PRNGKey(0)
    k_x, k_eps, k_p = jax.random.split(key, 3)

    B = 2
    x = jax.random.normal(k_x, (B, D_IN), jnp.float32)      # torch does x.view(-1, 453)
    eps = jax.random.normal(k_eps, (B, D_Z), jnp.float32)   # torch.randn_like(std)
    params = init_params(k_p)

    # f32 path (all generations) — tight check vs pure-JAX reference
    recon, mu, logvar = jax.block_until_ready(
        vae_forward(x, params, eps, tb=128, compute_dtype=jnp.float32))
    r_ref, mu_ref, lv_ref = vae_reference(x, params, eps)
    assert recon.shape == (B, D_IN) and mu.shape == (B, D_Z) and logvar.shape == (B, D_Z)
    assert jnp.allclose(recon, r_ref, atol=1e-4)
    assert jnp.allclose(mu, mu_ref, atol=1e-4)
    assert jnp.allclose(logvar, lv_ref, atol=1e-4)

    # bf16 matmul-operand path (v6e/v7x optimization) — loose check
    recon_b, mu_b, lv_b = jax.block_until_ready(
        vae_forward(x, params, eps, tb=128, compute_dtype=jnp.bfloat16))
    assert recon_b.shape == (B, D_IN)
    assert jnp.allclose(recon_b, r_ref, atol=5e-2, rtol=5e-2)
    assert jnp.allclose(mu_b, mu_ref, atol=5e-2, rtol=5e-2)
    assert jnp.allclose(lv_b, lv_ref, atol=5e-2, rtol=5e-2)

    print("KERNEL_OK")
</pallas_src>

<mosaic_0001>
module attributes {stable_mosaic.version = 11 : i64} {
  func.func @_vae_kernel(%arg0: i32, %arg1: memref<128x512xf32, #tpu.memory_space<vmem>>, %arg2: memref<512x256xf32, #tpu.memory_space<vmem>>, %arg3: memref<1x256xf32, #tpu.memory_space<vmem>>, %arg4: memref<256x128xf32, #tpu.memory_space<vmem>>, %arg5: memref<1x128xf32, #tpu.memory_space<vmem>>, %arg6: memref<20x256xf32, #tpu.memory_space<vmem>>, %arg7: memref<1x256xf32, #tpu.memory_space<vmem>>, %arg8: memref<256x512xf32, #tpu.memory_space<vmem>>, %arg9: memref<1x512xf32, #tpu.memory_space<vmem>>, %arg10: memref<128x128xf32, #tpu.memory_space<vmem>>, %arg11: memref<128x512xf32, #tpu.memory_space<vmem>>, %arg12: memref<128x128xf32, #tpu.memory_space<vmem>>) attributes {dimension_semantics = [#tpu.dimension_semantics<parallel>], iteration_bounds = array<i64: 1>, scalar_prefetch = 0 : i64, scratch_operands = 0 : i64, tpu.core_type = #tpu.core_type<tc>, window_params = [{transform_indices = @transform_0, window_bounds = array<i64: 128, 512>}, {pipeline_mode = #tpu.pipeline_mode<synchronous>, transform_indices = @transform_1, window_bounds = array<i64: 512, 256>}, {pipeline_mode = #tpu.pipeline_mode<synchronous>, transform_indices = @transform_2, window_bounds = array<i64: 1, 256>}, {pipeline_mode = #tpu.pipeline_mode<synchronous>, transform_indices = @transform_3, window_bounds = array<i64: 256, 128>}, {pipeline_mode = #tpu.pipeline_mode<synchronous>, transform_indices = @transform_4, window_bounds = array<i64: 1, 128>}, {pipeline_mode = #tpu.pipeline_mode<synchronous>, transform_indices = @transform_5, window_bounds = array<i64: 20, 256>}, {pipeline_mode = #tpu.pipeline_mode<synchronous>, transform_indices = @transform_6, window_bounds = array<i64: 1, 256>}, {pipeline_mode = #tpu.pipeline_mode<synchronous>, transform_indices = @transform_7, window_bounds = array<i64: 256, 512>}, {pipeline_mode = #tpu.pipeline_mode<synchronous>, transform_indices = @transform_8, window_bounds = array<i64: 1, 512>}, {transform_indices = @transform_9, window_bounds = array<i64: 128, 128>}, {transform_indices = @transform_10, window_bounds = array<i64: 128, 512>}, {transform_indices = @transform_11, window_bounds = array<i64: 128, 128>}]} {
    %c0 = arith.constant 0 : index
    %c0_0 = arith.constant 0 : index
    %0 = vector.load %arg1[%c0, %c0_0] : memref<128x512xf32, #tpu.memory_space<vmem>>, vector<128x512xf32>
    %c0_1 = arith.constant 0 : index
    %c0_2 = arith.constant 0 : index
    %1 = vector.load %arg2[%c0_1, %c0_2] : memref<512x256xf32, #tpu.memory_space<vmem>>, vector<512x256xf32>
    %cst = arith.constant dense<0.000000e+00> : vector<128x256xf32>
    %2 = tpu.matmul %0, %1, %cst {dimension_numbers = #tpu.dot_dimension_numbers<[1], [0], [0], [1], [0, 0, 1, 1], [], []>} : vector<128x512xf32>, vector<512x256xf32>, vector<128x256xf32> -> vector<128x256xf32>
    %c0_3 = arith.constant 0 : index
    %c0_4 = arith.constant 0 : index
    %3 = vector.load %arg3[%c0_3, %c0_4] : memref<1x256xf32, #tpu.memory_space<vmem>>, vector<1x256xf32>
    %4 = vector.broadcast %3 : vector<1x256xf32> to vector<128x256xf32>
    %5 = arith.addf %2, %4 : vector<128x256xf32>
    %cst_5 = arith.constant 0.000000e+00 : f32
    %6 = vector.broadcast %cst_5 : f32 to vector<128x256xf32>
    %7 = arith.maximumf %5, %6 : vector<128x256xf32>
    %c0_6 = arith.constant 0 : index
    %c0_7 = arith.constant 0 : index
    %8 = vector.load %arg4[%c0_6, %c0_7] : memref<256x128xf32, #tpu.memory_space<vmem>>, vector<256x128xf32>
    %cst_8 = arith.constant dense<0.000000e+00> : vector<128x128xf32>
    %9 = tpu.matmul %7, %8, %cst_8 {dimension_numbers = #tpu.dot_dimension_numbers<[1], [0], [0], [1], [0, 0, 1, 1], [], []>} : vector<128x256xf32>, vector<256x128xf32>, vector<128x128xf32> -> vector<128x128xf32>
    %c0_9 = arith.constant 0 : index
    %c0_10 = arith.constant 0 : index
    %10 = vector.load %arg5[%c0_9, %c0_10] : memref<1x128xf32, #tpu.memory_space<vmem>>, vector<1x128xf32>
    %11 = vector.broadcast %10 : vector<1x128xf32> to vector<128x128xf32>
    %12 = arith.addf %9, %11 : vector<128x128xf32>
    %13 = vector.extract_strided_slice %12 {offsets = [0, 0], sizes = [128, 20], strides = [1, 1]} : vector<128x128xf32> to vector<128x20xf32>
    %14 = vector.extract_strided_slice %12 {offsets = [0, 20], sizes = [128, 20], strides = [1, 1]} : vector<128x128xf32> to vector<128x20xf32>
    %c0_11 = arith.constant 0 : index
    %c0_12 = arith.constant 0 : index
    %15 = vector.load %arg10[%c0_11, %c0_12] : memref<128x128xf32, #tpu.memory_space<vmem>>, vector<128x20xf32>
    %cst_13 = arith.constant 5.000000e-01 : f32
    %16 = vector.broadcast %cst_13 : f32 to vector<128x20xf32>
    %17 = arith.mulf %16, %14 : vector<128x20xf32>
    %18 = math.exp %17 : vector<128x20xf32>
    %19 = arith.mulf %15, %18 : vector<128x20xf32>
    %20 = arith.addf %13, %19 : vector<128x20xf32>
    %c0_14 = arith.constant 0 : index
    %c0_15 = arith.constant 0 : index
    %21 = vector.load %arg6[%c0_14, %c0_15] : memref<20x256xf32, #tpu.memory_space<vmem>>, vector<20x256xf32>
    %cst_16 = arith.constant dense<0.000000e+00> : vector<128x256xf32>
    %22 = tpu.matmul %20, %21, %cst_16 {dimension_numbers = #tpu.dot_dimension_numbers<[1], [0], [0], [1], [0, 0, 1, 1], [], []>} : vector<128x20xf32>, vector<20x256xf32>, vector<128x256xf32> -> vector<128x256xf32>
    %c0_17 = arith.constant 0 : index
    %c0_18 = arith.constant 0 : index
    %23 = vector.load %arg7[%c0_17, %c0_18] : memref<1x256xf32, #tpu.memory_space<vmem>>, vector<1x256xf32>
    %24 = vector.broadcast %23 : vector<1x256xf32> to vector<128x256xf32>
    %25 = arith.addf %22, %24 : vector<128x256xf32>
    %cst_19 = arith.constant 0.000000e+00 : f32
    %26 = vector.broadcast %cst_19 : f32 to vector<128x256xf32>
    %27 = arith.maximumf %25, %26 : vector<128x256xf32>
    %c0_20 = arith.constant 0 : index
    %c0_21 = arith.constant 0 : index
    %28 = vector.load %arg8[%c0_20, %c0_21] : memref<256x512xf32, #tpu.memory_space<vmem>>, vector<256x512xf32>
    %cst_22 = arith.constant dense<0.000000e+00> : vector<128x512xf32>
    %29 = tpu.matmul %27, %28, %cst_22 {dimension_numbers = #tpu.dot_dimension_numbers<[1], [0], [0], [1], [0, 0, 1, 1], [], []>} : vector<128x256xf32>, vector<256x512xf32>, vector<128x512xf32> -> vector<128x512xf32>
    %c0_23 = arith.constant 0 : index
    %c0_24 = arith.constant 0 : index
    %30 = vector.load %arg9[%c0_23, %c0_24] : memref<1x512xf32, #tpu.memory_space<vmem>>, vector<1x512xf32>
    %31 = vector.broadcast %30 : vector<1x512xf32> to vector<128x512xf32>
    %32 = arith.addf %29, %31 : vector<128x512xf32>
    %33 = arith.negf %32 : vector<128x512xf32>
    %34 = math.exp %33 : vector<128x512xf32>
    %cst_25 = arith.constant 1.000000e+00 : f32
    %35 = vector.broadcast %cst_25 : f32 to vector<128x512xf32>
    %36 = arith.addf %35, %34 : vector<128x512xf32>
    %37 = arith.divf %35, %36 : vector<128x512xf32>
    %c0_26 = arith.constant 0 : index
    %c0_27 = arith.constant 0 : index
    %38 = vector.load %arg11[%c0_26, %c0_27] : memref<128x512xf32, #tpu.memory_space<vmem>>, vector<128x512xf32>
    tpu.vector_store %arg11[%c0_26, %c0_27], %37 {strides = array<i32>} : memref<128x512xf32, #tpu.memory_space<vmem>>, vector<128x512xf32>,
    %c0_28 = arith.constant 0 : index
    %c0_29 = arith.constant 0 : index
    %39 = vector.load %arg12[%c0_28, %c0_29] : memref<128x128xf32, #tpu.memory_space<vmem>>, vector<128x128xf32>
    tpu.vector_store %arg12[%c0_28, %c0_29], %12 {strides = array<i32>} : memref<128x128xf32, #tpu.memory_space<vmem>>, vector<128x128xf32>,
    return
  }
  func.func @transform_0(%arg0: i32) -> (i32, i32) {
    %c0_i32 = arith.constant 0 : i32
    %c0_i32_0 = arith.constant 0 : i32
    return %arg0, %c0_i32 : i32, i32
  }
  func.func @transform_1(%arg0: i32) -> (i32, i32) {
    %c0_i32 = arith.constant 0 : i32
    %c0_i32_0 = arith.constant 0 : i32
    %c0_i32_1 = arith.constant 0 : i32
    return %c0_i32, %c0_i32_0 : i32, i32
  }
  func.func @transform_2(%arg0: i32) -> (i32, i32) {
    %c0_i32 = arith.constant 0 : i32
    %c0_i32_0 = arith.constant 0 : i32
    %c0_i32_1 = arith.constant 0 : i32
    return %c0_i32, %c0_i32_0 : i32, i32
  }
  func.func @transform_3(%arg0: i32) -> (i32, i32) {
    %c0_i32 = arith.constant 0 : i32
    %c0_i32_0 = arith.constant 0 : i32
    %c0_i32_1 = arith.constant 0 : i32
    return %c0_i32, %c0_i32_0 : i32, i32
  }
  func.func @transform_4(%arg0: i32) -> (i32, i32) {
    %c0_i32 = arith.constant 0 : i32
    %c0_i32_0 = arith.constant 0 : i32
    %c0_i32_1 = arith.constant 0 : i32
    return %c0_i32, %c0_i32_0 : i32, i32
  }
  func.func @transform_5(%arg0: i32) -> (i32, i32) {
    %c0_i32 = arith.constant 0 : i32
    %c0_i32_0 = arith.constant 0 : i32
    %c0_i32_1 = arith.constant 0 : i32
    return %c0_i32, %c0_i32_0 : i32, i32
  }
  func.func @transform_6(%arg0: i32) -> (i32, i32) {
    %c0_i32 = arith.constant 0 : i32
    %c0_i32_0 = arith.constant 0 : i32
    %c0_i32_1 = arith.constant 0 : i32
    return %c0_i32, %c0_i32_0 : i32, i32
  }
  func.func @transform_7(%arg0: i32) -> (i32, i32) {
    %c0_i32 = arith.constant 0 : i32
    %c0_i32_0 = arith.constant 0 : i32
    %c0_i32_1 = arith.constant 0 : i32
    return %c0_i32, %c0_i32_0 : i32, i32
  }
  func.func @transform_8(%arg0: i32) -> (i32, i32) {
    %c0_i32 = arith.constant 0 : i32
    %c0_i32_0 = arith.constant 0 : i32
    %c0_i32_1 = arith.constant 0 : i32
    return %c0_i32, %c0_i32_0 : i32, i32
  }
  func.func @transform_9(%arg0: i32) -> (i32, i32) {
    %c0_i32 = arith.constant 0 : i32
    %c0_i32_0 = arith.constant 0 : i32
    return %arg0, %c0_i32 : i32, i32
  }
  func.func @transform_10(%arg0: i32) -> (i32, i32) {
    %c0_i32 = arith.constant 0 : i32
    %c0_i32_0 = arith.constant 0 : i32
    return %arg0, %c0_i32 : i32, i32
  }
  func.func @transform_11(%arg0: i32) -> (i32, i32) {
    %c0_i32 = arith.constant 0 : i32
    %c0_i32_0 = arith.constant 0 : i32
    return %arg0, %c0_i32 : i32, i32
  }
}

</mosaic_0001>

<llo_original>
// kernel: tpu_custom_call.1
$region0: #{tpu_custom_call.1}
  #allocation0 [shape = 'u32[]', space=smem, size = 0x4, offset = 0x4, fixed_abs, tag = 'smem constant byte address 0x4 - core index']
  #allocation1 [shape = 'u32[72,128]{1,0:T(1,128)}', space=vmem, size = 0x9000, scoped, tag = 'internal scratch']
  %s0 = inlined_call_operand.hbm [shape: f32[128,512], index: 0, kind: input, shape index: {}]
  %s1 = inlined_call_operand.hbm [shape: f32[512,256], index: 1, kind: input, shape index: {}]
  %s2 = inlined_call_operand.hbm [shape: f32[1,256], index: 2, kind: input, shape index: {}]
  %s3 = inlined_call_operand.hbm [shape: f32[256,128], index: 3, kind: input, shape index: {}]
  %s4 = inlined_call_operand.vmem [shape: f32[1,128], index: 4, kind: input, shape index: {}]
  %s5 = inlined_call_operand.hbm [shape: f32[20,256], index: 5, kind: input, shape index: {}]
  %s6 = inlined_call_operand.vmem [shape: f32[1,256], index: 6, kind: input, shape index: {}]
  %s7 = inlined_call_operand.hbm [shape: f32[256,512], index: 7, kind: input, shape index: {}]
  %s8 = inlined_call_operand.vmem [shape: f32[1,512], index: 8, kind: input, shape index: {}]
  %s9 = inlined_call_operand.hbm [shape: f32[128,128], index: 9, kind: input, shape index: {}]
  %s10 = inlined_call_operand.hbm [shape: f32[128,512], index: 10, kind: output, shape index: {0}]
  %s11 = inlined_call_operand.hbm [shape: f32[128,128], index: 11, kind: output, shape index: {1}]
  %12 = xla_tuple %s10, %s11
  %s13 = sld [smem:[#allocation0]]
  $region86: #{tpu_custom_call.1} parent=0
    _
  %s15 = ssub.s32 1, %s13
  %s16 = scalar_select 0, %s15, %s13
  $region1: #{tpu_custom_call.1} parent=0
    #allocation2 [shape = 'u8[262144]{0}', space=vmem, size = 0x40000, scoped, tag = 'input window, operand 0, single buffered']
    #allocation3 [shape = 's32[1]{0}', space=sflag, size = 0x4, scoped, tag = 'scoped memory for tpu_custom_call.1']
    #allocation4 [shape = 's32[1]{0}', space=sflag, size = 0x4, scoped, tag = 'scoped memory for tpu_custom_call.1']
    #allocation5 [shape = 'u8[524288]{0}', space=vmem, size = 0x80000, scoped, tag = 'input window, operand 1, single buffered']
    #allocation6 [shape = 's32[1]{0}', space=sflag, size = 0x4, scoped, tag = 'scoped memory for tpu_custom_call.1']
    #allocation7 [shape = 'u8[1024]{0}', space=vmem, size = 0x400, scoped, tag = 'input window, operand 2, single buffered']
    #allocation8 [shape = 'u8[131072]{0}', space=vmem, size = 0x20000, scoped, tag = 'input window, operand 3, single buffered']
    #allocation9 [shape = 's32[1]{0}', space=sflag, size = 0x4, scoped, tag = 'scoped memory for tpu_custom_call.1']
    #allocation10 [shape = 'u8[24576]{0}', space=vmem, size = 0x6000, scoped, tag = 'input window, operand 5, single buffered']
    #allocation11 [shape = 'u8[524288]{0}', space=vmem, size = 0x80000, scoped, tag = 'input window, operand 7, single buffered']
    #allocation12 [shape = 's32[1]{0}', space=sflag, size = 0x4, scoped, tag = 'scoped memory for tpu_custom_call.1']
    #allocation13 [shape = 'u8[65536]{0}', space=vmem, size = 0x10000, scoped, tag = 'input window, operand 9, single buffered']
    #allocation14 [shape = 'u8[262144]{0}', space=vmem, size = 0x40000, scoped, tag = 'output window, operand 0, single buffered']
    #allocation15 [shape = 'u8[65536]{0}', space=vmem, size = 0x10000, scoped, tag = 'output window, operand 1, single buffered']
    #allocation16 [shape = 's32[1]{0}', space=sflag, size = 0x4, scoped, tag = 'scoped memory for tpu_custom_call.1']
    %17 = vsyncpa [#allocation3], 0
    %18 = vsyncpa [#allocation6], 0
    %19 = vsyncpa [#allocation9], 0
    %20 = vsyncpa [#allocation12], 0
    %21 = vsyncpa [#allocation4], 0
    %22 = vsyncpa [#allocation16], 0
    // Predicated region
    $region2: #{tpu_custom_call.1} parent=1 // pred_check
      _
    $region3: #{tpu_custom_call.1} parent=1 // pred_check_branch
      %24 = sbr.rel (0) target = $region5
    $region4: #{tpu_custom_call.1} parent=1 // pred_region
      %26 = vsyncadd [#allocation3], 0
      %s27 = sshll.u32 %s0, 4
      %s28 = int_to_ptr.hbm [resolvable:$true] %s27
      %s29 = sshll.u32 [#allocation2], 4
      %s30 = int_to_ptr.vmem [resolvable:$true] %s29
      %35 = dma.hbm_to_vmem [thread:$0]  %s28, 8192, %s30, [#allocation3], 512, 512, 32
    $region5: #{tpu_custom_call.1} parent=1 // pred_fallthru
      _
    // Predicated region
    $region6: #{tpu_custom_call.1} parent=1 // pred_check
      _
    $region7: #{tpu_custom_call.1} parent=1 // pred_check_branch
      %37 = sbr.rel (0) target = $region9
    $region8: #{tpu_custom_call.1} parent=1 // pred_region
      %39 = vsyncadd [#allocation6], 0
      %s40 = sshll.u32 %s1, 4
      %s41 = int_to_ptr.hbm [resolvable:$true] %s40
      %s42 = sshll.u32 [#allocation5], 4
      %s43 = int_to_ptr.vmem [resolvable:$true] %s42
      %48 = dma.hbm_to_vmem [thread:$0]  %s41, 16384, %s43, [#allocation6], 256, 256, 16
    $region9: #{tpu_custom_call.1} parent=1 // pred_fallthru
      _
    // Predicated region
    $region10: #{tpu_custom_call.1} parent=1 // pred_check
      _
    $region11: #{tpu_custom_call.1} parent=1 // pred_check_branch
      %50 = sbr.rel (0) target = $region13
    $region12: #{tpu_custom_call.1} parent=1 // pred_region
      %52 = vsyncadd [#allocation6], 0
      %s54 = sshll.u32 %s2, 4
      %s55 = int_to_ptr.hbm [resolvable:$true] %s54
      %s56 = sshll.u32 [#allocation7], 4
      %s57 = int_to_ptr.vmem [resolvable:$true] %s56
      %59 = dma.hbm_to_vmem [thread:$0]  %s55, 32, %s57, [#allocation6]
    $region13: #{tpu_custom_call.1} parent=1 // pred_fallthru
      _
    // Predicated region
    $region14: #{tpu_custom_call.1} parent=1 // pred_check
      _
    $region15: #{tpu_custom_call.1} parent=1 // pred_check_branch
      %61 = sbr.rel (0) target = $region17
    $region16: #{tpu_custom_call.1} parent=1 // pred_region
      %63 = vsyncadd [#allocation9], 0
      %s64 = sshll.u32 %s3, 4
      %s65 = int_to_ptr.hbm [resolvable:$true] %s64
      %s66 = sshll.u32 [#allocation8], 4
      %s67 = int_to_ptr.vmem [resolvable:$true] %s66
      %72 = dma.hbm_to_vmem [thread:$0]  %s65, 4096, %s67, [#allocation9], 128, 128, 8
    $region17: #{tpu_custom_call.1} parent=1 // pred_fallthru
      _
    // Predicated region
    $region18: #{tpu_custom_call.1} parent=1 // pred_check
      _
    $region19: #{tpu_custom_call.1} parent=1 // pred_check_branch
      %74 = sbr.rel (0) target = $region21
    $region20: #{tpu_custom_call.1} parent=1 // pred_region
      _
    $region21: #{tpu_custom_call.1} parent=1 // pred_fallthru
      _
    // Predicated region
    $region22: #{tpu_custom_call.1} parent=1 // pred_check
      _
    $region23: #{tpu_custom_call.1} parent=1 // pred_check_branch
      %76 = sbr.rel (0) target = $region25
    $region24: #{tpu_custom_call.1} parent=1 // pred_region
      %78 = vsyncadd [#allocation9], 0
      %s79 = sshll.u32 %s5, 4
      %s80 = int_to_ptr.hbm [resolvable:$true] %s79
      %s81 = sshll.u32 [#allocation10], 4
      %s82 = int_to_ptr.vmem [resolvable:$true] %s81
      %87 = dma.hbm_to_vmem [thread:$0]  %s80, 768, %s82, [#allocation9], 256, 256, 16
    $region25: #{tpu_custom_call.1} parent=1 // pred_fallthru
      _
    // Predicated region
    $region26: #{tpu_custom_call.1} parent=1 // pred_check
      _
    $region27: #{tpu_custom_call.1} parent=1 // pred_check_branch
      %89 = sbr.rel (0) target = $region29
    $region28: #{tpu_custom_call.1} parent=1 // pred_region
      _
    $region29: #{tpu_custom_call.1} parent=1 // pred_fallthru
      _
    // Predicated region
    $region30: #{tpu_custom_call.1} parent=1 // pred_check
      _
    $region31: #{tpu_custom_call.1} parent=1 // pred_check_branch
      %91 = sbr.rel (0) target = $region33
    $region32: #{tpu_custom_call.1} parent=1 // pred_region
      %93 = vsyncadd [#allocation12], 0
      %s94 = sshll.u32 %s7, 4
      %s95 = int_to_ptr.hbm [resolvable:$true] %s94
      %s96 = sshll.u32 [#allocation11], 4
      %s97 = int_to_ptr.vmem [resolvable:$true] %s96
      %102 = dma.hbm_to_vmem [thread:$0]  %s95, 16384, %s97, [#allocation12], 512, 512, 32
    $region33: #{tpu_custom_call.1} parent=1 // pred_fallthru
      _
    // Predicated region
    $region34: #{tpu_custom_call.1} parent=1 // pred_check
      _
    $region35: #{tpu_custom_call.1} parent=1 // pred_check_branch
      %104 = sbr.rel (0) target = $region37
    $region36: #{tpu_custom_call.1} parent=1 // pred_region
      _
    $region37: #{tpu_custom_call.1} parent=1 // pred_fallthru
      _
    // Predicated region
    $region38: #{tpu_custom_call.1} parent=1 // pred_check
      _
    $region39: #{tpu_custom_call.1} parent=1 // pred_check_branch
      %106 = sbr.rel (0) target = $region41
    $region40: #{tpu_custom_call.1} parent=1 // pred_region
      %108 = vsyncadd [#allocation12], 0
      %s109 = sshll.u32 %s9, 4
      %s110 = int_to_ptr.hbm [resolvable:$true] %s109
      %s111 = sshll.u32 [#allocation13], 4
      %s112 = int_to_ptr.vmem [resolvable:$true] %s111
      %117 = dma.hbm_to_vmem [thread:$0]  %s110, 2048, %s112, [#allocation12], 128, 128, 8
    $region41: #{tpu_custom_call.1} parent=1 // pred_fallthru
      _
    // Predicated region
    $region42: #{tpu_custom_call.1} parent=1 // pred_check
      _
    $region43: #{tpu_custom_call.1} parent=1 // pred_check_branch
      %119 = sbr.rel (0) target = $region45
    $region44: #{tpu_custom_call.1} parent=1 // pred_region
      %121 = dma.done [#allocation3], 8192
    $region45: #{tpu_custom_call.1} parent=1 // pred_fallthru
      _
    // Predicated region
    $region46: #{tpu_custom_call.1} parent=1 // pred_check
      _
    $region47: #{tpu_custom_call.1} parent=1 // pred_check_branch
      %123 = sbr.rel (0) target = $region49
    $region48: #{tpu_custom_call.1} parent=1 // pred_region
      %125 = dma.done [#allocation6], 16384
    $region49: #{tpu_custom_call.1} parent=1 // pred_fallthru
      _
    // Predicated region
    $region50: #{tpu_custom_call.1} parent=1 // pred_check
      _
    $region51: #{tpu_custom_call.1} parent=1 // pred_check_branch
      %127 = sbr.rel (0) target = $region53
    $region52: #{tpu_custom_call.1} parent=1 // pred_region
      %129 = dma.done [#allocation6], 32
    $region53: #{tpu_custom_call.1} parent=1 // pred_fallthru
      _
    // Predicated region
    $region54: #{tpu_custom_call.1} parent=1 // pred_check
      _
    $region55: #{tpu_custom_call.1} parent=1 // pred_check_branch
      %131 = sbr.rel (0) target = $region57
    $region56: #{tpu_custom_call.1} parent=1 // pred_region
      %133 = dma.done [#allocation9], 4096
    $region57: #{tpu_custom_call.1} parent=1 // pred_fallthru
      _
    // Predicated region
    $region58: #{tpu_custom_call.1} parent=1 // pred_check
      _
    $region59: #{tpu_custom_call.1} parent=1 // pred_check_branch
      %135 = sbr.rel (0) target = $region61
    $region60: #{tpu_custom_call.1} parent=1 // pred_region
      %137 = dma.done [#allocation9], 768
    $region61: #{tpu_custom_call.1} parent=1 // pred_fallthru
      _
    // Predicated region
    $region62: #{tpu_custom_call.1} parent=1 // pred_check
      _
    $region63: #{tpu_custom_call.1} parent=1 // pred_check_branch
      %139 = sbr.rel (0) target = $region65
    $region64: #{tpu_custom_call.1} parent=1 // pred_region
      %141 = dma.done [#allocation12], 16384
    $region65: #{tpu_custom_call.1} parent=1 // pred_fallthru
      _
    // Predicated region
    $region66: #{tpu_custom_call.1} parent=1 // pred_check
      _
    $region67: #{tpu_custom_call.1} parent=1 // pred_check_branch
      %143 = sbr.rel (0) target = $region69
    $region68: #{tpu_custom_call.1} parent=1 // pred_region
      %145 = dma.done [#allocation12], 2048
    $region69: #{tpu_custom_call.1} parent=1 // pred_fallthru
      _
    %v146 = vld [vmem:[#allocation2] sm:$0xff]
    %v147 = vld [vmem:[#allocation2 + $0x8] sm:$0xff]
    %v148 = vld [vmem:[#allocation2 + $0x10] sm:$0xff]
    %v149 = vld [vmem:[#allocation2 + $0x18] sm:$0xff]
    %v150 = vld [vmem:[#allocation2 + $0x20] sm:$0xff]
    %v151 = vld [vmem:[#allocation2 + $0x28] sm:$0xff]
    %v152 = vld [vmem:[#allocation2 + $0x30] sm:$0xff]
    %v153 = vld [vmem:[#allocation2 + $0x38] sm:$0xff]
    %v154 = vld [vmem:[#allocation2 + $0x40] sm:$0xff]
    %v155 = vld [vmem:[#allocation2 + $0x48] sm:$0xff]
    %v156 = vld [vmem:[#allocation2 + $0x50] sm:$0xff]
    %v157 = vld [vmem:[#allocation2 + $0x58] sm:$0xff]
    %v158 = vld [vmem:[#allocation2 + $0x60] sm:$0xff]
    %v159 = vld [vmem:[#allocation2 + $0x68] sm:$0xff]
    %v160 = vld [vmem:[#allocation2 + $0x70] sm:$0xff]
    %v161 = vld [vmem:[#allocation2 + $0x78] sm:$0xff]
    %v162 = vld [vmem:[#allocation2 + $0x80] sm:$0xff]
    %v163 = vld [vmem:[#allocation2 + $0x88] sm:$0xff]
    %v164 = vld [vmem:[#allocation2 + $0x90] sm:$0xff]
    %v165 = vld [vmem:[#allocation2 + $0x98] sm:$0xff]
    %v166 = vld [vmem:[#allocation2 + $0xa0] sm:$0xff]
    %v167 = vld [vmem:[#allocation2 + $0xa8] sm:$0xff]
    %v168 = vld [vmem:[#allocation2 + $0xb0] sm:$0xff]
    %v169 = vld [vmem:[#allocation2 + $0xb8] sm:$0xff]
    %v170 = vld [vmem:[#allocation2 + $0xc0] sm:$0xff]
    %v171 = vld [vmem:[#allocation2 + $0xc8] sm:$0xff]
    %v172 = vld [vmem:[#allocation2 + $0xd0] sm:$0xff]
    %v173 = vld [vmem:[#allocation2 + $0xd8] sm:$0xff]
    %v174 = vld [vmem:[#allocation2 + $0xe0] sm:$0xff]
    %v175 = vld [vmem:[#allocation2 + $0xe8] sm:$0xff]
    %v176 = vld [vmem:[#allocation2 + $0xf0] sm:$0xff]
    %v177 = vld [vmem:[#allocation2 + $0xf8] sm:$0xff]
    %v178 = vld [vmem:[#allocation2 + $0x100] sm:$0xff]
    %v179 = vld [vmem:[#allocation2 + $0x108] sm:$0xff]
    %v180 = vld [vmem:[#allocation2 + $0x110] sm:$0xff]
    %v181 = vld [vmem:[#allocation2 + $0x118] sm:$0xff]
    %v182 = vld [vmem:[#allocation2 + $0x120] sm:$0xff]
    %v183 = vld [vmem:[#allocation2 + $0x128] sm:$0xff]
    %v184 = vld [vmem:[#allocation2 + $0x130] sm:$0xff]
    %v185 = vld [vmem:[#allocation2 + $0x138] sm:$0xff]
    %v186 = vld [vmem:[#allocation2 + $0x140] sm:$0xff]
    %v187 = vld [vmem:[#allocation2 + $0x148] sm:$0xff]
    %v188 = vld [vmem:[#allocation2 + $0x150] sm:$0xff]
    %v189 = vld [vmem:[#allocation2 + $0x158] sm:$0xff]
    %v190 = vld [vmem:[#allocation2 + $0x160] sm:$0xff]
    %v191 = vld [vmem:[#allocation2 + $0x168] sm:$0xff]
    %v192 = vld [vmem:[#allocation2 + $0x170] sm:$0xff]
    %v193 = vld [vmem:[#allocation2 + $0x178] sm:$0xff]
    %v194 = vld [vmem:[#allocation2 + $0x180] sm:$0xff]
    %v195 = vld [vmem:[#allocation2 + $0x188] sm:$0xff]
    %v196 = vld [vmem:[#allocation2 + $0x190] sm:$0xff]
    %v197 = vld [vmem:[#allocation2 + $0x198] sm:$0xff]
    %v198 = vld [vmem:[#allocation2 + $0x1a0] sm:$0xff]
    %v199 = vld [vmem:[#allocation2 + $0x1a8] sm:$0xff]
    %v200 = vld [vmem:[#allocation2 + $0x1b0] sm:$0xff]
    %v201 = vld [vmem:[#allocation2 + $0x1b8] sm:$0xff]
    %v202 = vld [vmem:[#allocation2 + $0x1c0] sm:$0xff]
    %v203 = vld [vmem:[#allocation2 + $0x1c8] sm:$0xff]
    %v204 = vld [vmem:[#allocation2 + $0x1d0] sm:$0xff]
    %v205 = vld [vmem:[#allocation2 + $0x1d8] sm:$0xff]
    %v206 = vld [vmem:[#allocation2 + $0x1e0] sm:$0xff]
    %v207 = vld [vmem:[#allocation2 + $0x1e8] sm:$0xff]
    %v208 = vld [vmem:[#allocation2 + $0x1f0] sm:$0xff]
    %v209 = vld [vmem:[#allocation2 + $0x1f8] sm:$0xff]
    %v210 = vld [vmem:[#allocation5] sm:$0xff]
    %v211 = vld [vmem:[#allocation5 + $0x8] sm:$0xff]
    %v212 = vld [vmem:[#allocation5 + $0x10] sm:$0xff]
    %v213 = vld [vmem:[#allocation5 + $0x18] sm:$0xff]
    %v214 = vld [vmem:[#allocation5 + $0x20] sm:$0xff]
    %v215 = vld [vmem:[#allocation5 + $0x28] sm:$0xff]
    %v216 = vld [vmem:[#allocation5 + $0x30] sm:$0xff]
    %v217 = vld [vmem:[#allocation5 + $0x38] sm:$0xff]
    %v218 = vld [vmem:[#allocation5 + $0x40] sm:$0xff]
    %v219 = vld [vmem:[#allocation5 + $0x48] sm:$0xff]
    %v220 = vld [vmem:[#allocation5 + $0x50] sm:$0xff]
    %v221 = vld [vmem:[#allocation5 + $0x58] sm:$0xff]
    %v222 = vld [vmem:[#allocation5 + $0x60] sm:$0xff]
    %v223 = vld [vmem:[#allocation5 + $0x68] sm:$0xff]
    %v224 = vld [vmem:[#allocation5 + $0x70] sm:$0xff]
    %v225 = vld [vmem:[#allocation5 + $0x78] sm:$0xff]
    %v226 = vld [vmem:[#allocation5 + $0x80] sm:$0xff]
    %v227 = vld [vmem:[#allocation5 + $0x88] sm:$0xff]
    %v228 = vld [vmem:[#allocation5 + $0x90] sm:$0xff]
    %v229 = vld [vmem:[#allocation5 + $0x98] sm:$0xff]
    %v230 = vld [vmem:[#allocation5 + $0xa0] sm:$0xff]
    %v231 = vld [vmem:[#allocation5 + $0xa8] sm:$0xff]
    %v232 = vld [vmem:[#allocation5 + $0xb0] sm:$0xff]
    %v233 = vld [vmem:[#allocation5 + $0xb8] sm:$0xff]
    %v234 = vld [vmem:[#allocation5 + $0xc0] sm:$0xff]
    %v235 = vld [vmem:[#allocation5 + $0xc8] sm:$0xff]
    %v236 = vld [vmem:[#allocation5 + $0xd0] sm:$0xff]
    %v237 = vld [vmem:[#allocation5 + $0xd8] sm:$0xff]
    %v238 = vld [vmem:[#allocation5 + $0xe0] sm:$0xff]
    %v239 = vld [vmem:[#allocation5 + $0xe8] sm:$0xff]
    %v240 = vld [vmem:[#allocation5 + $0xf0] sm:$0xff]
    %v241 = vld [vmem:[#allocation5 + $0xf8] sm:$0xff]
    %v242 = vld [vmem:[#allocation5 + $0x100] sm:$0xff]
    %v243 = vld [vmem:[#allocation5 + $0x108] sm:$0xff]
    %v244 = vld [vmem:[#allocation5 + $0x110] sm:$0xff]
    %v245 = vld [vmem:[#allocation5 + $0x118] sm:$0xff]
    %v246 = vld [vmem:[#allocation5 + $0x120] sm:$0xff]
    %v247 = vld [vmem:[#allocation5 + $0x128] sm:$0xff]
    %v248 = vld [vmem:[#allocation5 + $0x130] sm:$0xff]
    %v249 = vld [vmem:[#allocation5 + $0x138] sm:$0xff]
    %v250 = vld [vmem:[#allocation5 + $0x140] sm:$0xff]
    %v251 = vld [vmem:[#allocation5 + $0x148] sm:$0xff]
    %v252 = vld [vmem:[#allocation5 + $0x150] sm:$0xff]
    %v253 = vld [vmem:[#allocation5 + $0x158] sm:$0xff]
    %v254 = vld [vmem:[#allocation5 + $0x160] sm:$0xff]
    %v255 = vld [vmem:[#allocation5 + $0x168] sm:$0xff]
    %v256 = vld [vmem:[#allocation5 + $0x170] sm:$0xff]
    %v257 = vld [vmem:[#allocation5 + $0x178] sm:$0xff]
    %v258 = vld [vmem:[#allocation5 + $0x180] sm:$0xff]
    %v259 = vld [vmem:[#allocation5 + $0x188] sm:$0xff]
    %v260 = vld [vmem:[#allocation5 + $0x190] sm:$0xff]
    %v261 = vld [vmem:[#allocation5 + $0x198] sm:$0xff]
    %v262 = vld [vmem:[#allocation5 + $0x1a0] sm:$0xff]
    %v263 = vld [vmem:[#allocation5 + $0x1a8] sm:$0xff]
    %v264 = vld [vmem:[#allocation5 + $0x1b0] sm:$0xff]
    %v265 = vld [vmem:[#allocation5 + $0x1b8] sm:$0xff]
    %v266 = vld [vmem:[#allocation5 + $0x1c0] sm:$0xff]
    %v267 = vld [vmem:[#allocation5 + $0x1c8] sm:$0xff]
    %v268 = vld [vmem:[#allocation5 + $0x1d0] sm:$0xff]
    %v269 = vld [vmem:[#allocation5 + $0x1d8] sm:$0xff]
    %v270 = vld [vmem:[#allocation5 + $0x1e0] sm:$0xff]
    %v271 = vld [vmem:[#allocation5 + $0x1e8] sm:$0xff]
    %v272 = vld [vmem:[#allocation5 + $0x1f0] sm:$0xff]
    %v273 = vld [vmem:[#allocation5 + $0x1f8] sm:$0xff]
    %v274 = vld [vmem:[#allocation5 + $0x200] sm:$0xff]
    %v275 = vld [vmem:[#allocation5 + $0x208] sm:$0xff]
    %v276 = vld [vmem:[#allocation5 + $0x210] sm:$0xff]
    %v277 = vld [vmem:[#allocation5 + $0x218] sm:$0xff]
    %v278 = vld [vmem:[#allocation5 + $0x220] sm:$0xff]
    %v279 = vld [vmem:[#allocation5 + $0x228] sm:$0xff]
    %v280 = vld [vmem:[#allocation5 + $0x230] sm:$0xff]
    %v281 = vld [vmem:[#allocation5 + $0x238] sm:$0xff]
    %v282 = vld [vmem:[#allocation5 + $0x240] sm:$0xff]
    %v283 = vld [vmem:[#allocation5 + $0x248] sm:$0xff]
    %v284 = vld [vmem:[#allocation5 + $0x250] sm:$0xff]
    %v285 = vld [vmem:[#allocation5 + $0x258] sm:$0xff]
    %v286 = vld [vmem:[#allocation5 + $0x260] sm:$0xff]
    %v287 = vld [vmem:[#allocation5 + $0x268] sm:$0xff]
    %v288 = vld [vmem:[#allocation5 + $0x270] sm:$0xff]
    %v289 = vld [vmem:[#allocation5 + $0x278] sm:$0xff]
    %v290 = vld [vmem:[#allocation5 + $0x280] sm:$0xff]
    %v291 = vld [vmem:[#allocation5 + $0x288] sm:$0xff]
    %v292 = vld [vmem:[#allocation5 + $0x290] sm:$0xff]
    %v293 = vld [vmem:[#allocation5 + $0x298] sm:$0xff]
    %v294 = vld [vmem:[#allocation5 + $0x2a0] sm:$0xff]
    %v295 = vld [vmem:[#allocation5 + $0x2a8] sm:$0xff]
    %v296 = vld [vmem:[#allocation5 + $0x2b0] sm:$0xff]
    %v297 = vld [vmem:[#allocation5 + $0x2b8] sm:$0xff]
    %v298 = vld [vmem:[#allocation5 + $0x2c0] sm:$0xff]
    %v299 = vld [vmem:[#allocation5 + $0x2c8] sm:$0xff]
    %v300 = vld [vmem:[#allocation5 + $0x2d0] sm:$0xff]
    %v301 = vld [vmem:[#allocation5 + $0x2d8] sm:$0xff]
    %v302 = vld [vmem:[#allocation5 + $0x2e0] sm:$0xff]
    %v303 = vld [vmem:[#allocation5 + $0x2e8] sm:$0xff]
    %v304 = vld [vmem:[#allocation5 + $0x2f0] sm:$0xff]
    %v305 = vld [vmem:[#allocation5 + $0x2f8] sm:$0xff]
    %v306 = vld [vmem:[#allocation5 + $0x300] sm:$0xff]
    %v307 = vld [vmem:[#allocation5 + $0x308] sm:$0xff]
    %v308 = vld [vmem:[#allocation5 + $0x310] sm:$0xff]
    %v309 = vld [vmem:[#allocation5 + $0x318] sm:$0xff]
    %v310 = vld [vmem:[#allocation5 + $0x320] sm:$0xff]
    %v311 = vld [vmem:[#allocation5 + $0x328] sm:$0xff]
    %v312 = vld [vmem:[#allocation5 + $0x330] sm:$0xff]
    %v313 = vld [vmem:[#allocation5 + $0x338] sm:$0xff]
    %v314 = vld [vmem:[#allocation5 + $0x340] sm:$0xff]
    %v315 = vld [vmem:[#allocation5 + $0x348] sm:$0xff]
    %v316 = vld [vmem:[#allocation5 + $0x350] sm:$0xff]
    %v317 = vld [vmem:[#allocation5 + $0x358] sm:$0xff]
    %v318 = vld [vmem:[#allocation5 + $0x360] sm:$0xff]
    %v319 = vld [vmem:[#allocation5 + $0x368] sm:$0xff]
    %v320 = vld [vmem:[#allocation5 + $0x370] sm:$0xff]
    %v321 = vld [vmem:[#allocation5 + $0x378] sm:$0xff]
    %v322 = vld [vmem:[#allocation5 + $0x380] sm:$0xff]
    %v323 = vld [vmem:[#allocation5 + $0x388] sm:$0xff]
    %v324 = vld [vmem:[#allocation5 + $0x390] sm:$0xff]
    %v325 = vld [vmem:[#allocation5 + $0x398] sm:$0xff]
    %v326 = vld [vmem:[#allocation5 + $0x3a0] sm:$0xff]
    %v327 = vld [vmem:[#allocation5 + $0x3a8] sm:$0xff]
    %v328 = vld [vmem:[#allocation5 + $0x3b0] sm:$0xff]
    %v329 = vld [vmem:[#allocation5 + $0x3b8] sm:$0xff]
    %v330 = vld [vmem:[#allocation5 + $0x3c0] sm:$0xff]
    %v331 = vld [vmem:[#allocation5 + $0x3c8] sm:$0xff]
    %v332 = vld [vmem:[#allocation5 + $0x3d0] sm:$0xff]
    %v333 = vld [vmem:[#allocation5 + $0x3d8] sm:$0xff]
    %v334 = vld [vmem:[#allocation5 + $0x3e0] sm:$0xff]
    %v335 = vld [vmem:[#allocation5 + $0x3e8] sm:$0xff]
    %v336 = vld [vmem:[#allocation5 + $0x3f0] sm:$0xff]
    %v337 = vld [vmem:[#allocation5 + $0x3f8] sm:$0xff]
    %v338 = vld [vmem:[#allocation7] sm:$0x3]
    %v340 = vperm.slane %v338, 0
    %v341 = vperm.slane %v338, 1
    %344 = vmatpush.msra.mxu0 %v240
    %345 = vmatpush.msra.mxu0 %v238
    %346 = vmatpush.msra.mxu0 %v236
    %347 = vmatpush.msra.mxu0 %v234
    %348 = vmatpush.msra.mxu0 %v232
    %349 = vmatpush.msra.mxu0 %v230
    %350 = vmatpush.msra.mxu0 %v228
    %351 = vmatpush.msra.mxu0 %v226
    %352 = vmatpush.msra.mxu0 %v224
    %353 = vmatpush.msra.mxu0 %v222
    %354 = vmatpush.msra.mxu0 %v220
    %355 = vmatpush.msra.mxu0 %v218
    %356 = vmatpush.msra.mxu0 %v216
    %357 = vmatpush.msra.mxu0 %v214
    %358 = vmatpush.msra.mxu0 %v212
    %359 = vmatpush.msra.mxu0 %v210
    %360 = vmatmul.f32.gmra.mxu0 %v146
    %v361 = vpop.f32.mrf.mxu0
    %v362 = vadd.f32 %v340, %v361
    %363 = vmatmul.f32.gmra.mxu0 %v150
    %v364 = vpop.f32.mrf.mxu0
    %v365 = vadd.f32 %v340, %v364
    %366 = vmatmul.f32.gmra.mxu0 %v154
    %v367 = vpop.f32.mrf.mxu0
    %v368 = vadd.f32 %v340, %v367
    %369 = vmatmul.f32.gmra.mxu0 %v158
    %v370 = vpop.f32.mrf.mxu0
    %v371 = vadd.f32 %v340, %v370
    %372 = vmatmul.f32.gmra.mxu0 %v162
    %v373 = vpop.f32.mrf.mxu0
    %v374 = vadd.f32 %v340, %v373
    %375 = vmatmul.f32.gmra.mxu0 %v166
    %v376 = vpop.f32.mrf.mxu0
    %v377 = vadd.f32 %v340, %v376
    %378 = vmatmul.f32.gmra.mxu0 %v170
    %v379 = vpop.f32.mrf.mxu0
    %v380 = vadd.f32 %v340, %v379
    %381 = vmatmul.f32.gmra.mxu0 %v174
    %v382 = vpop.f32.mrf.mxu0
    %v383 = vadd.f32 %v340, %v382
    %384 = vmatmul.f32.gmra.mxu0 %v178
    %v385 = vpop.f32.mrf.mxu0
    %v386 = vadd.f32 %v340, %v385
    %387 = vmatmul.f32.gmra.mxu0 %v182
    %v388 = vpop.f32.mrf.mxu0
    %v389 = vadd.f32 %v340, %v388
    %390 = vmatmul.f32.gmra.mxu0 %v186
    %v391 = vpop.f32.mrf.mxu0
    %v392 = vadd.f32 %v340, %v391
    %393 = vmatmul.f32.gmra.mxu0 %v190
    %v394 = vpop.f32.mrf.mxu0
    %v395 = vadd.f32 %v340, %v394
    %396 = vmatmul.f32.gmra.mxu0 %v194
    %v397 = vpop.f32.mrf.mxu0
    %v398 = vadd.f32 %v340, %v397
    %399 = vmatmul.f32.gmra.mxu0 %v198
    %v400 = vpop.f32.mrf.mxu0
    %v401 = vadd.f32 %v340, %v400
    %402 = vmatmul.f32.gmra.mxu0 %v202
    %v403 = vpop.f32.mrf.mxu0
    %v404 = vadd.f32 %v340, %v403
    %405 = vmatmul.f32.gmra.mxu0 %v206
    %v406 = vpop.f32.mrf.mxu0
    %v407 = vadd.f32 %v340, %v406
    %408 = vdwg.mxu0
    %409 = vmatpush.msra.mxu0 %v272
    %410 = vmatpush.msra.mxu0 %v270
    %411 = vmatpush.msra.mxu0 %v268
    %412 = vmatpush.msra.mxu0 %v266
    %413 = vmatpush.msra.mxu0 %v264
    %414 = vmatpush.msra.mxu0 %v262
    %415 = vmatpush.msra.mxu0 %v260
    %416 = vmatpush.msra.mxu0 %v258
    %417 = vmatpush.msra.mxu0 %v256
    %418 = vmatpush.msra.mxu0 %v254
    %419 = vmatpush.msra.mxu0 %v252
    %420 = vmatpush.msra.mxu0 %v250
    %421 = vmatpush.msra.mxu0 %v248
    %422 = vmatpush.msra.mxu0 %v246
    %423 = vmatpush.msra.mxu0 %v244
    %424 = vmatpush.msra.mxu0 %v242
    %425 = vmatmul.f32.gmra.mxu0 %v147
    %v426 = vpop.f32.mrf.mxu0
    %v427 = vadd.f32 %v362, %v426
    %428 = vmatmul.f32.gmra.mxu0 %v151
    %v429 = vpop.f32.mrf.mxu0
    %v430 = vadd.f32 %v365, %v429
    %431 = vmatmul.f32.gmra.mxu0 %v155
    %v432 = vpop.f32.mrf.mxu0
    %v433 = vadd.f32 %v368, %v432
    %434 = vmatmul.f32.gmra.mxu0 %v159
    %v435 = vpop.f32.mrf.mxu0
    %v436 = vadd.f32 %v371, %v435
    %437 = vmatmul.f32.gmra.mxu0 %v163
    %v438 = vpop.f32.mrf.mxu0
    %v439 = vadd.f32 %v374, %v438
    %440 = vmatmul.f32.gmra.mxu0 %v167
    %v441 = vpop.f32.mrf.mxu0
    %v442 = vadd.f32 %v377, %v441
    %443 = vmatmul.f32.gmra.mxu0 %v171
    %v444 = vpop.f32.mrf.mxu0
    %v445 = vadd.f32 %v380, %v444
    %446 = vmatmul.f32.gmra.mxu0 %v175
    %v447 = vpop.f32.mrf.mxu0
    %v448 = vadd.f32 %v383, %v447
    %449 = vmatmul.f32.gmra.mxu0 %v179
    %v450 = vpop.f32.mrf.mxu0
    %v451 = vadd.f32 %v386, %v450
    %452 = vmatmul.f32.gmra.mxu0 %v183
    %v453 = vpop.f32.mrf.mxu0
    %v454 = vadd.f32 %v389, %v453
    %455 = vmatmul.f32.gmra.mxu0 %v187
    %v456 = vpop.f32.mrf.mxu0
    %v457 = vadd.f32 %v392, %v456
    %458 = vmatmul.f32.gmra.mxu0 %v191
    %v459 = vpop.f32.mrf.mxu0
    %v460 = vadd.f32 %v395, %v459
    %461 = vmatmul.f32.gmra.mxu0 %v195
    %v462 = vpop.f32.mrf.mxu0
    %v463 = vadd.f32 %v398, %v462
    %464 = vmatmul.f32.gmra.mxu0 %v199
    %v465 = vpop.f32.mrf.mxu0
    %v466 = vadd.f32 %v401, %v465
    %467 = vmatmul.f32.gmra.mxu0 %v203
    %v468 = vpop.f32.mrf.mxu0
    %v469 = vadd.f32 %v404, %v468
    %470 = vmatmul.f32.gmra.mxu0 %v207
    %v471 = vpop.f32.mrf.mxu0
    %v472 = vadd.f32 %v407, %v471
    %473 = vdwg.mxu0
    %474 = vmatpush.msra.mxu0 %v304
    %475 = vmatpush.msra.mxu0 %v302
    %476 = vmatpush.msra.mxu0 %v300
    %477 = vmatpush.msra.mxu0 %v298
    %478 = vmatpush.msra.mxu0 %v296
    %479 = vmatpush.msra.mxu0 %v294
    %480 = vmatpush.msra.mxu0 %v292
    %481 = vmatpush.msra.mxu0 %v290
    %482 = vmatpush.msra.mxu0 %v288
    %483 = vmatpush.msra.mxu0 %v286
    %484 = vmatpush.msra.mxu0 %v284
    %485 = vmatpush.msra.mxu0 %v282
    %486 = vmatpush.msra.mxu0 %v280
    %487 = vmatpush.msra.mxu0 %v278
    %488 = vmatpush.msra.mxu0 %v276
    %489 = vmatpush.msra.mxu0 %v274
    %490 = vmatmul.f32.gmra.mxu0 %v148
    %v491 = vpop.f32.mrf.mxu0
    %v492 = vadd.f32 %v427, %v491
    %493 = vmatmul.f32.gmra.mxu0 %v152
    %v494 = vpop.f32.mrf.mxu0
    %v495 = vadd.f32 %v430, %v494
    %496 = vmatmul.f32.gmra.mxu0 %v156
    %v497 = vpop.f32.mrf.mxu0
    %v498 = vadd.f32 %v433, %v497
    %499 = vmatmul.f32.gmra.mxu0 %v160
    %v500 = vpop.f32.mrf.mxu0
    %v501 = vadd.f32 %v436, %v500
    %502 = vmatmul.f32.gmra.mxu0 %v164
    %v503 = vpop.f32.mrf.mxu0
    %v504 = vadd.f32 %v439, %v503
    %505 = vmatmul.f32.gmra.mxu0 %v168
    %v506 = vpop.f32.mrf.mxu0
    %v507 = vadd.f32 %v442, %v506
    %508 = vmatmul.f32.gmra.mxu0 %v172
    %v509 = vpop.f32.mrf.mxu0
    %v510 = vadd.f32 %v445, %v509
    %511 = vmatmul.f32.gmra.mxu0 %v176
    %v512 = vpop.f32.mrf.mxu0
    %v513 = vadd.f32 %v448, %v512
    %514 = vmatmul.f32.gmra.mxu0 %v180
    %v515 = vpop.f32.mrf.mxu0
    %v516 = vadd.f32 %v451, %v515
    %517 = vmatmul.f32.gmra.mxu0 %v184
    %v518 = vpop.f32.mrf.mxu0
    %v519 = vadd.f32 %v454, %v518
    %520 = vmatmul.f32.gmra.mxu0 %v188
    %v521 = vpop.f32.mrf.mxu0
    %v522 = vadd.f32 %v457, %v521
    %523 = vmatmul.f32.gmra.mxu0 %v192
    %v524 = vpop.f32.mrf.mxu0
    %v525 = vadd.f32 %v460, %v524
    %526 = vmatmul.f32.gmra.mxu0 %v196
    %v527 = vpop.f32.mrf.mxu0
    %v528 = vadd.f32 %v463, %v527
    %529 = vmatmul.f32.gmra.mxu0 %v200
    %v530 = vpop.f32.mrf.mxu0
    %v531 = vadd.f32 %v466, %v530
    %532 = vmatmul.f32.gmra.mxu0 %v204
    %v533 = vpop.f32.mrf.mxu0
    %v534 = vadd.f32 %v469, %v533
    %535 = vmatmul.f32.gmra.mxu0 %v208
    %v536 = vpop.f32.mrf.mxu0
    %v537 = vadd.f32 %v472, %v536
    %538 = vdwg.mxu0
    %539 = vmatpush.msra.mxu0 %v336
    %540 = vmatpush.msra.mxu0 %v334
    %541 = vmatpush.msra.mxu0 %v332
    %542 = vmatpush.msra.mxu0 %v330
    %543 = vmatpush.msra.mxu0 %v328
    %544 = vmatpush.msra.mxu0 %v326
    %545 = vmatpush.msra.mxu0 %v324
    %546 = vmatpush.msra.mxu0 %v322
    %547 = vmatpush.msra.mxu0 %v320
    %548 = vmatpush.msra.mxu0 %v318
    %549 = vmatpush.msra.mxu0 %v316
    %550 = vmatpush.msra.mxu0 %v314
    %551 = vmatpush.msra.mxu0 %v312
    %552 = vmatpush.msra.mxu0 %v310
    %553 = vmatpush.msra.mxu0 %v308
    %554 = vmatpush.msra.mxu0 %v306
    %555 = vmatmul.f32.gmra.mxu0 %v149
    %v556 = vpop.f32.mrf.mxu0
    %v557 = vadd.f32 %v492, %v556
    %558 = vmatmul.f32.gmra.mxu0 %v153
    %v559 = vpop.f32.mrf.mxu0
    %v560 = vadd.f32 %v495, %v559
    %561 = vmatmul.f32.gmra.mxu0 %v157
    %v562 = vpop.f32.mrf.mxu0
    %v563 = vadd.f32 %v498, %v562
    %564 = vmatmul.f32.gmra.mxu0 %v161
    %v565 = vpop.f32.mrf.mxu0
    %v566 = vadd.f32 %v501, %v565
    %567 = vmatmul.f32.gmra.mxu0 %v165
    %v568 = vpop.f32.mrf.mxu0
    %v569 = vadd.f32 %v504, %v568
    %570 = vmatmul.f32.gmra.mxu0 %v169
    %v571 = vpop.f32.mrf.mxu0
    %v572 = vadd.f32 %v507, %v571
    %573 = vmatmul.f32.gmra.mxu0 %v173
    %v574 = vpop.f32.mrf.mxu0
    %v575 = vadd.f32 %v510, %v574
    %576 = vmatmul.f32.gmra.mxu0 %v177
    %v577 = vpop.f32.mrf.mxu0
    %v578 = vadd.f32 %v513, %v577
    %579 = vmatmul.f32.gmra.mxu0 %v181
    %v580 = vpop.f32.mrf.mxu0
    %v581 = vadd.f32 %v516, %v580
    %582 = vmatmul.f32.gmra.mxu0 %v185
    %v583 = vpop.f32.mrf.mxu0
    %v584 = vadd.f32 %v519, %v583
    %585 = vmatmul.f32.gmra.mxu0 %v189
    %v586 = vpop.f32.mrf.mxu0
    %v587 = vadd.f32 %v522, %v586
    %588 = vmatmul.f32.gmra.mxu0 %v193
    %v589 = vpop.f32.mrf.mxu0
    %v590 = vadd.f32 %v525, %v589
    %591 = vmatmul.f32.gmra.mxu0 %v197
    %v592 = vpop.f32.mrf.mxu0
    %v593 = vadd.f32 %v528, %v592
    %594 = vmatmul.f32.gmra.mxu0 %v201
    %v595 = vpop.f32.mrf.mxu0
    %v596 = vadd.f32 %v531, %v595
    %597 = vmatmul.f32.gmra.mxu0 %v205
    %v598 = vpop.f32.mrf.mxu0
    %v599 = vadd.f32 %v534, %v598
    %600 = vmatmul.f32.gmra.mxu0 %v209
    %v601 = vpop.f32.mrf.mxu0
    %v602 = vadd.f32 %v537, %v601
    %603 = vdwg.mxu0
    %604 = vmatpush.msra.mxu0 %v241
    %605 = vmatpush.msra.mxu0 %v239
    %606 = vmatpush.msra.mxu0 %v237
    %607 = vmatpush.msra.mxu0 %v235
    %608 = vmatpush.msra.mxu0 %v233
    %609 = vmatpush.msra.mxu0 %v231
    %610 = vmatpush.msra.mxu0 %v229
    %611 = vmatpush.msra.mxu0 %v227
    %612 = vmatpush.msra.mxu0 %v225
    %613 = vmatpush.msra.mxu0 %v223
    %614 = vmatpush.msra.mxu0 %v221
    %615 = vmatpush.msra.mxu0 %v219
    %616 = vmatpush.msra.mxu0 %v217
    %617 = vmatpush.msra.mxu0 %v215
    %618 = vmatpush.msra.mxu0 %v213
    %619 = vmatpush.msra.mxu0 %v211
    %620 = vmatmul.f32.gmra.mxu0 %v146
    %v621 = vpop.f32.mrf.mxu0
    %v622 = vadd.f32 %v341, %v621
    %623 = vmatmul.f32.gmra.mxu0 %v150
    %v624 = vpop.f32.mrf.mxu0
    %v625 = vadd.f32 %v341, %v624
    %626 = vmatmul.f32.gmra.mxu0 %v154
    %v627 = vpop.f32.mrf.mxu0
    %v628 = vadd.f32 %v341, %v627
    %629 = vmatmul.f32.gmra.mxu0 %v158
    %v630 = vpop.f32.mrf.mxu0
    %v631 = vadd.f32 %v341, %v630
    %632 = vmatmul.f32.gmra.mxu0 %v162
    %v633 = vpop.f32.mrf.mxu0
    %v634 = vadd.f32 %v341, %v633
    %635 = vmatmul.f32.gmra.mxu0 %v166
    %v636 = vpop.f32.mrf.mxu0
    %v637 = vadd.f32 %v341, %v636
    %638 = vmatmul.f32.gmra.mxu0 %v170
    %v639 = vpop.f32.mrf.mxu0
    %v640 = vadd.f32 %v341, %v639
    %641 = vmatmul.f32.gmra.mxu0 %v174
    %v642 = vpop.f32.mrf.mxu0
    %v643 = vadd.f32 %v341, %v642
    %644 = vmatmul.f32.gmra.mxu0 %v178
    %v645 = vpop.f32.mrf.mxu0
    %v646 = vadd.f32 %v341, %v645
    %647 = vmatmul.f32.gmra.mxu0 %v182
    %v648 = vpop.f32.mrf.mxu0
    %v649 = vadd.f32 %v341, %v648
    %650 = vmatmul.f32.gmra.mxu0 %v186
    %v651 = vpop.f32.mrf.mxu0
    %v652 = vadd.f32 %v341, %v651
    %653 = vmatmul.f32.gmra.mxu0 %v190
    %v654 = vpop.f32.mrf.mxu0
    %v655 = vadd.f32 %v341, %v654
    %656 = vmatmul.f32.gmra.mxu0 %v194
    %v657 = vpop.f32.mrf.mxu0
    %v658 = vadd.f32 %v341, %v657
    %659 = vmatmul.f32.gmra.mxu0 %v198
    %v660 = vpop.f32.mrf.mxu0
    %v661 = vadd.f32 %v341, %v660
    %662 = vmatmul.f32.gmra.mxu0 %v202
    %v663 = vpop.f32.mrf.mxu0
    %v664 = vadd.f32 %v341, %v663
    %665 = vmatmul.f32.gmra.mxu0 %v206
    %v666 = vpop.f32.mrf.mxu0
    %v667 = vadd.f32 %v341, %v666
    %668 = vdwg.mxu0
    %669 = vmatpush.msra.mxu0 %v273
    %670 = vmatpush.msra.mxu0 %v271
    %671 = vmatpush.msra.mxu0 %v269
    %672 = vmatpush.msra.mxu0 %v267
    %673 = vmatpush.msra.mxu0 %v265
    %674 = vmatpush.msra.mxu0 %v263
    %675 = vmatpush.msra.mxu0 %v261
    %676 = vmatpush.msra.mxu0 %v259
    %677 = vmatpush.msra.mxu0 %v257
    %678 = vmatpush.msra.mxu0 %v255
    %679 = vmatpush.msra.mxu0 %v253
    %680 = vmatpush.msra.mxu0 %v251
    %681 = vmatpush.msra.mxu0 %v249
    %682 = vmatpush.msra.mxu0 %v247
    %683 = vmatpush.msra.mxu0 %v245
    %684 = vmatpush.msra.mxu0 %v243
    %685 = vmatmul.f32.gmra.mxu0 %v147
    %v686 = vpop.f32.mrf.mxu0
    %v687 = vadd.f32 %v622, %v686
    %688 = vmatmul.f32.gmra.mxu0 %v151
    %v689 = vpop.f32.mrf.mxu0
    %v690 = vadd.f32 %v625, %v689
    %691 = vmatmul.f32.gmra.mxu0 %v155
    %v692 = vpop.f32.mrf.mxu0
    %v693 = vadd.f32 %v628, %v692
    %694 = vmatmul.f32.gmra.mxu0 %v159
    %v695 = vpop.f32.mrf.mxu0
    %v696 = vadd.f32 %v631, %v695
    %697 = vmatmul.f32.gmra.mxu0 %v163
    %v698 = vpop.f32.mrf.mxu0
    %v699 = vadd.f32 %v634, %v698
    %700 = vmatmul.f32.gmra.mxu0 %v167
    %v701 = vpop.f32.mrf.mxu0
    %v702 = vadd.f32 %v637, %v701
    %703 = vmatmul.f32.gmra.mxu0 %v171
    %v704 = vpop.f32.mrf.mxu0
    %v705 = vadd.f32 %v640, %v704
    %706 = vmatmul.f32.gmra.mxu0 %v175
    %v707 = vpop.f32.mrf.mxu0
    %v708 = vadd.f32 %v643, %v707
    %709 = vmatmul.f32.gmra.mxu0 %v179
    %v710 = vpop.f32.mrf.mxu0
    %v711 = vadd.f32 %v646, %v710
    %712 = vmatmul.f32.gmra.mxu0 %v183
    %v713 = vpop.f32.mrf.mxu0
    %v714 = vadd.f32 %v649, %v713
    %715 = vmatmul.f32.gmra.mxu0 %v187
    %v716 = vpop.f32.mrf.mxu0
    %v717 = vadd.f32 %v652, %v716
    %718 = vmatmul.f32.gmra.mxu0 %v191
    %v719 = vpop.f32.mrf.mxu0
    %v720 = vadd.f32 %v655, %v719
    %721 = vmatmul.f32.gmra.mxu0 %v195
    %v722 = vpop.f32.mrf.mxu0
    %v723 = vadd.f32 %v658, %v722
    %724 = vmatmul.f32.gmra.mxu0 %v199
    %v725 = vpop.f32.mrf.mxu0
    %v726 = vadd.f32 %v661, %v725
    %727 = vmatmul.f32.gmra.mxu0 %v203
    %v728 = vpop.f32.mrf.mxu0
    %v729 = vadd.f32 %v664, %v728
    %730 = vmatmul.f32.gmra.mxu0 %v207
    %v731 = vpop.f32.mrf.mxu0
    %v732 = vadd.f32 %v667, %v731
    %733 = vdwg.mxu0
    %734 = vmatpush.msra.mxu0 %v305
    %735 = vmatpush.msra.mxu0 %v303
    %736 = vmatpush.msra.mxu0 %v301
    %737 = vmatpush.msra.mxu0 %v299
    %738 = vmatpush.msra.mxu0 %v297
    %739 = vmatpush.msra.mxu0 %v295
    %740 = vmatpush.msra.mxu0 %v293
    %741 = vmatpush.msra.mxu0 %v291
    %742 = vmatpush.msra.mxu0 %v289
    %743 = vmatpush.msra.mxu0 %v287
    %744 = vmatpush.msra.mxu0 %v285
    %745 = vmatpush.msra.mxu0 %v283
    %746 = vmatpush.msra.mxu0 %v281
    %747 = vmatpush.msra.mxu0 %v279
    %748 = vmatpush.msra.mxu0 %v277
    %749 = vmatpush.msra.mxu0 %v275
    %750 = vmatmul.f32.gmra.mxu0 %v148
    %v751 = vpop.f32.mrf.mxu0
    %v752 = vadd.f32 %v687, %v751
    %753 = vmatmul.f32.gmra.mxu0 %v152
    %v754 = vpop.f32.mrf.mxu0
    %v755 = vadd.f32 %v690, %v754
    %756 = vmatmul.f32.gmra.mxu0 %v156
    %v757 = vpop.f32.mrf.mxu0
    %v758 = vadd.f32 %v693, %v757
    %759 = vmatmul.f32.gmra.mxu0 %v160
    %v760 = vpop.f32.mrf.mxu0
    %v761 = vadd.f32 %v696, %v760
    %762 = vmatmul.f32.gmra.mxu0 %v164
    %v763 = vpop.f32.mrf.mxu0
    %v764 = vadd.f32 %v699, %v763
    %765 = vmatmul.f32.gmra.mxu0 %v168
    %v766 = vpop.f32.mrf.mxu0
    %v767 = vadd.f32 %v702, %v766
    %768 = vmatmul.f32.gmra.mxu0 %v172
    %v769 = vpop.f32.mrf.mxu0
    %v770 = vadd.f32 %v705, %v769
    %771 = vmatmul.f32.gmra.mxu0 %v176
    %v772 = vpop.f32.mrf.mxu0
    %v773 = vadd.f32 %v708, %v772
    %774 = vmatmul.f32.gmra.mxu0 %v180
    %v775 = vpop.f32.mrf.mxu0
    %v776 = vadd.f32 %v711, %v775
    %777 = vmatmul.f32.gmra.mxu0 %v184
    %v778 = vpop.f32.mrf.mxu0
    %v779 = vadd.f32 %v714, %v778
    %780 = vmatmul.f32.gmra.mxu0 %v188
    %v781 = vpop.f32.mrf.mxu0
    %v782 = vadd.f32 %v717, %v781
    %783 = vmatmul.f32.gmra.mxu0 %v192
    %v784 = vpop.f32.mrf.mxu0
    %v785 = vadd.f32 %v720, %v784
    %786 = vmatmul.f32.gmra.mxu0 %v196
    %v787 = vpop.f32.mrf.mxu0
    %v788 = vadd.f32 %v723, %v787
    %789 = vmatmul.f32.gmra.mxu0 %v200
    %v790 = vpop.f32.mrf.mxu0
    %v791 = vadd.f32 %v726, %v790
    %792 = vmatmul.f32.gmra.mxu0 %v204
    %v793 = vpop.f32.mrf.mxu0
    %v794 = vadd.f32 %v729, %v793
    %795 = vmatmul.f32.gmra.mxu0 %v208
    %v796 = vpop.f32.mrf.mxu0
    %v797 = vadd.f32 %v732, %v796
    %798 = vdwg.mxu0
    %799 = vmatpush.msra.mxu0 %v337
    %800 = vmatpush.msra.mxu0 %v335
    %801 = vmatpush.msra.mxu0 %v333
    %802 = vmatpush.msra.mxu0 %v331
    %803 = vmatpush.msra.mxu0 %v329
    %804 = vmatpush.msra.mxu0 %v327
    %805 = vmatpush.msra.mxu0 %v325
    %806 = vmatpush.msra.mxu0 %v323
    %807 = vmatpush.msra.mxu0 %v321
    %808 = vmatpush.msra.mxu0 %v319
    %809 = vmatpush.msra.mxu0 %v317
    %810 = vmatpush.msra.mxu0 %v315
    %811 = vmatpush.msra.mxu0 %v313
    %812 = vmatpush.msra.mxu0 %v311
    %813 = vmatpush.msra.mxu0 %v309
    %814 = vmatpush.msra.mxu0 %v307
    %815 = vmatmul.f32.gmra.mxu0 %v149
    %v816 = vpop.f32.mrf.mxu0
    %v817 = vadd.f32 %v752, %v816
    %818 = vmatmul.f32.gmra.mxu0 %v153
    %v819 = vpop.f32.mrf.mxu0
    %v820 = vadd.f32 %v755, %v819
    %821 = vmatmul.f32.gmra.mxu0 %v157
    %v822 = vpop.f32.mrf.mxu0
    %v823 = vadd.f32 %v758, %v822
    %824 = vmatmul.f32.gmra.mxu0 %v161
    %v825 = vpop.f32.mrf.mxu0
    %v826 = vadd.f32 %v761, %v825
    %827 = vmatmul.f32.gmra.mxu0 %v165
    %v828 = vpop.f32.mrf.mxu0
    %v829 = vadd.f32 %v764, %v828
    %830 = vmatmul.f32.gmra.mxu0 %v169
    %v831 = vpop.f32.mrf.mxu0
    %v832 = vadd.f32 %v767, %v831
    %833 = vmatmul.f32.gmra.mxu0 %v173
    %v834 = vpop.f32.mrf.mxu0
    %v835 = vadd.f32 %v770, %v834
    %836 = vmatmul.f32.gmra.mxu0 %v177
    %v837 = vpop.f32.mrf.mxu0
    %v838 = vadd.f32 %v773, %v837
    %839 = vmatmul.f32.gmra.mxu0 %v181
    %v840 = vpop.f32.mrf.mxu0
    %v841 = vadd.f32 %v776, %v840
    %842 = vmatmul.f32.gmra.mxu0 %v185
    %v843 = vpop.f32.mrf.mxu0
    %v844 = vadd.f32 %v779, %v843
    %845 = vmatmul.f32.gmra.mxu0 %v189
    %v846 = vpop.f32.mrf.mxu0
    %v847 = vadd.f32 %v782, %v846
    %848 = vmatmul.f32.gmra.mxu0 %v193
    %v849 = vpop.f32.mrf.mxu0
    %v850 = vadd.f32 %v785, %v849
    %851 = vmatmul.f32.gmra.mxu0 %v197
    %v852 = vpop.f32.mrf.mxu0
    %v853 = vadd.f32 %v788, %v852
    %854 = vmatmul.f32.gmra.mxu0 %v201
    %v855 = vpop.f32.mrf.mxu0
    %v856 = vadd.f32 %v791, %v855
    %857 = vmatmul.f32.gmra.mxu0 %v205
    %v858 = vpop.f32.mrf.mxu0
    %v859 = vadd.f32 %v794, %v858
    %860 = vmatmul.f32.gmra.mxu0 %v209
    %v861 = vpop.f32.mrf.mxu0
    %v862 = vadd.f32 %v797, %v861
    %863 = vdwg.mxu0
    %v864 = vmax.f32 %v557, 0.0
    %v865 = vmax.f32 %v817, 0.0
    %v866 = vmax.f32 %v560, 0.0
    %v867 = vmax.f32 %v820, 0.0
    %v868 = vmax.f32 %v563, 0.0
    %v869 = vmax.f32 %v823, 0.0
    %v870 = vmax.f32 %v566, 0.0
    %v871 = vmax.f32 %v826, 0.0
    %v872 = vmax.f32 %v569, 0.0
    %v873 = vmax.f32 %v829, 0.0
    %v874 = vmax.f32 %v572, 0.0
    %v875 = vmax.f32 %v832, 0.0
    %v876 = vmax.f32 %v575, 0.0
    %v877 = vmax.f32 %v835, 0.0
    %v878 = vmax.f32 %v578, 0.0
    %v879 = vmax.f32 %v838, 0.0
    %v880 = vmax.f32 %v581, 0.0
    %v881 = vmax.f32 %v841, 0.0
    %v882 = vmax.f32 %v584, 0.0
    %v883 = vmax.f32 %v844, 0.0
    %v884 = vmax.f32 %v587, 0.0
    %v885 = vmax.f32 %v847, 0.0
    %v886 = vmax.f32 %v590, 0.0
    %v887 = vmax.f32 %v850, 0.0
    %v888 = vmax.f32 %v593, 0.0
    %v889 = vmax.f32 %v853, 0.0
    %v890 = vmax.f32 %v596, 0.0
    %v891 = vmax.f32 %v856, 0.0
    %v892 = vmax.f32 %v599, 0.0
    %v893 = vmax.f32 %v859, 0.0
    %v894 = vmax.f32 %v602, 0.0
    %v895 = vmax.f32 %v862, 0.0
    %v896 = vld [vmem:[#allocation8] sm:$0xff]
    %v897 = vld [vmem:[#allocation8 + $0x8] sm:$0xff]
    %v898 = vld [vmem:[#allocation8 + $0x10] sm:$0xff]
    %v899 = vld [vmem:[#allocation8 + $0x18] sm:$0xff]
    %v900 = vld [vmem:[#allocation8 + $0x20] sm:$0xff]
    %v901 = vld [vmem:[#allocation8 + $0x28] sm:$0xff]
    %v902 = vld [vmem:[#allocation8 + $0x30] sm:$0xff]
    %v903 = vld [vmem:[#allocation8 + $0x38] sm:$0xff]
    %v904 = vld [vmem:[#allocation8 + $0x40] sm:$0xff]
    %v905 = vld [vmem:[#allocation8 + $0x48] sm:$0xff]
    %v906 = vld [vmem:[#allocation8 + $0x50] sm:$0xff]
    %v907 = vld [vmem:[#allocation8 + $0x58] sm:$0xff]
    %v908 = vld [vmem:[#allocation8 + $0x60] sm:$0xff]
    %v909 = vld [vmem:[#allocation8 + $0x68] sm:$0xff]
    %v910 = vld [vmem:[#allocation8 + $0x70] sm:$0xff]
    %v911 = vld [vmem:[#allocation8 + $0x78] sm:$0xff]
    %v912 = vld [vmem:[#allocation8 + $0x80] sm:$0xff]
    %v913 = vld [vmem:[#allocation8 + $0x88] sm:$0xff]
    %v914 = vld [vmem:[#allocation8 + $0x90] sm:$0xff]
    %v915 = vld [vmem:[#allocation8 + $0x98] sm:$0xff]
    %v916 = vld [vmem:[#allocation8 + $0xa0] sm:$0xff]
    %v917 = vld [vmem:[#allocation8 + $0xa8] sm:$0xff]
    %v918 = vld [vmem:[#allocation8 + $0xb0] sm:$0xff]
    %v919 = vld [vmem:[#allocation8 + $0xb8] sm:$0xff]
    %v920 = vld [vmem:[#allocation8 + $0xc0] sm:$0xff]
    %v921 = vld [vmem:[#allocation8 + $0xc8] sm:$0xff]
    %v922 = vld [vmem:[#allocation8 + $0xd0] sm:$0xff]
    %v923 = vld [vmem:[#allocation8 + $0xd8] sm:$0xff]
    %v924 = vld [vmem:[#allocation8 + $0xe0] sm:$0xff]
    %v925 = vld [vmem:[#allocation8 + $0xe8] sm:$0xff]
    %v926 = vld [vmem:[#allocation8 + $0xf0] sm:$0xff]
    %v927 = vld [vmem:[#allocation8 + $0xf8] sm:$0xff]
    %v928 = vld [vmem:[%s4] sm:$0x1]
    %v930 = vperm.slane %v928, 0
    %932 = vmatpush.msra.mxu0 %v911
    %933 = vmatpush.msra.mxu0 %v910
    %934 = vmatpush.msra.mxu0 %v909
    %935 = vmatpush.msra.mxu0 %v908
    %936 = vmatpush.msra.mxu0 %v907
    %937 = vmatpush.msra.mxu0 %v906
    %938 = vmatpush.msra.mxu0 %v905
    %939 = vmatpush.msra.mxu0 %v904
    %940 = vmatpush.msra.mxu0 %v903
    %941 = vmatpush.msra.mxu0 %v902
    %942 = vmatpush.msra.mxu0 %v901
    %943 = vmatpush.msra.mxu0 %v900
    %944 = vmatpush.msra.mxu0 %v899
    %945 = vmatpush.msra.mxu0 %v898
    %946 = vmatpush.msra.mxu0 %v897
    %947 = vmatpush.msra.mxu0 %v896
    %948 = vmatmul.f32.gmra.mxu0 %v864
    %v949 = vpop.f32.mrf.mxu0
    %v950 = vadd.f32 %v930, %v949
    %951 = vmatmul.f32.gmra.mxu0 %v866
    %v952 = vpop.f32.mrf.mxu0
    %v953 = vadd.f32 %v930, %v952
    %954 = vmatmul.f32.gmra.mxu0 %v868
    %v955 = vpop.f32.mrf.mxu0
    %v956 = vadd.f32 %v930, %v955
    %957 = vmatmul.f32.gmra.mxu0 %v870
    %v958 = vpop.f32.mrf.mxu0
    %v959 = vadd.f32 %v930, %v958
    %960 = vmatmul.f32.gmra.mxu0 %v872
    %v961 = vpop.f32.mrf.mxu0
    %v962 = vadd.f32 %v930, %v961
    %963 = vmatmul.f32.gmra.mxu0 %v874
    %v964 = vpop.f32.mrf.mxu0
    %v965 = vadd.f32 %v930, %v964
    %966 = vmatmul.f32.gmra.mxu0 %v876
    %v967 = vpop.f32.mrf.mxu0
    %v968 = vadd.f32 %v930, %v967
    %969 = vmatmul.f32.gmra.mxu0 %v878
    %v970 = vpop.f32.mrf.mxu0
    %v971 = vadd.f32 %v930, %v970
    %972 = vmatmul.f32.gmra.mxu0 %v880
    %v973 = vpop.f32.mrf.mxu0
    %v974 = vadd.f32 %v930, %v973
    %975 = vmatmul.f32.gmra.mxu0 %v882
    %v976 = vpop.f32.mrf.mxu0
    %v977 = vadd.f32 %v930, %v976
    %978 = vmatmul.f32.gmra.mxu0 %v884
    %v979 = vpop.f32.mrf.mxu0
    %v980 = vadd.f32 %v930, %v979
    %981 = vmatmul.f32.gmra.mxu0 %v886
    %v982 = vpop.f32.mrf.mxu0
    %v983 = vadd.f32 %v930, %v982
    %984 = vmatmul.f32.gmra.mxu0 %v888
    %v985 = vpop.f32.mrf.mxu0
    %v986 = vadd.f32 %v930, %v985
    %987 = vmatmul.f32.gmra.mxu0 %v890
    %v988 = vpop.f32.mrf.mxu0
    %v989 = vadd.f32 %v930, %v988
    %990 = vmatmul.f32.gmra.mxu0 %v892
    %v991 = vpop.f32.mrf.mxu0
    %v992 = vadd.f32 %v930, %v991
    %993 = vmatmul.f32.gmra.mxu0 %v894
    %v994 = vpop.f32.mrf.mxu0
    %v995 = vadd.f32 %v930, %v994
    %996 = vdwg.mxu0
    %997 = vmatpush.msra.mxu0 %v927
    %998 = vmatpush.msra.mxu0 %v926
    %999 = vmatpush.msra.mxu0 %v925
    %1000 = vmatpush.msra.mxu0 %v924
    %1001 = vmatpush.msra.mxu0 %v923
    %1002 = vmatpush.msra.mxu0 %v922
    %1003 = vmatpush.msra.mxu0 %v921
    %1004 = vmatpush.msra.mxu0 %v920
    %1005 = vmatpush.msra.mxu0 %v919
    %1006 = vmatpush.msra.mxu0 %v918
    %1007 = vmatpush.msra.mxu0 %v917
    %1008 = vmatpush.msra.mxu0 %v916
    %1009 = vmatpush.msra.mxu0 %v915
    %1010 = vmatpush.msra.mxu0 %v914
    %1011 = vmatpush.msra.mxu0 %v913
    %1012 = vmatpush.msra.mxu0 %v912
    %1013 = vmatmul.f32.gmra.mxu0 %v865
    %v1014 = vpop.f32.mrf.mxu0
    %v1015 = vadd.f32 %v950, %v1014
    %1016 = vmatmul.f32.gmra.mxu0 %v867
    %v1017 = vpop.f32.mrf.mxu0
    %v1018 = vadd.f32 %v953, %v1017
    %1019 = vmatmul.f32.gmra.mxu0 %v869
    %v1020 = vpop.f32.mrf.mxu0
    %v1021 = vadd.f32 %v956, %v1020
    %1022 = vmatmul.f32.gmra.mxu0 %v871
    %v1023 = vpop.f32.mrf.mxu0
    %v1024 = vadd.f32 %v959, %v1023
    %1025 = vmatmul.f32.gmra.mxu0 %v873
    %v1026 = vpop.f32.mrf.mxu0
    %v1027 = vadd.f32 %v962, %v1026
    %1028 = vmatmul.f32.gmra.mxu0 %v875
    %v1029 = vpop.f32.mrf.mxu0
    %v1030 = vadd.f32 %v965, %v1029
    %1031 = vmatmul.f32.gmra.mxu0 %v877
    %v1032 = vpop.f32.mrf.mxu0
    %v1033 = vadd.f32 %v968, %v1032
    %1034 = vmatmul.f32.gmra.mxu0 %v879
    %v1035 = vpop.f32.mrf.mxu0
    %v1036 = vadd.f32 %v971, %v1035
    %1037 = vmatmul.f32.gmra.mxu0 %v881
    %v1038 = vpop.f32.mrf.mxu0
    %v1039 = vadd.f32 %v974, %v1038
    %1040 = vmatmul.f32.gmra.mxu0 %v883
    %v1041 = vpop.f32.mrf.mxu0
    %v1042 = vadd.f32 %v977, %v1041
    %1043 = vmatmul.f32.gmra.mxu0 %v885
    %v1044 = vpop.f32.mrf.mxu0
    %v1045 = vadd.f32 %v980, %v1044
    %1046 = vmatmul.f32.gmra.mxu0 %v887
    %v1047 = vpop.f32.mrf.mxu0
    %v1048 = vadd.f32 %v983, %v1047
    %1049 = vmatmul.f32.gmra.mxu0 %v889
    %v1050 = vpop.f32.mrf.mxu0
    %v1051 = vadd.f32 %v986, %v1050
    %1052 = vmatmul.f32.gmra.mxu0 %v891
    %v1053 = vpop.f32.mrf.mxu0
    %v1054 = vadd.f32 %v989, %v1053
    %1055 = vmatmul.f32.gmra.mxu0 %v893
    %v1056 = vpop.f32.mrf.mxu0
    %v1057 = vadd.f32 %v992, %v1056
    %1058 = vmatmul.f32.gmra.mxu0 %v895
    %v1059 = vpop.f32.mrf.mxu0
    %v1060 = vadd.f32 %v995, %v1059
    %1061 = vdwg.mxu0
    %v1062 = vld [vmem:[#allocation13] sm:$0xff]
    %v1063 = vld [vmem:[#allocation13 + $0x8] sm:$0xff]
    %v1064 = vld [vmem:[#allocation13 + $0x10] sm:$0xff]
    %v1065 = vld [vmem:[#allocation13 + $0x18] sm:$0xff]
    %v1066 = vld [vmem:[#allocation13 + $0x20] sm:$0xff]
    %v1067 = vld [vmem:[#allocation13 + $0x28] sm:$0xff]
    %v1068 = vld [vmem:[#allocation13 + $0x30] sm:$0xff]
    %v1069 = vld [vmem:[#allocation13 + $0x38] sm:$0xff]
    %v1070 = vld [vmem:[#allocation13 + $0x40] sm:$0xff]
    %v1071 = vld [vmem:[#allocation13 + $0x48] sm:$0xff]
    %v1072 = vld [vmem:[#allocation13 + $0x50] sm:$0xff]
    %v1073 = vld [vmem:[#allocation13 + $0x58] sm:$0xff]
    %v1074 = vld [vmem:[#allocation13 + $0x60] sm:$0xff]
    %v1075 = vld [vmem:[#allocation13 + $0x68] sm:$0xff]
    %v1076 = vld [vmem:[#allocation13 + $0x70] sm:$0xff]
    %v1077 = vld [vmem:[#allocation13 + $0x78] sm:$0xff]
    %v1078 = vmul.f32 %v1015, 0.5
    %v1079 = vmul.f32 %v1018, 0.5
    %v1080 = vmul.f32 %v1021, 0.5
    %v1081 = vmul.f32 %v1024, 0.5
    %v1082 = vmul.f32 %v1027, 0.5
    %v1083 = vmul.f32 %v1030, 0.5
    %v1084 = vmul.f32 %v1033, 0.5
    %v1085 = vmul.f32 %v1036, 0.5
    %v1086 = vmul.f32 %v1039, 0.5
    %v1087 = vmul.f32 %v1042, 0.5
    %v1088 = vmul.f32 %v1045, 0.5
    %v1089 = vmul.f32 %v1048, 0.5
    %v1090 = vmul.f32 %v1051, 0.5
    %v1091 = vmul.f32 %v1054, 0.5
    %v1092 = vmul.f32 %v1057, 0.5
    %v1093 = vmul.f32 %v1060, 0.5
    %v1094 = vmul.f32 %v1078, 1.442695
    %v1095 = vpow.pop %v1094
    %v1096 = vmul.f32 %v1079, 1.442695
    %v1097 = vpow.pop %v1096
    %v1098 = vmul.f32 %v1080, 1.442695
    %v1099 = vpow.pop %v1098
    %v1100 = vmul.f32 %v1081, 1.442695
    %v1101 = vpow.pop %v1100
    %v1102 = vmul.f32 %v1082, 1.442695
    %v1103 = vpow.pop %v1102
    %v1104 = vmul.f32 %v1083, 1.442695
    %v1105 = vpow.pop %v1104
    %v1106 = vmul.f32 %v1084, 1.442695
    %v1107 = vpow.pop %v1106
    %v1108 = vmul.f32 %v1085, 1.442695
    %v1109 = vpow.pop %v1108
    %v1110 = vmul.f32 %v1086, 1.442695
    %v1111 = vpow.pop %v1110
    %v1112 = vmul.f32 %v1087, 1.442695
    %v1113 = vpow.pop %v1112
    %v1114 = vmul.f32 %v1088, 1.442695
    %v1115 = vpow.pop %v1114
    %v1116 = vmul.f32 %v1089, 1.442695
    %v1117 = vpow.pop %v1116
    %v1118 = vmul.f32 %v1090, 1.442695
    %v1119 = vpow.pop %v1118
    %v1120 = vmul.f32 %v1091, 1.442695
    %v1121 = vpow.pop %v1120
    %v1122 = vmul.f32 %v1092, 1.442695
    %v1123 = vpow.pop %v1122
    %v1124 = vmul.f32 %v1093, 1.442695
    %v1125 = vpow.pop %v1124
    %1142 = vrot.lane.b32.xlu0 %v1095, 108
    %v1143 = vpop.permute.xlu0 %1142
    %1144 = vrot.lane.b32.xlu0 %v1097, 108
    %v1145 = vpop.permute.xlu0 %1144
    %1146 = vrot.lane.b32.xlu0 %v1099, 108
    %v1147 = vpop.permute.xlu0 %1146
    %1148 = vrot.lane.b32.xlu0 %v1101, 108
    %v1149 = vpop.permute.xlu0 %1148
    %1150 = vrot.lane.b32.xlu0 %v1103, 108
    %v1151 = vpop.permute.xlu0 %1150
    %1152 = vrot.lane.b32.xlu0 %v1105, 108
    %v1153 = vpop.permute.xlu0 %1152
    %1154 = vrot.lane.b32.xlu0 %v1107, 108
    %v1155 = vpop.permute.xlu0 %1154
    %1156 = vrot.lane.b32.xlu0 %v1109, 108
    %v1157 = vpop.permute.xlu0 %1156
    %1158 = vrot.lane.b32.xlu0 %v1111, 108
    %v1159 = vpop.permute.xlu0 %1158
    %1160 = vrot.lane.b32.xlu0 %v1113, 108
    %v1161 = vpop.permute.xlu0 %1160
    %1162 = vrot.lane.b32.xlu0 %v1115, 108
    %v1163 = vpop.permute.xlu0 %1162
    %1164 = vrot.lane.b32.xlu0 %v1117, 108
    %v1165 = vpop.permute.xlu0 %1164
    %1166 = vrot.lane.b32.xlu0 %v1119, 108
    %v1167 = vpop.permute.xlu0 %1166
    %1168 = vrot.lane.b32.xlu0 %v1121, 108
    %v1169 = vpop.permute.xlu0 %1168
    %1170 = vrot.lane.b32.xlu0 %v1123, 108
    %v1171 = vpop.permute.xlu0 %1170
    %1172 = vrot.lane.b32.xlu0 %v1125, 108
    %v1173 = vpop.permute.xlu0 %1172
    %v1190 = vmul.f32 %v1062, %v1143
    %v1191 = vmul.f32 %v1063, %v1145
    %v1192 = vmul.f32 %v1064, %v1147
    %v1193 = vmul.f32 %v1065, %v1149
    %v1194 = vmul.f32 %v1066, %v1151
    %v1195 = vmul.f32 %v1067, %v1153
    %v1196 = vmul.f32 %v1068, %v1155
    %v1197 = vmul.f32 %v1069, %v1157
    %v1198 = vmul.f32 %v1070, %v1159
    %v1199 = vmul.f32 %v1071, %v1161
    %v1200 = vmul.f32 %v1072, %v1163
    %v1201 = vmul.f32 %v1073, %v1165
    %v1202 = vmul.f32 %v1074, %v1167
    %v1203 = vmul.f32 %v1075, %v1169
    %v1204 = vmul.f32 %v1076, %v1171
    %v1205 = vmul.f32 %v1077, %v1173
    %v1206 = vadd.f32 %v1015, %v1190
    %v1207 = vadd.f32 %v1018, %v1191
    %v1208 = vadd.f32 %v1021, %v1192
    %v1209 = vadd.f32 %v1024, %v1193
    %v1210 = vadd.f32 %v1027, %v1194
    %v1211 = vadd.f32 %v1030, %v1195
    %v1212 = vadd.f32 %v1033, %v1196
    %v1213 = vadd.f32 %v1036, %v1197
    %v1214 = vadd.f32 %v1039, %v1198
    %v1215 = vadd.f32 %v1042, %v1199
    %v1216 = vadd.f32 %v1045, %v1200
    %v1217 = vadd.f32 %v1048, %v1201
    %v1218 = vadd.f32 %v1051, %v1202
    %v1219 = vadd.f32 %v1054, %v1203
    %v1220 = vadd.f32 %v1057, %v1204
    %v1221 = vadd.f32 %v1060, %v1205
    %v1222 = vld [vmem:[#allocation10] sm:$0xff]
    %v1223 = vld [vmem:[#allocation10 + $0x8] sm:$0xff]
    %v1224 = vld [vmem:[#allocation10 + $0x10] sm:$0xff]
    %v1225 = vld [vmem:[#allocation10 + $0x18] sm:$0xff]
    %v1226 = vld [vmem:[#allocation10 + $0x20] sm:$0xf]
    %v1227 = vld [vmem:[#allocation10 + $0x28] sm:$0xf]
    %v1228 = vld [vmem:[%s6] sm:$0x3]
    %v1230 = vperm.slane %v1228, 0
    %v1231 = vperm.slane %v1228, 1
    %vm1234 = vcmask 162816
    %v1236 = vsel %vm1234, %v1206, 0
    %v1239 = vsel %vm1234, %v1207, 0
    %v1242 = vsel %vm1234, %v1208, 0
    %v1245 = vsel %vm1234, %v1209, 0
    %v1248 = vsel %vm1234, %v1210, 0
    %v1251 = vsel %vm1234, %v1211, 0
    %v1254 = vsel %vm1234, %v1212, 0
    %v1257 = vsel %vm1234, %v1213, 0
    %v1260 = vsel %vm1234, %v1214, 0
    %v1263 = vsel %vm1234, %v1215, 0
    %v1266 = vsel %vm1234, %v1216, 0
    %v1269 = vsel %vm1234, %v1217, 0
    %v1272 = vsel %vm1234, %v1218, 0
    %v1275 = vsel %vm1234, %v1219, 0
    %v1278 = vsel %vm1234, %v1220, 0
    %v1281 = vsel %vm1234, %v1221, 0
    %vm1283 = vcmask 1043456
    %v1285 = vsel %vm1283, %v1226, 0
    %v1288 = vsel %vm1283, %v1227, 0
    %1290 = vmatpush.msra.mxu0 0.0
    %1291 = vmatpush.msra.mxu0 0.0
    %1292 = vmatpush.msra.mxu0 0.0
    %1293 = vmatpush.msra.mxu0 0.0
    %1294 = vmatpush.msra.mxu0 0.0
    %1295 = vmatpush.msra.mxu0 0.0
    %1296 = vmatpush.msra.mxu0 0.0
    %1297 = vmatpush.msra.mxu0 0.0
    %1298 = vmatpush.msra.mxu0 0.0
    %1299 = vmatpush.msra.mxu0 0.0
    %1300 = vmatpush.msra.mxu0 0.0
    %1301 = vmatpush.msra.mxu0 0.0
    %1302 = vmatpush.msra.mxu0 0.0
    %1303 = vmatpush.msra.mxu0 %v1285
    %1304 = vmatpush.msra.mxu0 %v1224
    %1305 = vmatpush.msra.mxu0 %v1222
    %1306 = vmatmul.f32.gmra.mxu0 %v1236
    %v1307 = vpop.f32.mrf.mxu0
    %v1308 = vadd.f32 %v1230, %v1307
    %1309 = vmatmul.f32.gmra.mxu0 %v1239
    %v1310 = vpop.f32.mrf.mxu0
    %v1311 = vadd.f32 %v1230, %v1310
    %1312 = vmatmul.f32.gmra.mxu0 %v1242
    %v1313 = vpop.f32.mrf.mxu0
    %v1314 = vadd.f32 %v1230, %v1313
    %1315 = vmatmul.f32.gmra.mxu0 %v1245
    %v1316 = vpop.f32.mrf.mxu0
    %v1317 = vadd.f32 %v1230, %v1316
    %1318 = vmatmul.f32.gmra.mxu0 %v1248
    %v1319 = vpop.f32.mrf.mxu0
    %v1320 = vadd.f32 %v1230, %v1319
    %1321 = vmatmul.f32.gmra.mxu0 %v1251
    %v1322 = vpop.f32.mrf.mxu0
    %v1323 = vadd.f32 %v1230, %v1322
    %1324 = vmatmul.f32.gmra.mxu0 %v1254
    %v1325 = vpop.f32.mrf.mxu0
    %v1326 = vadd.f32 %v1230, %v1325
    %1327 = vmatmul.f32.gmra.mxu0 %v1257
    %v1328 = vpop.f32.mrf.mxu0
    %v1329 = vadd.f32 %v1230, %v1328
    %1330 = vmatmul.f32.gmra.mxu0 %v1260
    %v1331 = vpop.f32.mrf.mxu0
    %v1332 = vadd.f32 %v1230, %v1331
    %1333 = vmatmul.f32.gmra.mxu0 %v1263
    %v1334 = vpop.f32.mrf.mxu0
    %v1335 = vadd.f32 %v1230, %v1334
    %1336 = vmatmul.f32.gmra.mxu0 %v1266
    %v1337 = vpop.f32.mrf.mxu0
    %v1338 = vadd.f32 %v1230, %v1337
    %1339 = vmatmul.f32.gmra.mxu0 %v1269
    %v1340 = vpop.f32.mrf.mxu0
    %v1341 = vadd.f32 %v1230, %v1340
    %1342 = vmatmul.f32.gmra.mxu0 %v1272
    %v1343 = vpop.f32.mrf.mxu0
    %v1344 = vadd.f32 %v1230, %v1343
    %1345 = vmatmul.f32.gmra.mxu0 %v1275
    %v1346 = vpop.f32.mrf.mxu0
    %v1347 = vadd.f32 %v1230, %v1346
    %1348 = vmatmul.f32.gmra.mxu0 %v1278
    %v1349 = vpop.f32.mrf.mxu0
    %v1350 = vadd.f32 %v1230, %v1349
    %1351 = vmatmul.f32.gmra.mxu0 %v1281
    %v1352 = vpop.f32.mrf.mxu0
    %v1353 = vadd.f32 %v1230, %v1352
    %1354 = vdwg.mxu0
    %1355 = vmatpush.msra.mxu0 0.0
    %1356 = vmatpush.msra.mxu0 0.0
    %1357 = vmatpush.msra.mxu0 0.0
    %1358 = vmatpush.msra.mxu0 0.0
    %1359 = vmatpush.msra.mxu0 0.0
    %1360 = vmatpush.msra.mxu0 0.0
    %1361 = vmatpush.msra.mxu0 0.0
    %1362 = vmatpush.msra.mxu0 0.0
    %1363 = vmatpush.msra.mxu0 0.0
    %1364 = vmatpush.msra.mxu0 0.0
    %1365 = vmatpush.msra.mxu0 0.0
    %1366 = vmatpush.msra.mxu0 0.0
    %1367 = vmatpush.msra.mxu0 0.0
    %1368 = vmatpush.msra.mxu0 %v1288
    %1369 = vmatpush.msra.mxu0 %v1225
    %1370 = vmatpush.msra.mxu0 %v1223
    %1371 = vmatmul.f32.gmra.mxu0 %v1236
    %v1372 = vpop.f32.mrf.mxu0
    %v1373 = vadd.f32 %v1231, %v1372
    %1374 = vmatmul.f32.gmra.mxu0 %v1239
    %v1375 = vpop.f32.mrf.mxu0
    %v1376 = vadd.f32 %v1231, %v1375
    %1377 = vmatmul.f32.gmra.mxu0 %v1242
    %v1378 = vpop.f32.mrf.mxu0
    %v1379 = vadd.f32 %v1231, %v1378
    %1380 = vmatmul.f32.gmra.mxu0 %v1245
    %v1381 = vpop.f32.mrf.mxu0
    %v1382 = vadd.f32 %v1231, %v1381
    %1383 = vmatmul.f32.gmra.mxu0 %v1248
    %v1384 = vpop.f32.mrf.mxu0
    %v1385 = vadd.f32 %v1231, %v1384
    %1386 = vmatmul.f32.gmra.mxu0 %v1251
    %v1387 = vpop.f32.mrf.mxu0
    %v1388 = vadd.f32 %v1231, %v1387
    %1389 = vmatmul.f32.gmra.mxu0 %v1254
    %v1390 = vpop.f32.mrf.mxu0
    %v1391 = vadd.f32 %v1231, %v1390
    %1392 = vmatmul.f32.gmra.mxu0 %v1257
    %v1393 = vpop.f32.mrf.mxu0
    %v1394 = vadd.f32 %v1231, %v1393
    %1395 = vmatmul.f32.gmra.mxu0 %v1260
    %v1396 = vpop.f32.mrf.mxu0
    %v1397 = vadd.f32 %v1231, %v1396
    %1398 = vmatmul.f32.gmra.mxu0 %v1263
    %v1399 = vpop.f32.mrf.mxu0
    %v1400 = vadd.f32 %v1231, %v1399
    %1401 = vmatmul.f32.gmra.mxu0 %v1266
    %v1402 = vpop.f32.mrf.mxu0
    %v1403 = vadd.f32 %v1231, %v1402
    %1404 = vmatmul.f32.gmra.mxu0 %v1269
    %v1405 = vpop.f32.mrf.mxu0
    %v1406 = vadd.f32 %v1231, %v1405
    %1407 = vmatmul.f32.gmra.mxu0 %v1272
    %v1408 = vpop.f32.mrf.mxu0
    %v1409 = vadd.f32 %v1231, %v1408
    %1410 = vmatmul.f32.gmra.mxu0 %v1275
    %v1411 = vpop.f32.mrf.mxu0
    %v1412 = vadd.f32 %v1231, %v1411
    %1413 = vmatmul.f32.gmra.mxu0 %v1278
    %v1414 = vpop.f32.mrf.mxu0
    %v1415 = vadd.f32 %v1231, %v1414
    %1416 = vmatmul.f32.gmra.mxu0 %v1281
    %v1417 = vpop.f32.mrf.mxu0
    %v1418 = vadd.f32 %v1231, %v1417
    %1419 = vdwg.mxu0
    %v1420 = vmax.f32 %v1308, 0.0
    %v1421 = vmax.f32 %v1373, 0.0
    %v1422 = vmax.f32 %v1311, 0.0
    %v1423 = vmax.f32 %v1376, 0.0
    %v1424 = vmax.f32 %v1314, 0.0
    %v1425 = vmax.f32 %v1379, 0.0
    %v1426 = vmax.f32 %v1317, 0.0
    %v1427 = vmax.f32 %v1382, 0.0
    %v1428 = vmax.f32 %v1320, 0.0
    %v1429 = vmax.f32 %v1385, 0.0
    %v1430 = vmax.f32 %v1323, 0.0
    %v1431 = vmax.f32 %v1388, 0.0
    %v1432 = vmax.f32 %v1326, 0.0
    %v1433 = vmax.f32 %v1391, 0.0
    %v1434 = vmax.f32 %v1329, 0.0
    %v1435 = vmax.f32 %v1394, 0.0
    %v1436 = vmax.f32 %v1332, 0.0
    %v1437 = vmax.f32 %v1397, 0.0
    %v1438 = vmax.f32 %v1335, 0.0
    %v1439 = vmax.f32 %v1400, 0.0
    %v1440 = vmax.f32 %v1338, 0.0
    %v1441 = vmax.f32 %v1403, 0.0
    %v1442 = vmax.f32 %v1341, 0.0
    %v1443 = vmax.f32 %v1406, 0.0
    %v1444 = vmax.f32 %v1344, 0.0
    %v1445 = vmax.f32 %v1409, 0.0
    %v1446 = vmax.f32 %v1347, 0.0
    %v1447 = vmax.f32 %v1412, 0.0
    %v1448 = vmax.f32 %v1350, 0.0
    %v1449 = vmax.f32 %v1415, 0.0
    %v1450 = vmax.f32 %v1353, 0.0
    %v1451 = vmax.f32 %v1418, 0.0
    %v1452 = vld [vmem:[#allocation11] sm:$0xff]
    %v1453 = vld [vmem:[#allocation11 + $0x8] sm:$0xff]
    %v1454 = vld [vmem:[#allocation11 + $0x10] sm:$0xff]
    %v1455 = vld [vmem:[#allocation11 + $0x18] sm:$0xff]
    %v1456 = vld [vmem:[#allocation11 + $0x20] sm:$0xff]
    %v1457 = vld [vmem:[#allocation11 + $0x28] sm:$0xff]
    %v1458 = vld [vmem:[#allocation11 + $0x30] sm:$0xff]
    %v1459 = vld [vmem:[#allocation11 + $0x38] sm:$0xff]
    %v1460 = vld [vmem:[#allocation11 + $0x40] sm:$0xff]
    %v1461 = vld [vmem:[#allocation11 + $0x48] sm:$0xff]
    %v1462 = vld [vmem:[#allocation11 + $0x50] sm:$0xff]
    %v1463 = vld [vmem:[#allocation11 + $0x58] sm:$0xff]
    %v1464 = vld [vmem:[#allocation11 + $0x60] sm:$0xff]
    %v1465 = vld [vmem:[#allocation11 + $0x68] sm:$0xff]
    %v1466 = vld [vmem:[#allocation11 + $0x70] sm:$0xff]
    %v1467 = vld [vmem:[#allocation11 + $0x78] sm:$0xff]
    %v1468 = vld [vmem:[#allocation11 + $0x80] sm:$0xff]
    %v1469 = vld [vmem:[#allocation11 + $0x88] sm:$0xff]
    %v1470 = vld [vmem:[#allocation11 + $0x90] sm:$0xff]
    %v1471 = vld [vmem:[#allocation11 + $0x98] sm:$0xff]
    %v1472 = vld [vmem:[#allocation11 + $0xa0] sm:$0xff]
    %v1473 = vld [vmem:[#allocation11 + $0xa8] sm:$0xff]
    %v1474 = vld [vmem:[#allocation11 + $0xb0] sm:$0xff]
    %v1475 = vld [vmem:[#allocation11 + $0xb8] sm:$0xff]
    %v1476 = vld [vmem:[#allocation11 + $0xc0] sm:$0xff]
    %v1477 = vld [vmem:[#allocation11 + $0xc8] sm:$0xff]
    %v1478 = vld [vmem:[#allocation11 + $0xd0] sm:$0xff]
    %v1479 = vld [vmem:[#allocation11 + $0xd8] sm:$0xff]
    %v1480 = vld [vmem:[#allocation11 + $0xe0] sm:$0xff]
    %v1481 = vld [vmem:[#allocation11 + $0xe8] sm:$0xff]
    %v1482 = vld [vmem:[#allocation11 + $0xf0] sm:$0xff]
    %v1483 = vld [vmem:[#allocation11 + $0xf8] sm:$0xff]
    %v1484 = vld [vmem:[#allocation11 + $0x100] sm:$0xff]
    %v1485 = vld [vmem:[#allocation11 + $0x108] sm:$0xff]
    %v1486 = vld [vmem:[#allocation11 + $0x110] sm:$0xff]
    %v1487 = vld [vmem:[#allocation11 + $0x118] sm:$0xff]
    %v1488 = vld [vmem:[#allocation11 + $0x120] sm:$0xff]
    %v1489 = vld [vmem:[#allocation11 + $0x128] sm:$0xff]
    %v1490 = vld [vmem:[#allocation11 + $0x130] sm:$0xff]
    %v1491 = vld [vmem:[#allocation11 + $0x138] sm:$0xff]
    %v1492 = vld [vmem:[#allocation11 + $0x140] sm:$0xff]
    %v1493 = vld [vmem:[#allocation11 + $0x148] sm:$0xff]
    %v1494 = vld [vmem:[#allocation11 + $0x150] sm:$0xff]
    %v1495 = vld [vmem:[#allocation11 + $0x158] sm:$0xff]
    %v1496 = vld [vmem:[#allocation11 + $0x160] sm:$0xff]
    %v1497 = vld [vmem:[#allocation11 + $0x168] sm:$0xff]
    %v1498 = vld [vmem:[#allocation11 + $0x170] sm:$0xff]
    %v1499 = vld [vmem:[#allocation11 + $0x178] sm:$0xff]
    %v1500 = vld [vmem:[#allocation11 + $0x180] sm:$0xff]
    %v1501 = vld [vmem:[#allocation11 + $0x188] sm:$0xff]
    %v1502 = vld [vmem:[#allocation11 + $0x190] sm:$0xff]
    %v1503 = vld [vmem:[#allocation11 + $0x198] sm:$0xff]
    %v1504 = vld [vmem:[#allocation11 + $0x1a0] sm:$0xff]
    %v1505 = vld [vmem:[#allocation11 + $0x1a8] sm:$0xff]
    %v1506 = vld [vmem:[#allocation11 + $0x1b0] sm:$0xff]
    %v1507 = vld [vmem:[#allocation11 + $0x1b8] sm:$0xff]
    %v1508 = vld [vmem:[#allocation11 + $0x1c0] sm:$0xff]
    %v1509 = vld [vmem:[#allocation11 + $0x1c8] sm:$0xff]
    %v1510 = vld [vmem:[#allocation11 + $0x1d0] sm:$0xff]
    %v1511 = vld [vmem:[#allocation11 + $0x1d8] sm:$0xff]
    %v1512 = vld [vmem:[#allocation11 + $0x1e0] sm:$0xff]
    %v1513 = vld [vmem:[#allocation11 + $0x1e8] sm:$0xff]
    %v1514 = vld [vmem:[#allocation11 + $0x1f0] sm:$0xff]
    %v1515 = vld [vmem:[#allocation11 + $0x1f8] sm:$0xff]
    %v1516 = vld [vmem:[#allocation11 + $0x200] sm:$0xff]
    %v1517 = vld [vmem:[#allocation11 + $0x208] sm:$0xff]
    %v1518 = vld [vmem:[#allocation11 + $0x210] sm:$0xff]
    %v1519 = vld [vmem:[#allocation11 + $0x218] sm:$0xff]
    %v1520 = vld [vmem:[#allocation11 + $0x220] sm:$0xff]
    %v1521 = vld [vmem:[#allocation11 + $0x228] sm:$0xff]
    %v1522 = vld [vmem:[#allocation11 + $0x230] sm:$0xff]
    %v1523 = vld [vmem:[#allocation11 + $0x238] sm:$0xff]
    %v1524 = vld [vmem:[#allocation11 + $0x240] sm:$0xff]
    %v1525 = vld [vmem:[#allocation11 + $0x248] sm:$0xff]
    %v1526 = vld [vmem:[#allocation11 + $0x250] sm:$0xff]
    %v1527 = vld [vmem:[#allocation11 + $0x258] sm:$0xff]
    %v1528 = vld [vmem:[#allocation11 + $0x260] sm:$0xff]
    %v1529 = vld [vmem:[#allocation11 + $0x268] sm:$0xff]
    %v1530 = vld [vmem:[#allocation11 + $0x270] sm:$0xff]
    %v1531 = vld [vmem:[#allocation11 + $0x278] sm:$0xff]
    %v1532 = vld [vmem:[#allocation11 + $0x280] sm:$0xff]
    %v1533 = vld [vmem:[#allocation11 + $0x288] sm:$0xff]
    %v1534 = vld [vmem:[#allocation11 + $0x290] sm:$0xff]
    %v1535 = vld [vmem:[#allocation11 + $0x298] sm:$0xff]
    %v1536 = vld [vmem:[#allocation11 + $0x2a0] sm:$0xff]
    %v1537 = vld [vmem:[#allocation11 + $0x2a8] sm:$0xff]
    %v1538 = vld [vmem:[#allocation11 + $0x2b0] sm:$0xff]
    %v1539 = vld [vmem:[#allocation11 + $0x2b8] sm:$0xff]
    %v1540 = vld [vmem:[#allocation11 + $0x2c0] sm:$0xff]
    %v1541 = vld [vmem:[#allocation11 + $0x2c8] sm:$0xff]
    %v1542 = vld [vmem:[#allocation11 + $0x2d0] sm:$0xff]
    %v1543 = vld [vmem:[#allocation11 + $0x2d8] sm:$0xff]
    %v1544 = vld [vmem:[#allocation11 + $0x2e0] sm:$0xff]
    %v1545 = vld [vmem:[#allocation11 + $0x2e8] sm:$0xff]
    %v1546 = vld [vmem:[#allocation11 + $0x2f0] sm:$0xff]
    %v1547 = vld [vmem:[#allocation11 + $0x2f8] sm:$0xff]
    %v1548 = vld [vmem:[#allocation11 + $0x300] sm:$0xff]
    %v1549 = vld [vmem:[#allocation11 + $0x308] sm:$0xff]
    %v1550 = vld [vmem:[#allocation11 + $0x310] sm:$0xff]
    %v1551 = vld [vmem:[#allocation11 + $0x318] sm:$0xff]
    %v1552 = vld [vmem:[#allocation11 + $0x320] sm:$0xff]
    %v1553 = vld [vmem:[#allocation11 + $0x328] sm:$0xff]
    %v1554 = vld [vmem:[#allocation11 + $0x330] sm:$0xff]
    %v1555 = vld [vmem:[#allocation11 + $0x338] sm:$0xff]
    %v1556 = vld [vmem:[#allocation11 + $0x340] sm:$0xff]
    %v1557 = vld [vmem:[#allocation11 + $0x348] sm:$0xff]
    %v1558 = vld [vmem:[#allocation11 + $0x350] sm:$0xff]
    %v1559 = vld [vmem:[#allocation11 + $0x358] sm:$0xff]
    %v1560 = vld [vmem:[#allocation11 + $0x360] sm:$0xff]
    %v1561 = vld [vmem:[#allocation11 + $0x368] sm:$0xff]
    %v1562 = vld [vmem:[#allocation11 + $0x370] sm:$0xff]
    %v1563 = vld [vmem:[#allocation11 + $0x378] sm:$0xff]
    %v1564 = vld [vmem:[#allocation11 + $0x380] sm:$0xff]
    %v1565 = vld [vmem:[#allocation11 + $0x388] sm:$0xff]
    %v1566 = vld [vmem:[#allocation11 + $0x390] sm:$0xff]
    %v1567 = vld [vmem:[#allocation11 + $0x398] sm:$0xff]
    %v1568 = vld [vmem:[#allocation11 + $0x3a0] sm:$0xff]
    %v1569 = vld [vmem:[#allocation11 + $0x3a8] sm:$0xff]
    %v1570 = vld [vmem:[#allocation11 + $0x3b0] sm:$0xff]
    %v1571 = vld [vmem:[#allocation11 + $0x3b8] sm:$0xff]
    %v1572 = vld [vmem:[#allocation11 + $0x3c0] sm:$0xff]
    %v1573 = vld [vmem:[#allocation11 + $0x3c8] sm:$0xff]
    %v1574 = vld [vmem:[#allocation11 + $0x3d0] sm:$0xff]
    %v1575 = vld [vmem:[#allocation11 + $0x3d8] sm:$0xff]
    %v1576 = vld [vmem:[#allocation11 + $0x3e0] sm:$0xff]
    %v1577 = vld [vmem:[#allocation11 + $0x3e8] sm:$0xff]
    %v1578 = vld [vmem:[#allocation11 + $0x3f0] sm:$0xff]
    %v1579 = vld [vmem:[#allocation11 + $0x3f8] sm:$0xff]
    %v1580 = vld [vmem:[%s8] sm:$0xf]
    %v1582 = vperm.slane %v1580, 0
    %v1583 = vperm.slane %v1580, 1
    %v1584 = vperm.slane %v1580, 2
    %v1585 = vperm.slane %v1580, 3
    %1590 = vmatpush.msra.mxu0 %v1512
    %1591 = vmatpush.msra.mxu0 %v1508
    %1592 = vmatpush.msra.mxu0 %v1504
    %1593 = vmatpush.msra.mxu0 %v1500
    %1594 = vmatpush.msra.mxu0 %v1496
    %1595 = vmatpush.msra.mxu0 %v1492
    %1596 = vmatpush.msra.mxu0 %v1488
    %1597 = vmatpush.msra.mxu0 %v1484
    %1598 = vmatpush.msra.mxu0 %v1480
    %1599 = vmatpush.msra.mxu0 %v1476
    %1600 = vmatpush.msra.mxu0 %v1472
    %1601 = vmatpush.msra.mxu0 %v1468
    %1602 = vmatpush.msra.mxu0 %v1464
    %1603 = vmatpush.msra.mxu0 %v1460
    %1604 = vmatpush.msra.mxu0 %v1456
    %1605 = vmatpush.msra.mxu0 %v1452
    %1606 = vmatmul.f32.gmra.mxu0 %v1420
    %v1607 = vpop.f32.mrf.mxu0
    %v1608 = vadd.f32 %v1582, %v1607
    %1609 = vmatmul.f32.gmra.mxu0 %v1422
    %v1610 = vpop.f32.mrf.mxu0
    %v1611 = vadd.f32 %v1582, %v1610
    %1612 = vmatmul.f32.gmra.mxu0 %v1424
    %v1613 = vpop.f32.mrf.mxu0
    %v1614 = vadd.f32 %v1582, %v1613
    %1615 = vmatmul.f32.gmra.mxu0 %v1426
    %v1616 = vpop.f32.mrf.mxu0
    %v1617 = vadd.f32 %v1582, %v1616
    %1618 = vmatmul.f32.gmra.mxu0 %v1428
    %v1619 = vpop.f32.mrf.mxu0
    %v1620 = vadd.f32 %v1582, %v1619
    %1621 = vmatmul.f32.gmra.mxu0 %v1430
    %v1622 = vpop.f32.mrf.mxu0
    %v1623 = vadd.f32 %v1582, %v1622
    %1624 = vmatmul.f32.gmra.mxu0 %v1432
    %v1625 = vpop.f32.mrf.mxu0
    %v1626 = vadd.f32 %v1582, %v1625
    %1627 = vmatmul.f32.gmra.mxu0 %v1434
    %v1628 = vpop.f32.mrf.mxu0
    %v1629 = vadd.f32 %v1582, %v1628
    %1630 = vmatmul.f32.gmra.mxu0 %v1436
    %v1631 = vpop.f32.mrf.mxu0
    %v1632 = vadd.f32 %v1582, %v1631
    %1633 = vmatmul.f32.gmra.mxu0 %v1438
    %v1634 = vpop.f32.mrf.mxu0
    %v1635 = vadd.f32 %v1582, %v1634
    %1636 = vmatmul.f32.gmra.mxu0 %v1440
    %v1637 = vpop.f32.mrf.mxu0
    %v1638 = vadd.f32 %v1582, %v1637
    %1639 = vmatmul.f32.gmra.mxu0 %v1442
    %v1640 = vpop.f32.mrf.mxu0
    %v1641 = vadd.f32 %v1582, %v1640
    %1642 = vmatmul.f32.gmra.mxu0 %v1444
    %v1643 = vpop.f32.mrf.mxu0
    %v1644 = vadd.f32 %v1582, %v1643
    %1645 = vmatmul.f32.gmra.mxu0 %v1446
    %v1646 = vpop.f32.mrf.mxu0
    %v1647 = vadd.f32 %v1582, %v1646
    %1648 = vmatmul.f32.gmra.mxu0 %v1448
    %v1649 = vpop.f32.mrf.mxu0
    %v1650 = vadd.f32 %v1582, %v1649
    %1651 = vmatmul.f32.gmra.mxu0 %v1450
    %v1652 = vpop.f32.mrf.mxu0
    %v1653 = vadd.f32 %v1582, %v1652
    %1654 = vdwg.mxu0
    %1655 = vmatpush.msra.mxu0 %v1576
    %1656 = vmatpush.msra.mxu0 %v1572
    %1657 = vmatpush.msra.mxu0 %v1568
    %1658 = vmatpush.msra.mxu0 %v1564
    %1659 = vmatpush.msra.mxu0 %v1560
    %1660 = vmatpush.msra.mxu0 %v1556
    %1661 = vmatpush.msra.mxu0 %v1552
    %1662 = vmatpush.msra.mxu0 %v1548
    %1663 = vmatpush.msra.mxu0 %v1544
    %1664 = vmatpush.msra.mxu0 %v1540
    %1665 = vmatpush.msra.mxu0 %v1536
    %1666 = vmatpush.msra.mxu0 %v1532
    %1667 = vmatpush.msra.mxu0 %v1528
    %1668 = vmatpush.msra.mxu0 %v1524
    %1669 = vmatpush.msra.mxu0 %v1520
    %1670 = vmatpush.msra.mxu0 %v1516
    %1671 = vmatmul.f32.gmra.mxu0 %v1421
    %v1672 = vpop.f32.mrf.mxu0
    %v1673 = vadd.f32 %v1608, %v1672
    %1674 = vmatmul.f32.gmra.mxu0 %v1423
    %v1675 = vpop.f32.mrf.mxu0
    %v1676 = vadd.f32 %v1611, %v1675
    %1677 = vmatmul.f32.gmra.mxu0 %v1425
    %v1678 = vpop.f32.mrf.mxu0
    %v1679 = vadd.f32 %v1614, %v1678
    %1680 = vmatmul.f32.gmra.mxu0 %v1427
    %v1681 = vpop.f32.mrf.mxu0
    %v1682 = vadd.f32 %v1617, %v1681
    %1683 = vmatmul.f32.gmra.mxu0 %v1429
    %v1684 = vpop.f32.mrf.mxu0
    %v1685 = vadd.f32 %v1620, %v1684
    %1686 = vmatmul.f32.gmra.mxu0 %v1431
    %v1687 = vpop.f32.mrf.mxu0
    %v1688 = vadd.f32 %v1623, %v1687
    %1689 = vmatmul.f32.gmra.mxu0 %v1433
    %v1690 = vpop.f32.mrf.mxu0
    %v1691 = vadd.f32 %v1626, %v1690
    %1692 = vmatmul.f32.gmra.mxu0 %v1435
    %v1693 = vpop.f32.mrf.mxu0
    %v1694 = vadd.f32 %v1629, %v1693
    %1695 = vmatmul.f32.gmra.mxu0 %v1437
    %v1696 = vpop.f32.mrf.mxu0
    %v1697 = vadd.f32 %v1632, %v1696
    %1698 = vmatmul.f32.gmra.mxu0 %v1439
    %v1699 = vpop.f32.mrf.mxu0
    %v1700 = vadd.f32 %v1635, %v1699
    %1701 = vmatmul.f32.gmra.mxu0 %v1441
    %v1702 = vpop.f32.mrf.mxu0
    %v1703 = vadd.f32 %v1638, %v1702
    %1704 = vmatmul.f32.gmra.mxu0 %v1443
    %v1705 = vpop.f32.mrf.mxu0
    %v1706 = vadd.f32 %v1641, %v1705
    %1707 = vmatmul.f32.gmra.mxu0 %v1445
    %v1708 = vpop.f32.mrf.mxu0
    %v1709 = vadd.f32 %v1644, %v1708
    %1710 = vmatmul.f32.gmra.mxu0 %v1447
    %v1711 = vpop.f32.mrf.mxu0
    %v1712 = vadd.f32 %v1647, %v1711
    %1713 = vmatmul.f32.gmra.mxu0 %v1449
    %v1714 = vpop.f32.mrf.mxu0
    %v1715 = vadd.f32 %v1650, %v1714
    %1716 = vmatmul.f32.gmra.mxu0 %v1451
    %v1717 = vpop.f32.mrf.mxu0
    %v1718 = vadd.f32 %v1653, %v1717
    %1719 = vdwg.mxu0
    %1720 = vmatpush.msra.mxu0 %v1513
    %1721 = vmatpush.msra.mxu0 %v1509
    %1722 = vmatpush.msra.mxu0 %v1505
    %1723 = vmatpush.msra.mxu0 %v1501
    %1724 = vmatpush.msra.mxu0 %v1497
    %1725 = vmatpush.msra.mxu0 %v1493
    %1726 = vmatpush.msra.mxu0 %v1489
    %1727 = vmatpush.msra.mxu0 %v1485
    %1728 = vmatpush.msra.mxu0 %v1481
    %1729 = vmatpush.msra.mxu0 %v1477
    %1730 = vmatpush.msra.mxu0 %v1473
    %1731 = vmatpush.msra.mxu0 %v1469
    %1732 = vmatpush.msra.mxu0 %v1465
    %1733 = vmatpush.msra.mxu0 %v1461
    %1734 = vmatpush.msra.mxu0 %v1457
    %1735 = vmatpush.msra.mxu0 %v1453
    %1736 = vmatmul.f32.gmra.mxu0 %v1420
    %v1737 = vpop.f32.mrf.mxu0
    %v1738 = vadd.f32 %v1583, %v1737
    %1739 = vmatmul.f32.gmra.mxu0 %v1422
    %v1740 = vpop.f32.mrf.mxu0
    %v1741 = vadd.f32 %v1583, %v1740
    %1742 = vmatmul.f32.gmra.mxu0 %v1424
    %v1743 = vpop.f32.mrf.mxu0
    %v1744 = vadd.f32 %v1583, %v1743
    %1745 = vmatmul.f32.gmra.mxu0 %v1426
    %v1746 = vpop.f32.mrf.mxu0
    %v1747 = vadd.f32 %v1583, %v1746
    %1748 = vmatmul.f32.gmra.mxu0 %v1428
    %v1749 = vpop.f32.mrf.mxu0
    %v1750 = vadd.f32 %v1583, %v1749
    %1751 = vmatmul.f32.gmra.mxu0 %v1430
    %v1752 = vpop.f32.mrf.mxu0
    %v1753 = vadd.f32 %v1583, %v1752
    %1754 = vmatmul.f32.gmra.mxu0 %v1432
    %v1755 = vpop.f32.mrf.mxu0
    %v1756 = vadd.f32 %v1583, %v1755
    %1757 = vmatmul.f32.gmra.mxu0 %v1434
    %v1758 = vpop.f32.mrf.mxu0
    %v1759 = vadd.f32 %v1583, %v1758
    %1760 = vmatmul.f32.gmra.mxu0 %v1436
    %v1761 = vpop.f32.mrf.mxu0
    %v1762 = vadd.f32 %v1583, %v1761
    %1763 = vmatmul.f32.gmra.mxu0 %v1438
    %v1764 = vpop.f32.mrf.mxu0
    %v1765 = vadd.f32 %v1583, %v1764
    %1766 = vmatmul.f32.gmra.mxu0 %v1440
    %v1767 = vpop.f32.mrf.mxu0
    %v1768 = vadd.f32 %v1583, %v1767
    %1769 = vmatmul.f32.gmra.mxu0 %v1442
    %v1770 = vpop.f32.mrf.mxu0
    %v1771 = vadd.f32 %v1583, %v1770
    %1772 = vmatmul.f32.gmra.mxu0 %v1444
    %v1773 = vpop.f32.mrf.mxu0
    %v1774 = vadd.f32 %v1583, %v1773
    %1775 = vmatmul.f32.gmra.mxu0 %v1446
    %v1776 = vpop.f32.mrf.mxu0
    %v1777 = vadd.f32 %v1583, %v1776
    %1778 = vmatmul.f32.gmra.mxu0 %v1448
    %v1779 = vpop.f32.mrf.mxu0
    %v1780 = vadd.f32 %v1583, %v1779
    %1781 = vmatmul.f32.gmra.mxu0 %v1450
    %v1782 = vpop.f32.mrf.mxu0
    %v1783 = vadd.f32 %v1583, %v1782
    %1784 = vdwg.mxu0
    %1785 = vmatpush.msra.mxu0 %v1577
    %1786 = vmatpush.msra.mxu0 %v1573
    %1787 = vmatpush.msra.mxu0 %v1569
    %1788 = vmatpush.msra.mxu0 %v1565
    %1789 = vmatpush.msra.mxu0 %v1561
    %1790 = vmatpush.msra.mxu0 %v1557
    %1791 = vmatpush.msra.mxu0 %v1553
    %1792 = vmatpush.msra.mxu0 %v1549
    %1793 = vmatpush.msra.mxu0 %v1545
    %1794 = vmatpush.msra.mxu0 %v1541
    %1795 = vmatpush.msra.mxu0 %v1537
    %1796 = vmatpush.msra.mxu0 %v1533
    %1797 = vmatpush.msra.mxu0 %v1529
    %1798 = vmatpush.msra.mxu0 %v1525
    %1799 = vmatpush.msra.mxu0 %v1521
    %1800 = vmatpush.msra.mxu0 %v1517
    %1801 = vmatmul.f32.gmra.mxu0 %v1421
    %v1802 = vpop.f32.mrf.mxu0
    %v1803 = vadd.f32 %v1738, %v1802
    %1804 = vmatmul.f32.gmra.mxu0 %v1423
    %v1805 = vpop.f32.mrf.mxu0
    %v1806 = vadd.f32 %v1741, %v1805
    %1807 = vmatmul.f32.gmra.mxu0 %v1425
    %v1808 = vpop.f32.mrf.mxu0
    %v1809 = vadd.f32 %v1744, %v1808
    %1810 = vmatmul.f32.gmra.mxu0 %v1427
    %v1811 = vpop.f32.mrf.mxu0
    %v1812 = vadd.f32 %v1747, %v1811
    %1813 = vmatmul.f32.gmra.mxu0 %v1429
    %v1814 = vpop.f32.mrf.mxu0
    %v1815 = vadd.f32 %v1750, %v1814
    %1816 = vmatmul.f32.gmra.mxu0 %v1431
    %v1817 = vpop.f32.mrf.mxu0
    %v1818 = vadd.f32 %v1753, %v1817
    %1819 = vmatmul.f32.gmra.mxu0 %v1433
    %v1820 = vpop.f32.mrf.mxu0
    %v1821 = vadd.f32 %v1756, %v1820
    %1822 = vmatmul.f32.gmra.mxu0 %v1435
    %v1823 = vpop.f32.mrf.mxu0
    %v1824 = vadd.f32 %v1759, %v1823
    %1825 = vmatmul.f32.gmra.mxu0 %v1437
    %v1826 = vpop.f32.mrf.mxu0
    %v1827 = vadd.f32 %v1762, %v1826
    %1828 = vmatmul.f32.gmra.mxu0 %v1439
    %v1829 = vpop.f32.mrf.mxu0
    %v1830 = vadd.f32 %v1765, %v1829
    %1831 = vmatmul.f32.gmra.mxu0 %v1441
    %v1832 = vpop.f32.mrf.mxu0
    %v1833 = vadd.f32 %v1768, %v1832
    %1834 = vmatmul.f32.gmra.mxu0 %v1443
    %v1835 = vpop.f32.mrf.mxu0
    %v1836 = vadd.f32 %v1771, %v1835
    %1837 = vmatmul.f32.gmra.mxu0 %v1445
    %v1838 = vpop.f32.mrf.mxu0
    %v1839 = vadd.f32 %v1774, %v1838
    %1840 = vmatmul.f32.gmra.mxu0 %v1447
    %v1841 = vpop.f32.mrf.mxu0
    %v1842 = vadd.f32 %v1777, %v1841
    %1843 = vmatmul.f32.gmra.mxu0 %v1449
    %v1844 = vpop.f32.mrf.mxu0
    %v1845 = vadd.f32 %v1780, %v1844
    %1846 = vmatmul.f32.gmra.mxu0 %v1451
    %v1847 = vpop.f32.mrf.mxu0
    %v1848 = vadd.f32 %v1783, %v1847
    %1849 = vdwg.mxu0
    %1850 = vmatpush.msra.mxu0 %v1514
    %1851 = vmatpush.msra.mxu0 %v1510
    %1852 = vmatpush.msra.mxu0 %v1506
    %1853 = vmatpush.msra.mxu0 %v1502
    %1854 = vmatpush.msra.mxu0 %v1498
    %1855 = vmatpush.msra.mxu0 %v1494
    %1856 = vmatpush.msra.mxu0 %v1490
    %1857 = vmatpush.msra.mxu0 %v1486
    %1858 = vmatpush.msra.mxu0 %v1482
    %1859 = vmatpush.msra.mxu0 %v1478
    %1860 = vmatpush.msra.mxu0 %v1474
    %1861 = vmatpush.msra.mxu0 %v1470
    %1862 = vmatpush.msra.mxu0 %v1466
    %1863 = vmatpush.msra.mxu0 %v1462
    %1864 = vmatpush.msra.mxu0 %v1458
    %1865 = vmatpush.msra.mxu0 %v1454
    %1866 = vmatmul.f32.gmra.mxu0 %v1420
    %v1867 = vpop.f32.mrf.mxu0
    %v1868 = vadd.f32 %v1584, %v1867
    %1869 = vmatmul.f32.gmra.mxu0 %v1422
    %v1870 = vpop.f32.mrf.mxu0
    %v1871 = vadd.f32 %v1584, %v1870
    %1872 = vmatmul.f32.gmra.mxu0 %v1424
    %v1873 = vpop.f32.mrf.mxu0
    %v1874 = vadd.f32 %v1584, %v1873
    %1875 = vmatmul.f32.gmra.mxu0 %v1426
    %v1876 = vpop.f32.mrf.mxu0
    %v1877 = vadd.f32 %v1584, %v1876
    %1878 = vmatmul.f32.gmra.mxu0 %v1428
    %v1879 = vpop.f32.mrf.mxu0
    %v1880 = vadd.f32 %v1584, %v1879
    %1881 = vmatmul.f32.gmra.mxu0 %v1430
    %v1882 = vpop.f32.mrf.mxu0
    %v1883 = vadd.f32 %v1584, %v1882
    %1884 = vmatmul.f32.gmra.mxu0 %v1432
    %v1885 = vpop.f32.mrf.mxu0
    %v1886 = vadd.f32 %v1584, %v1885
    %1887 = vmatmul.f32.gmra.mxu0 %v1434
    %v1888 = vpop.f32.mrf.mxu0
    %v1889 = vadd.f32 %v1584, %v1888
    %1890 = vmatmul.f32.gmra.mxu0 %v1436
    %v1891 = vpop.f32.mrf.mxu0
    %v1892 = vadd.f32 %v1584, %v1891
    %1893 = vmatmul.f32.gmra.mxu0 %v1438
    %v1894 = vpop.f32.mrf.mxu0
    %v1895 = vadd.f32 %v1584, %v1894
    %1896 = vmatmul.f32.gmra.mxu0 %v1440
    %v1897 = vpop.f32.mrf.mxu0
    %v1898 = vadd.f32 %v1584, %v1897
    %1899 = vmatmul.f32.gmra.mxu0 %v1442
    %v1900 = vpop.f32.mrf.mxu0
    %v1901 = vadd.f32 %v1584, %v1900
    %1902 = vmatmul.f32.gmra.mxu0 %v1444
    %v1903 = vpop.f32.mrf.mxu0
    %v1904 = vadd.f32 %v1584, %v1903
    %1905 = vmatmul.f32.gmra.mxu0 %v1446
    %v1906 = vpop.f32.mrf.mxu0
    %v1907 = vadd.f32 %v1584, %v1906
    %1908 = vmatmul.f32.gmra.mxu0 %v1448
    %v1909 = vpop.f32.mrf.mxu0
    %v1910 = vadd.f32 %v1584, %v1909
    %1911 = vmatmul.f32.gmra.mxu0 %v1450
    %v1912 = vpop.f32.mrf.mxu0
    %v1913 = vadd.f32 %v1584, %v1912
    %1914 = vdwg.mxu0
    %1915 = vmatpush.msra.mxu0 %v1578
    %1916 = vmatpush.msra.mxu0 %v1574
    %1917 = vmatpush.msra.mxu0 %v1570
    %1918 = vmatpush.msra.mxu0 %v1566
    %1919 = vmatpush.msra.mxu0 %v1562
    %1920 = vmatpush.msra.mxu0 %v1558
    %1921 = vmatpush.msra.mxu0 %v1554
    %1922 = vmatpush.msra.mxu0 %v1550
    %1923 = vmatpush.msra.mxu0 %v1546
    %1924 = vmatpush.msra.mxu0 %v1542
    %1925 = vmatpush.msra.mxu0 %v1538
    %1926 = vmatpush.msra.mxu0 %v1534
    %1927 = vmatpush.msra.mxu0 %v1530
    %1928 = vmatpush.msra.mxu0 %v1526
    %1929 = vmatpush.msra.mxu0 %v1522
    %1930 = vmatpush.msra.mxu0 %v1518
    %1931 = vmatmul.f32.gmra.mxu0 %v1421
    %v1932 = vpop.f32.mrf.mxu0
    %v1933 = vadd.f32 %v1868, %v1932
    %1934 = vmatmul.f32.gmra.mxu0 %v1423
    %v1935 = vpop.f32.mrf.mxu0
    %v1936 = vadd.f32 %v1871, %v1935
    %1937 = vmatmul.f32.gmra.mxu0 %v1425
    %v1938 = vpop.f32.mrf.mxu0
    %v1939 = vadd.f32 %v1874, %v1938
    %1940 = vmatmul.f32.gmra.mxu0 %v1427
    %v1941 = vpop.f32.mrf.mxu0
    %v1942 = vadd.f32 %v1877, %v1941
    %1943 = vmatmul.f32.gmra.mxu0 %v1429
    %v1944 = vpop.f32.mrf.mxu0
    %v1945 = vadd.f32 %v1880, %v1944
    %1946 = vmatmul.f32.gmra.mxu0 %v1431
    %v1947 = vpop.f32.mrf.mxu0
    %v1948 = vadd.f32 %v1883, %v1947
    %1949 = vmatmul.f32.gmra.mxu0 %v1433
    %v1950 = vpop.f32.mrf.mxu0
    %v1951 = vadd.f32 %v1886, %v1950
    %1952 = vmatmul.f32.gmra.mxu0 %v1435
    %v1953 = vpop.f32.mrf.mxu0
    %v1954 = vadd.f32 %v1889, %v1953
    %1955 = vmatmul.f32.gmra.mxu0 %v1437
    %v1956 = vpop.f32.mrf.mxu0
    %v1957 = vadd.f32 %v1892, %v1956
    %1958 = vmatmul.f32.gmra.mxu0 %v1439
    %v1959 = vpop.f32.mrf.mxu0
    %v1960 = vadd.f32 %v1895, %v1959
    %1961 = vmatmul.f32.gmra.mxu0 %v1441
    %v1962 = vpop.f32.mrf.mxu0
    %v1963 = vadd.f32 %v1898, %v1962
    %1964 = vmatmul.f32.gmra.mxu0 %v1443
    %v1965 = vpop.f32.mrf.mxu0
    %v1966 = vadd.f32 %v1901, %v1965
    %1967 = vmatmul.f32.gmra.mxu0 %v1445
    %v1968 = vpop.f32.mrf.mxu0
    %v1969 = vadd.f32 %v1904, %v1968
    %1970 = vmatmul.f32.gmra.mxu0 %v1447
    %v1971 = vpop.f32.mrf.mxu0
    %v1972 = vadd.f32 %v1907, %v1971
    %1973 = vmatmul.f32.gmra.mxu0 %v1449
    %v1974 = vpop.f32.mrf.mxu0
    %v1975 = vadd.f32 %v1910, %v1974
    %1976 = vmatmul.f32.gmra.mxu0 %v1451
    %v1977 = vpop.f32.mrf.mxu0
    %v1978 = vadd.f32 %v1913, %v1977
    %1979 = vdwg.mxu0
    %1980 = vmatpush.msra.mxu0 %v1515
    %1981 = vmatpush.msra.mxu0 %v1511
    %1982 = vmatpush.msra.mxu0 %v1507
    %1983 = vmatpush.msra.mxu0 %v1503
    %1984 = vmatpush.msra.mxu0 %v1499
    %1985 = vmatpush.msra.mxu0 %v1495
    %1986 = vmatpush.msra.mxu0 %v1491
    %1987 = vmatpush.msra.mxu0 %v1487
    %1988 = vmatpush.msra.mxu0 %v1483
    %1989 = vmatpush.msra.mxu0 %v1479
    %1990 = vmatpush.msra.mxu0 %v1475
    %1991 = vmatpush.msra.mxu0 %v1471
    %1992 = vmatpush.msra.mxu0 %v1467
    %1993 = vmatpush.msra.mxu0 %v1463
    %1994 = vmatpush.msra.mxu0 %v1459
    %1995 = vmatpush.msra.mxu0 %v1455
    %1996 = vmatmul.f32.gmra.mxu0 %v1420
    %v1997 = vpop.f32.mrf.mxu0
    %v1998 = vadd.f32 %v1585, %v1997
    %1999 = vmatmul.f32.gmra.mxu0 %v1422
    %v2000 = vpop.f32.mrf.mxu0
    %v2001 = vadd.f32 %v1585, %v2000
    %2002 = vmatmul.f32.gmra.mxu0 %v1424
    %v2003 = vpop.f32.mrf.mxu0
    %v2004 = vadd.f32 %v1585, %v2003
    %2005 = vmatmul.f32.gmra.mxu0 %v1426
    %v2006 = vpop.f32.mrf.mxu0
    %v2007 = vadd.f32 %v1585, %v2006
    %2008 = vmatmul.f32.gmra.mxu0 %v1428
    %v2009 = vpop.f32.mrf.mxu0
    %v2010 = vadd.f32 %v1585, %v2009
    %2011 = vmatmul.f32.gmra.mxu0 %v1430
    %v2012 = vpop.f32.mrf.mxu0
    %v2013 = vadd.f32 %v1585, %v2012
    %2014 = vmatmul.f32.gmra.mxu0 %v1432
    %v2015 = vpop.f32.mrf.mxu0
    %v2016 = vadd.f32 %v1585, %v2015
    %2017 = vmatmul.f32.gmra.mxu0 %v1434
    %v2018 = vpop.f32.mrf.mxu0
    %v2019 = vadd.f32 %v1585, %v2018
    %2020 = vmatmul.f32.gmra.mxu0 %v1436
    %v2021 = vpop.f32.mrf.mxu0
    %v2022 = vadd.f32 %v1585, %v2021
    %2023 = vmatmul.f32.gmra.mxu0 %v1438
    %v2024 = vpop.f32.mrf.mxu0
    %v2025 = vadd.f32 %v1585, %v2024
    %2026 = vmatmul.f32.gmra.mxu0 %v1440
    %v2027 = vpop.f32.mrf.mxu0
    %v2028 = vadd.f32 %v1585, %v2027
    %2029 = vmatmul.f32.gmra.mxu0 %v1442
    %v2030 = vpop.f32.mrf.mxu0
    %v2031 = vadd.f32 %v1585, %v2030
    %2032 = vmatmul.f32.gmra.mxu0 %v1444
    %v2033 = vpop.f32.mrf.mxu0
    %v2034 = vadd.f32 %v1585, %v2033
    %2035 = vmatmul.f32.gmra.mxu0 %v1446
    %v2036 = vpop.f32.mrf.mxu0
    %v2037 = vadd.f32 %v1585, %v2036
    %2038 = vmatmul.f32.gmra.mxu0 %v1448
    %v2039 = vpop.f32.mrf.mxu0
    %v2040 = vadd.f32 %v1585, %v2039
    %2041 = vmatmul.f32.gmra.mxu0 %v1450
    %v2042 = vpop.f32.mrf.mxu0
    %v2043 = vadd.f32 %v1585, %v2042
    %2044 = vdwg.mxu0
    %2045 = vmatpush.msra.mxu0 %v1579
    %2046 = vmatpush.msra.mxu0 %v1575
    %2047 = vmatpush.msra.mxu0 %v1571
    %2048 = vmatpush.msra.mxu0 %v1567
    %2049 = vmatpush.msra.mxu0 %v1563
    %2050 = vmatpush.msra.mxu0 %v1559
    %2051 = vmatpush.msra.mxu0 %v1555
    %2052 = vmatpush.msra.mxu0 %v1551
    %2053 = vmatpush.msra.mxu0 %v1547
    %2054 = vmatpush.msra.mxu0 %v1543
    %2055 = vmatpush.msra.mxu0 %v1539
    %2056 = vmatpush.msra.mxu0 %v1535
    %2057 = vmatpush.msra.mxu0 %v1531
    %2058 = vmatpush.msra.mxu0 %v1527
    %2059 = vmatpush.msra.mxu0 %v1523
    %2060 = vmatpush.msra.mxu0 %v1519
    %2061 = vmatmul.f32.gmra.mxu0 %v1421
    %v2062 = vpop.f32.mrf.mxu0
    %v2063 = vadd.f32 %v1998, %v2062
    %2064 = vmatmul.f32.gmra.mxu0 %v1423
    %v2065 = vpop.f32.mrf.mxu0
    %v2066 = vadd.f32 %v2001, %v2065
    %2067 = vmatmul.f32.gmra.mxu0 %v1425
    %v2068 = vpop.f32.mrf.mxu0
    %v2069 = vadd.f32 %v2004, %v2068
    %2070 = vmatmul.f32.gmra.mxu0 %v1427
    %v2071 = vpop.f32.mrf.mxu0
    %v2072 = vadd.f32 %v2007, %v2071
    %2073 = vmatmul.f32.gmra.mxu0 %v1429
    %v2074 = vpop.f32.mrf.mxu0
    %v2075 = vadd.f32 %v2010, %v2074
    %2076 = vmatmul.f32.gmra.mxu0 %v1431
    %v2077 = vpop.f32.mrf.mxu0
    %v2078 = vadd.f32 %v2013, %v2077
    %2079 = vmatmul.f32.gmra.mxu0 %v1433
    %v2080 = vpop.f32.mrf.mxu0
    %v2081 = vadd.f32 %v2016, %v2080
    %2082 = vmatmul.f32.gmra.mxu0 %v1435
    %v2083 = vpop.f32.mrf.mxu0
    %v2084 = vadd.f32 %v2019, %v2083
    %2085 = vmatmul.f32.gmra.mxu0 %v1437
    %v2086 = vpop.f32.mrf.mxu0
    %v2087 = vadd.f32 %v2022, %v2086
    %2088 = vmatmul.f32.gmra.mxu0 %v1439
    %v2089 = vpop.f32.mrf.mxu0
    %v2090 = vadd.f32 %v2025, %v2089
    %2091 = vmatmul.f32.gmra.mxu0 %v1441
    %v2092 = vpop.f32.mrf.mxu0
    %v2093 = vadd.f32 %v2028, %v2092
    %2094 = vmatmul.f32.gmra.mxu0 %v1443
    %v2095 = vpop.f32.mrf.mxu0
    %v2096 = vadd.f32 %v2031, %v2095
    %2097 = vmatmul.f32.gmra.mxu0 %v1445
    %v2098 = vpop.f32.mrf.mxu0
    %v2099 = vadd.f32 %v2034, %v2098
    %2100 = vmatmul.f32.gmra.mxu0 %v1447
    %v2101 = vpop.f32.mrf.mxu0
    %v2102 = vadd.f32 %v2037, %v2101
    %2103 = vmatmul.f32.gmra.mxu0 %v1449
    %v2104 = vpop.f32.mrf.mxu0
    %v2105 = vadd.f32 %v2040, %v2104
    %2106 = vmatmul.f32.gmra.mxu0 %v1451
    %v2107 = vpop.f32.mrf.mxu0
    %v2108 = vadd.f32 %v2043, %v2107
    %2109 = vdwg.mxu0
    %v2110 = vxor.u32 %v1673, 2147483648
    %v2111 = vxor.u32 %v1803, 2147483648
    %v2112 = vxor.u32 %v1933, 2147483648
    %v2113 = vxor.u32 %v2063, 2147483648
    %v2114 = vxor.u32 %v1676, 2147483648
    %v2115 = vxor.u32 %v1806, 2147483648
    %v2116 = vxor.u32 %v1936, 2147483648
    %v2117 = vxor.u32 %v2066, 2147483648
    %v2118 = vxor.u32 %v1679, 2147483648
    %v2119 = vxor.u32 %v1809, 2147483648
    %v2120 = vxor.u32 %v1939, 2147483648
    %v2121 = vxor.u32 %v2069, 2147483648
    %v2122 = vxor.u32 %v1682, 2147483648
    %v2123 = vxor.u32 %v1812, 2147483648
    %v2124 = vxor.u32 %v1942, 2147483648
    %v2125 = vxor.u32 %v2072, 2147483648
    %v2126 = vxor.u32 %v1685, 2147483648
    %v2127 = vxor.u32 %v1815, 2147483648
    %v2128 = vxor.u32 %v1945, 2147483648
    %v2129 = vxor.u32 %v2075, 2147483648
    %v2130 = vxor.u32 %v1688, 2147483648
    %v2131 = vxor.u32 %v1818, 2147483648
    %v2132 = vxor.u32 %v1948, 2147483648
    %v2133 = vxor.u32 %v2078, 2147483648
    %v2134 = vxor.u32 %v1691, 2147483648
    %v2135 = vxor.u32 %v1821, 2147483648
    %v2136 = vxor.u32 %v1951, 2147483648
    %v2137 = vxor.u32 %v2081, 2147483648
    %v2138 = vxor.u32 %v1694, 2147483648
    %v2139 = vxor.u32 %v1824, 2147483648
    %v2140 = vxor.u32 %v1954, 2147483648
    %v2141 = vxor.u32 %v2084, 2147483648
    %v2142 = vxor.u32 %v1697, 2147483648
    %v2143 = vxor.u32 %v1827, 2147483648
    %v2144 = vxor.u32 %v1957, 2147483648
    %v2145 = vxor.u32 %v2087, 2147483648
    %v2146 = vxor.u32 %v1700, 2147483648
    %v2147 = vxor.u32 %v1830, 2147483648
    %v2148 = vxor.u32 %v1960, 2147483648
    %v2149 = vxor.u32 %v2090, 2147483648
    %v2150 = vxor.u32 %v1703, 2147483648
    %v2151 = vxor.u32 %v1833, 2147483648
    %v2152 = vxor.u32 %v1963, 2147483648
    %v2153 = vxor.u32 %v2093, 2147483648
    %v2154 = vxor.u32 %v1706, 2147483648
    %v2155 = vxor.u32 %v1836, 2147483648
    %v2156 = vxor.u32 %v1966, 2147483648
    %v2157 = vxor.u32 %v2096, 2147483648
    %v2158 = vxor.u32 %v1709, 2147483648
    %v2159 = vxor.u32 %v1839, 2147483648
    %v2160 = vxor.u32 %v1969, 2147483648
    %v2161 = vxor.u32 %v2099, 2147483648
    %v2162 = vxor.u32 %v1712, 2147483648
    %v2163 = vxor.u32 %v1842, 2147483648
    %v2164 = vxor.u32 %v1972, 2147483648
    %v2165 = vxor.u32 %v2102, 2147483648
    %v2166 = vxor.u32 %v1715, 2147483648
    %v2167 = vxor.u32 %v1845, 2147483648
    %v2168 = vxor.u32 %v1975, 2147483648
    %v2169 = vxor.u32 %v2105, 2147483648
    %v2170 = vxor.u32 %v1718, 2147483648
    %v2171 = vxor.u32 %v1848, 2147483648
    %v2172 = vxor.u32 %v1978, 2147483648
    %v2173 = vxor.u32 %v2108, 2147483648
    %v2174 = vmul.f32 %v2110, 1.442695
    %v2175 = vpow.pop %v2174
    %v2176 = vmul.f32 %v2111, 1.442695
    %v2177 = vpow.pop %v2176
    %v2178 = vmul.f32 %v2112, 1.442695
    %v2179 = vpow.pop %v2178
    %v2180 = vmul.f32 %v2113, 1.442695
    %v2181 = vpow.pop %v2180
    %v2182 = vmul.f32 %v2114, 1.442695
    %v2183 = vpow.pop %v2182
    %v2184 = vmul.f32 %v2115, 1.442695
    %v2185 = vpow.pop %v2184
    %v2186 = vmul.f32 %v2116, 1.442695
    %v2187 = vpow.pop %v2186
    %v2188 = vmul.f32 %v2117, 1.442695
    %v2189 = vpow.pop %v2188
    %v2190 = vmul.f32 %v2118, 1.442695
    %v2191 = vpow.pop %v2190
    %v2192 = vmul.f32 %v2119, 1.442695
    %v2193 = vpow.pop %v2192
    %v2194 = vmul.f32 %v2120, 1.442695
    %v2195 = vpow.pop %v2194
    %v2196 = vmul.f32 %v2121, 1.442695
    %v2197 = vpow.pop %v2196
    %v2198 = vmul.f32 %v2122, 1.442695
    %v2199 = vpow.pop %v2198
    %v2200 = vmul.f32 %v2123, 1.442695
    %v2201 = vpow.pop %v2200
    %v2202 = vmul.f32 %v2124, 1.442695
    %v2203 = vpow.pop %v2202
    %v2204 = vmul.f32 %v2125, 1.442695
    %v2205 = vpow.pop %v2204
    %v2206 = vmul.f32 %v2126, 1.442695
    %v2207 = vpow.pop %v2206
    %v2208 = vmul.f32 %v2127, 1.442695
    %v2209 = vpow.pop %v2208
    %v2210 = vmul.f32 %v2128, 1.442695
    %v2211 = vpow.pop %v2210
    %v2212 = vmul.f32 %v2129, 1.442695
    %v2213 = vpow.pop %v2212
    %v2214 = vmul.f32 %v2130, 1.442695
    %v2215 = vpow.pop %v2214
    %v2216 = vmul.f32 %v2131, 1.442695
    %v2217 = vpow.pop %v2216
    %v2218 = vmul.f32 %v2132, 1.442695
    %v2219 = vpow.pop %v2218
    %v2220 = vmul.f32 %v2133, 1.442695
    %v2221 = vpow.pop %v2220
    %v2222 = vmul.f32 %v2134, 1.442695
    %v2223 = vpow.pop %v2222
    %v2224 = vmul.f32 %v2135, 1.442695
    %v2225 = vpow.pop %v2224
    %v2226 = vmul.f32 %v2136, 1.442695
    %v2227 = vpow.pop %v2226
    %v2228 = vmul.f32 %v2137, 1.442695
    %v2229 = vpow.pop %v2228
    %v2230 = vmul.f32 %v2138, 1.442695
    %v2231 = vpow.pop %v2230
    %v2232 = vmul.f32 %v2139, 1.442695
    %v2233 = vpow.pop %v2232
    %v2234 = vmul.f32 %v2140, 1.442695
    %v2235 = vpow.pop %v2234
    %v2236 = vmul.f32 %v2141, 1.442695
    %v2237 = vpow.pop %v2236
    %v2238 = vmul.f32 %v2142, 1.442695
    %v2239 = vpow.pop %v2238
    %v2240 = vmul.f32 %v2143, 1.442695
    %v2241 = vpow.pop %v2240
    %v2242 = vmul.f32 %v2144, 1.442695
    %v2243 = vpow.pop %v2242
    %v2244 = vmul.f32 %v2145, 1.442695
    %v2245 = vpow.pop %v2244
    %v2246 = vmul.f32 %v2146, 1.442695
    %v2247 = vpow.pop %v2246
    %v2248 = vmul.f32 %v2147, 1.442695
    %v2249 = vpow.pop %v2248
    %v2250 = vmul.f32 %v2148, 1.442695
    %v2251 = vpow.pop %v2250
    %v2252 = vmul.f32 %v2149, 1.442695
    %v2253 = vpow.pop %v2252
    %v2254 = vmul.f32 %v2150, 1.442695
    %v2255 = vpow.pop %v2254
    %v2256 = vmul.f32 %v2151, 1.442695
    %v2257 = vpow.pop %v2256
    %v2258 = vmul.f32 %v2152, 1.442695
    %v2259 = vpow.pop %v2258
    %v2260 = vmul.f32 %v2153, 1.442695
    %v2261 = vpow.pop %v2260
    %v2262 = vmul.f32 %v2154, 1.442695
    %v2263 = vpow.pop %v2262
    %v2264 = vmul.f32 %v2155, 1.442695
    %v2265 = vpow.pop %v2264
    %v2266 = vmul.f32 %v2156, 1.442695
    %v2267 = vpow.pop %v2266
    %v2268 = vmul.f32 %v2157, 1.442695
    %v2269 = vpow.pop %v2268
    %v2270 = vmul.f32 %v2158, 1.442695
    %v2271 = vpow.pop %v2270
    %v2272 = vmul.f32 %v2159, 1.442695
    %v2273 = vpow.pop %v2272
    %v2274 = vmul.f32 %v2160, 1.442695
    %v2275 = vpow.pop %v2274
    %v2276 = vmul.f32 %v2161, 1.442695
    %v2277 = vpow.pop %v2276
    %v2278 = vmul.f32 %v2162, 1.442695
    %v2279 = vpow.pop %v2278
    %v2280 = vmul.f32 %v2163, 1.442695
    %v2281 = vpow.pop %v2280
    %v2282 = vmul.f32 %v2164, 1.442695
    %v2283 = vpow.pop %v2282
    %v2284 = vmul.f32 %v2165, 1.442695
    %v2285 = vpow.pop %v2284
    %v2286 = vmul.f32 %v2166, 1.442695
    %v2287 = vpow.pop %v2286
    %v2288 = vmul.f32 %v2167, 1.442695
    %v2289 = vpow.pop %v2288
    %v2290 = vmul.f32 %v2168, 1.442695
    %v2291 = vpow.pop %v2290
    %v2292 = vmul.f32 %v2169, 1.442695
    %v2293 = vpow.pop %v2292
    %v2294 = vmul.f32 %v2170, 1.442695
    %v2295 = vpow.pop %v2294
    %v2296 = vmul.f32 %v2171, 1.442695
    %v2297 = vpow.pop %v2296
    %v2298 = vmul.f32 %v2172, 1.442695
    %v2299 = vpow.pop %v2298
    %v2300 = vmul.f32 %v2173, 1.442695
    %v2301 = vpow.pop %v2300
    %v2302 = vadd.f32 %v2175, 1.0
    %v2303 = vadd.f32 %v2177, 1.0
    %v2304 = vadd.f32 %v2179, 1.0
    %v2305 = vadd.f32 %v2181, 1.0
    %v2306 = vadd.f32 %v2183, 1.0
    %v2307 = vadd.f32 %v2185, 1.0
    %v2308 = vadd.f32 %v2187, 1.0
    %v2309 = vadd.f32 %v2189, 1.0
    %v2310 = vadd.f32 %v2191, 1.0
    %v2311 = vadd.f32 %v2193, 1.0
    %v2312 = vadd.f32 %v2195, 1.0
    %v2313 = vadd.f32 %v2197, 1.0
    %v2314 = vadd.f32 %v2199, 1.0
    %v2315 = vadd.f32 %v2201, 1.0
    %v2316 = vadd.f32 %v2203, 1.0
    %v2317 = vadd.f32 %v2205, 1.0
    %v2318 = vadd.f32 %v2207, 1.0
    %v2319 = vadd.f32 %v2209, 1.0
    %v2320 = vadd.f32 %v2211, 1.0
    %v2321 = vadd.f32 %v2213, 1.0
    %v2322 = vadd.f32 %v2215, 1.0
    %v2323 = vadd.f32 %v2217, 1.0
    %v2324 = vadd.f32 %v2219, 1.0
    %v2325 = vadd.f32 %v2221, 1.0
    %v2326 = vadd.f32 %v2223, 1.0
    %v2327 = vadd.f32 %v2225, 1.0
    %v2328 = vadd.f32 %v2227, 1.0
    %v2329 = vadd.f32 %v2229, 1.0
    %v2330 = vadd.f32 %v2231, 1.0
    %v2331 = vadd.f32 %v2233, 1.0
    %v2332 = vadd.f32 %v2235, 1.0
    %v2333 = vadd.f32 %v2237, 1.0
    %v2334 = vadd.f32 %v2239, 1.0
    %v2335 = vadd.f32 %v2241, 1.0
    %v2336 = vadd.f32 %v2243, 1.0
    %v2337 = vadd.f32 %v2245, 1.0
    %v2338 = vadd.f32 %v2247, 1.0
    %v2339 = vadd.f32 %v2249, 1.0
    %v2340 = vadd.f32 %v2251, 1.0
    %v2341 = vadd.f32 %v2253, 1.0
    %v2342 = vadd.f32 %v2255, 1.0
    %v2343 = vadd.f32 %v2257, 1.0
    %v2344 = vadd.f32 %v2259, 1.0
    %v2345 = vadd.f32 %v2261, 1.0
    %v2346 = vadd.f32 %v2263, 1.0
    %v2347 = vadd.f32 %v2265, 1.0
    %v2348 = vadd.f32 %v2267, 1.0
    %v2349 = vadd.f32 %v2269, 1.0
    %v2350 = vadd.f32 %v2271, 1.0
    %v2351 = vadd.f32 %v2273, 1.0
    %v2352 = vadd.f32 %v2275, 1.0
    %v2353 = vadd.f32 %v2277, 1.0
    %v2354 = vadd.f32 %v2279, 1.0
    %v2355 = vadd.f32 %v2281, 1.0
    %v2356 = vadd.f32 %v2283, 1.0
    %v2357 = vadd.f32 %v2285, 1.0
    %v2358 = vadd.f32 %v2287, 1.0
    %v2359 = vadd.f32 %v2289, 1.0
    %v2360 = vadd.f32 %v2291, 1.0
    %v2361 = vadd.f32 %v2293, 1.0
    %v2362 = vadd.f32 %v2295, 1.0
    %v2363 = vadd.f32 %v2297, 1.0
    %v2364 = vadd.f32 %v2299, 1.0
    %v2365 = vadd.f32 %v2301, 1.0
    %v2366 = vrcp.pop %v2302
    %v2367 = vmul.f32 %v2302, %v2366
    %v2368 = vsub.f32 1.0, %v2367
    %v2369 = vmul.f32 %v2366, %v2368
    %v2370 = vadd.f32 %v2366, %v2369
    %vm2371 = vweird.f32 %v2302
    %vm2372 = vweird.f32 %v2366
    %vm2373 = vmor %vm2371, %vm2372
    %v2374 = vsel %vm2373, %v2366, %v2370
    %v2375 = vand.u32 2147483647, %v2302
    %vm2376 = vcmp.eq.f32.partialorder %v2375, 8.507059e+37
    %v2377 = vand.u32 %v2302, 2147483648
    %v2378 = vor.u32 1.1754944e-38, %v2377
    %v2379 = vsel %vm2376, %v2378, %v2374
    %v2380 = vmul.f32 1.0, %v2379
    %v2381 = vrcp.pop %v2303
    %v2382 = vmul.f32 %v2303, %v2381
    %v2383 = vsub.f32 1.0, %v2382
    %v2384 = vmul.f32 %v2381, %v2383
    %v2385 = vadd.f32 %v2381, %v2384
    %vm2386 = vweird.f32 %v2303
    %vm2387 = vweird.f32 %v2381
    %vm2388 = vmor %vm2386, %vm2387
    %v2389 = vsel %vm2388, %v2381, %v2385
    %v2390 = vand.u32 2147483647, %v2303
    %vm2391 = vcmp.eq.f32.partialorder %v2390, 8.507059e+37
    %v2392 = vand.u32 %v2303, 2147483648
    %v2393 = vor.u32 1.1754944e-38, %v2392
    %v2394 = vsel %vm2391, %v2393, %v2389
    %v2395 = vmul.f32 1.0, %v2394
    %v2396 = vrcp.pop %v2304
    %v2397 = vmul.f32 %v2304, %v2396
    %v2398 = vsub.f32 1.0, %v2397
    %v2399 = vmul.f32 %v2396, %v2398
    %v2400 = vadd.f32 %v2396, %v2399
    %vm2401 = vweird.f32 %v2304
    %vm2402 = vweird.f32 %v2396
    %vm2403 = vmor %vm2401, %vm2402
    %v2404 = vsel %vm2403, %v2396, %v2400
    %v2405 = vand.u32 2147483647, %v2304
    %vm2406 = vcmp.eq.f32.partialorder %v2405, 8.507059e+37
    %v2407 = vand.u32 %v2304, 2147483648
    %v2408 = vor.u32 1.1754944e-38, %v2407
    %v2409 = vsel %vm2406, %v2408, %v2404
    %v2410 = vmul.f32 1.0, %v2409
    %v2411 = vrcp.pop %v2305
    %v2412 = vmul.f32 %v2305, %v2411
    %v2413 = vsub.f32 1.0, %v2412
    %v2414 = vmul.f32 %v2411, %v2413
    %v2415 = vadd.f32 %v2411, %v2414
    %vm2416 = vweird.f32 %v2305
    %vm2417 = vweird.f32 %v2411
    %vm2418 = vmor %vm2416, %vm2417
    %v2419 = vsel %vm2418, %v2411, %v2415
    %v2420 = vand.u32 2147483647, %v2305
    %vm2421 = vcmp.eq.f32.partialorder %v2420, 8.507059e+37
    %v2422 = vand.u32 %v2305, 2147483648
    %v2423 = vor.u32 1.1754944e-38, %v2422
    %v2424 = vsel %vm2421, %v2423, %v2419
    %v2425 = vmul.f32 1.0, %v2424
    %v2426 = vrcp.pop %v2306
    %v2427 = vmul.f32 %v2306, %v2426
    %v2428 = vsub.f32 1.0, %v2427
    %v2429 = vmul.f32 %v2426, %v2428
    %v2430 = vadd.f32 %v2426, %v2429
    %vm2431 = vweird.f32 %v2306
    %vm2432 = vweird.f32 %v2426
    %vm2433 = vmor %vm2431, %vm2432
    %v2434 = vsel %vm2433, %v2426, %v2430
    %v2435 = vand.u32 2147483647, %v2306
    %vm2436 = vcmp.eq.f32.partialorder %v2435, 8.507059e+37
    %v2437 = vand.u32 %v2306, 2147483648
    %v2438 = vor.u32 1.1754944e-38, %v2437
    %v2439 = vsel %vm2436, %v2438, %v2434
    %v2440 = vmul.f32 1.0, %v2439
    %v2441 = vrcp.pop %v2307
    %v2442 = vmul.f32 %v2307, %v2441
    %v2443 = vsub.f32 1.0, %v2442
    %v2444 = vmul.f32 %v2441, %v2443
    %v2445 = vadd.f32 %v2441, %v2444
    %vm2446 = vweird.f32 %v2307
    %vm2447 = vweird.f32 %v2441
    %vm2448 = vmor %vm2446, %vm2447
    %v2449 = vsel %vm2448, %v2441, %v2445
    %v2450 = vand.u32 2147483647, %v2307
    %vm2451 = vcmp.eq.f32.partialorder %v2450, 8.507059e+37
    %v2452 = vand.u32 %v2307, 2147483648
    %v2453 = vor.u32 1.1754944e-38, %v2452
    %v2454 = vsel %vm2451, %v2453, %v2449
    %v2455 = vmul.f32 1.0, %v2454
    %v2456 = vrcp.pop %v2308
    %v2457 = vmul.f32 %v2308, %v2456
    %v2458 = vsub.f32 1.0, %v2457
    %v2459 = vmul.f32 %v2456, %v2458
    %v2460 = vadd.f32 %v2456, %v2459
    %vm2461 = vweird.f32 %v2308
    %vm2462 = vweird.f32 %v2456
    %vm2463 = vmor %vm2461, %vm2462
    %v2464 = vsel %vm2463, %v2456, %v2460
    %v2465 = vand.u32 2147483647, %v2308
    %vm2466 = vcmp.eq.f32.partialorder %v2465, 8.507059e+37
    %v2467 = vand.u32 %v2308, 2147483648
    %v2468 = vor.u32 1.1754944e-38, %v2467
    %v2469 = vsel %vm2466, %v2468, %v2464
    %v2470 = vmul.f32 1.0, %v2469
    %v2471 = vrcp.pop %v2309
    %v2472 = vmul.f32 %v2309, %v2471
    %v2473 = vsub.f32 1.0, %v2472
    %v2474 = vmul.f32 %v2471, %v2473
    %v2475 = vadd.f32 %v2471, %v2474
    %vm2476 = vweird.f32 %v2309
    %vm2477 = vweird.f32 %v2471
    %vm2478 = vmor %vm2476, %vm2477
    %v2479 = vsel %vm2478, %v2471, %v2475
    %v2480 = vand.u32 2147483647, %v2309
    %vm2481 = vcmp.eq.f32.partialorder %v2480, 8.507059e+37
    %v2482 = vand.u32 %v2309, 2147483648
    %v2483 = vor.u32 1.1754944e-38, %v2482
    %v2484 = vsel %vm2481, %v2483, %v2479
    %v2485 = vmul.f32 1.0, %v2484
    %v2486 = vrcp.pop %v2310
    %v2487 = vmul.f32 %v2310, %v2486
    %v2488 = vsub.f32 1.0, %v2487
    %v2489 = vmul.f32 %v2486, %v2488
    %v2490 = vadd.f32 %v2486, %v2489
    %vm2491 = vweird.f32 %v2310
    %vm2492 = vweird.f32 %v2486
    %vm2493 = vmor %vm2491, %vm2492
    %v2494 = vsel %vm2493, %v2486, %v2490
    %v2495 = vand.u32 2147483647, %v2310
    %vm2496 = vcmp.eq.f32.partialorder %v2495, 8.507059e+37
    %v2497 = vand.u32 %v2310, 2147483648
    %v2498 = vor.u32 1.1754944e-38, %v2497
    %v2499 = vsel %vm2496, %v2498, %v2494
    %v2500 = vmul.f32 1.0, %v2499
    %v2501 = vrcp.pop %v2311
    %v2502 = vmul.f32 %v2311, %v2501
    %v2503 = vsub.f32 1.0, %v2502
    %v2504 = vmul.f32 %v2501, %v2503
    %v2505 = vadd.f32 %v2501, %v2504
    %vm2506 = vweird.f32 %v2311
    %vm2507 = vweird.f32 %v2501
    %vm2508 = vmor %vm2506, %vm2507
    %v2509 = vsel %vm2508, %v2501, %v2505
    %v2510 = vand.u32 2147483647, %v2311
    %vm2511 = vcmp.eq.f32.partialorder %v2510, 8.507059e+37
    %v2512 = vand.u32 %v2311, 2147483648
    %v2513 = vor.u32 1.1754944e-38, %v2512
    %v2514 = vsel %vm2511, %v2513, %v2509
    %v2515 = vmul.f32 1.0, %v2514
    %v2516 = vrcp.pop %v2312
    %v2517 = vmul.f32 %v2312, %v2516
    %v2518 = vsub.f32 1.0, %v2517
    %v2519 = vmul.f32 %v2516, %v2518
    %v2520 = vadd.f32 %v2516, %v2519
    %vm2521 = vweird.f32 %v2312
    %vm2522 = vweird.f32 %v2516
    %vm2523 = vmor %vm2521, %vm2522
    %v2524 = vsel %vm2523, %v2516, %v2520
    %v2525 = vand.u32 2147483647, %v2312
    %vm2526 = vcmp.eq.f32.partialorder %v2525, 8.507059e+37
    %v2527 = vand.u32 %v2312, 2147483648
    %v2528 = vor.u32 1.1754944e-38, %v2527
    %v2529 = vsel %vm2526, %v2528, %v2524
    %v2530 = vmul.f32 1.0, %v2529
    %v2531 = vrcp.pop %v2313
    %v2532 = vmul.f32 %v2313, %v2531
    %v2533 = vsub.f32 1.0, %v2532
    %v2534 = vmul.f32 %v2531, %v2533
    %v2535 = vadd.f32 %v2531, %v2534
    %vm2536 = vweird.f32 %v2313
    %vm2537 = vweird.f32 %v2531
    %vm2538 = vmor %vm2536, %vm2537
    %v2539 = vsel %vm2538, %v2531, %v2535
    %v2540 = vand.u32 2147483647, %v2313
    %vm2541 = vcmp.eq.f32.partialorder %v2540, 8.507059e+37
    %v2542 = vand.u32 %v2313, 2147483648
    %v2543 = vor.u32 1.1754944e-38, %v2542
    %v2544 = vsel %vm2541, %v2543, %v2539
    %v2545 = vmul.f32 1.0, %v2544
    %v2546 = vrcp.pop %v2314
    %v2547 = vmul.f32 %v2314, %v2546
    %v2548 = vsub.f32 1.0, %v2547
    %v2549 = vmul.f32 %v2546, %v2548
    %v2550 = vadd.f32 %v2546, %v2549
    %vm2551 = vweird.f32 %v2314
    %vm2552 = vweird.f32 %v2546
    %vm2553 = vmor %vm2551, %vm2552
    %v2554 = vsel %vm2553, %v2546, %v2550
    %v2555 = vand.u32 2147483647, %v2314
    %vm2556 = vcmp.eq.f32.partialorder %v2555, 8.507059e+37
    %v2557 = vand.u32 %v2314, 2147483648
    %v2558 = vor.u32 1.1754944e-38, %v2557
    %v2559 = vsel %vm2556, %v2558, %v2554
    %v2560 = vmul.f32 1.0, %v2559
    %v2561 = vrcp.pop %v2315
    %v2562 = vmul.f32 %v2315, %v2561
    %v2563 = vsub.f32 1.0, %v2562
    %v2564 = vmul.f32 %v2561, %v2563
    %v2565 = vadd.f32 %v2561, %v2564
    %vm2566 = vweird.f32 %v2315
    %vm2567 = vweird.f32 %v2561
    %vm2568 = vmor %vm2566, %vm2567
    %v2569 = vsel %vm2568, %v2561, %v2565
    %v2570 = vand.u32 2147483647, %v2315
    %vm2571 = vcmp.eq.f32.partialorder %v2570, 8.507059e+37
    %v2572 = vand.u32 %v2315, 2147483648
    %v2573 = vor.u32 1.1754944e-38, %v2572
    %v2574 = vsel %vm2571, %v2573, %v2569
    %v2575 = vmul.f32 1.0, %v2574
    %v2576 = vrcp.pop %v2316
    %v2577 = vmul.f32 %v2316, %v2576
    %v2578 = vsub.f32 1.0, %v2577
    %v2579 = vmul.f32 %v2576, %v2578
    %v2580 = vadd.f32 %v2576, %v2579
    %vm2581 = vweird.f32 %v2316
    %vm2582 = vweird.f32 %v2576
    %vm2583 = vmor %vm2581, %vm2582
    %v2584 = vsel %vm2583, %v2576, %v2580
    %v2585 = vand.u32 2147483647, %v2316
    %vm2586 = vcmp.eq.f32.partialorder %v2585, 8.507059e+37
    %v2587 = vand.u32 %v2316, 2147483648
    %v2588 = vor.u32 1.1754944e-38, %v2587
    %v2589 = vsel %vm2586, %v2588, %v2584
    %v2590 = vmul.f32 1.0, %v2589
    %v2591 = vrcp.pop %v2317
    %v2592 = vmul.f32 %v2317, %v2591
    %v2593 = vsub.f32 1.0, %v2592
    %v2594 = vmul.f32 %v2591, %v2593
    %v2595 = vadd.f32 %v2591, %v2594
    %vm2596 = vweird.f32 %v2317
    %vm2597 = vweird.f32 %v2591
    %vm2598 = vmor %vm2596, %vm2597
    %v2599 = vsel %vm2598, %v2591, %v2595
    %v2600 = vand.u32 2147483647, %v2317
    %vm2601 = vcmp.eq.f32.partialorder %v2600, 8.507059e+37
    %v2602 = vand.u32 %v2317, 2147483648
    %v2603 = vor.u32 1.1754944e-38, %v2602
    %v2604 = vsel %vm2601, %v2603, %v2599
    %v2605 = vmul.f32 1.0, %v2604
    %v2606 = vrcp.pop %v2318
    %v2607 = vmul.f32 %v2318, %v2606
    %v2608 = vsub.f32 1.0, %v2607
    %v2609 = vmul.f32 %v2606, %v2608
    %v2610 = vadd.f32 %v2606, %v2609
    %vm2611 = vweird.f32 %v2318
    %vm2612 = vweird.f32 %v2606
    %vm2613 = vmor %vm2611, %vm2612
    %v2614 = vsel %vm2613, %v2606, %v2610
    %v2615 = vand.u32 2147483647, %v2318
    %vm2616 = vcmp.eq.f32.partialorder %v2615, 8.507059e+37
    %v2617 = vand.u32 %v2318, 2147483648
    %v2618 = vor.u32 1.1754944e-38, %v2617
    %v2619 = vsel %vm2616, %v2618, %v2614
    %v2620 = vmul.f32 1.0, %v2619
    %v2621 = vrcp.pop %v2319
    %v2622 = vmul.f32 %v2319, %v2621
    %v2623 = vsub.f32 1.0, %v2622
    %v2624 = vmul.f32 %v2621, %v2623
    %v2625 = vadd.f32 %v2621, %v2624
    %vm2626 = vweird.f32 %v2319
    %vm2627 = vweird.f32 %v2621
    %vm2628 = vmor %vm2626, %vm2627
    %v2629 = vsel %vm2628, %v2621, %v2625
    %v2630 = vand.u32 2147483647, %v2319
    %vm2631 = vcmp.eq.f32.partialorder %v2630, 8.507059e+37
    %v2632 = vand.u32 %v2319, 2147483648
    %v2633 = vor.u32 1.1754944e-38, %v2632
    %v2634 = vsel %vm2631, %v2633, %v2629
    %v2635 = vmul.f32 1.0, %v2634
    %v2636 = vrcp.pop %v2320
    %v2637 = vmul.f32 %v2320, %v2636
    %v2638 = vsub.f32 1.0, %v2637
    %v2639 = vmul.f32 %v2636, %v2638
    %v2640 = vadd.f32 %v2636, %v2639
    %vm2641 = vweird.f32 %v2320
    %vm2642 = vweird.f32 %v2636
    %vm2643 = vmor %vm2641, %vm2642
    %v2644 = vsel %vm2643, %v2636, %v2640
    %v2645 = vand.u32 2147483647, %v2320
    %vm2646 = vcmp.eq.f32.partialorder %v2645, 8.507059e+37
    %v2647 = vand.u32 %v2320, 2147483648
    %v2648 = vor.u32 1.1754944e-38, %v2647
    %v2649 = vsel %vm2646, %v2648, %v2644
    %v2650 = vmul.f32 1.0, %v2649
    %v2651 = vrcp.pop %v2321
    %v2652 = vmul.f32 %v2321, %v2651
    %v2653 = vsub.f32 1.0, %v2652
    %v2654 = vmul.f32 %v2651, %v2653
    %v2655 = vadd.f32 %v2651, %v2654
    %vm2656 = vweird.f32 %v2321
    %vm2657 = vweird.f32 %v2651
    %vm2658 = vmor %vm2656, %vm2657
    %v2659 = vsel %vm2658, %v2651, %v2655
    %v2660 = vand.u32 2147483647, %v2321
    %vm2661 = vcmp.eq.f32.partialorder %v2660, 8.507059e+37
    %v2662 = vand.u32 %v2321, 2147483648
    %v2663 = vor.u32 1.1754944e-38, %v2662
    %v2664 = vsel %vm2661, %v2663, %v2659
    %v2665 = vmul.f32 1.0, %v2664
    %v2666 = vrcp.pop %v2322
    %v2667 = vmul.f32 %v2322, %v2666
    %v2668 = vsub.f32 1.0, %v2667
    %v2669 = vmul.f32 %v2666, %v2668
    %v2670 = vadd.f32 %v2666, %v2669
    %vm2671 = vweird.f32 %v2322
    %vm2672 = vweird.f32 %v2666
    %vm2673 = vmor %vm2671, %vm2672
    %v2674 = vsel %vm2673, %v2666, %v2670
    %v2675 = vand.u32 2147483647, %v2322
    %vm2676 = vcmp.eq.f32.partialorder %v2675, 8.507059e+37
    %v2677 = vand.u32 %v2322, 2147483648
    %v2678 = vor.u32 1.1754944e-38, %v2677
    %v2679 = vsel %vm2676, %v2678, %v2674
    %v2680 = vmul.f32 1.0, %v2679
    %v2681 = vrcp.pop %v2323
    %v2682 = vmul.f32 %v2323, %v2681
    %v2683 = vsub.f32 1.0, %v2682
    %v2684 = vmul.f32 %v2681, %v2683
    %v2685 = vadd.f32 %v2681, %v2684
    %vm2686 = vweird.f32 %v2323
    %vm2687 = vweird.f32 %v2681
    %vm2688 = vmor %vm2686, %vm2687
    %v2689 = vsel %vm2688, %v2681, %v2685
    %v2690 = vand.u32 2147483647, %v2323
    %vm2691 = vcmp.eq.f32.partialorder %v2690, 8.507059e+37
    %v2692 = vand.u32 %v2323, 2147483648
    %v2693 = vor.u32 1.1754944e-38, %v2692
    %v2694 = vsel %vm2691, %v2693, %v2689
    %v2695 = vmul.f32 1.0, %v2694
    %v2696 = vrcp.pop %v2324
    %v2697 = vmul.f32 %v2324, %v2696
    %v2698 = vsub.f32 1.0, %v2697
    %v2699 = vmul.f32 %v2696, %v2698
    %v2700 = vadd.f32 %v2696, %v2699
    %vm2701 = vweird.f32 %v2324
    %vm2702 = vweird.f32 %v2696
    %vm2703 = vmor %vm2701, %vm2702
    %v2704 = vsel %vm2703, %v2696, %v2700
    %v2705 = vand.u32 2147483647, %v2324
    %vm2706 = vcmp.eq.f32.partialorder %v2705, 8.507059e+37
    %v2707 = vand.u32 %v2324, 2147483648
    %v2708 = vor.u32 1.1754944e-38, %v2707
    %v2709 = vsel %vm2706, %v2708, %v2704
    %v2710 = vmul.f32 1.0, %v2709
    %v2711 = vrcp.pop %v2325
    %v2712 = vmul.f32 %v2325, %v2711
    %v2713 = vsub.f32 1.0, %v2712
    %v2714 = vmul.f32 %v2711, %v2713
    %v2715 = vadd.f32 %v2711, %v2714
    %vm2716 = vweird.f32 %v2325
    %vm2717 = vweird.f32 %v2711
    %vm2718 = vmor %vm2716, %vm2717
    %v2719 = vsel %vm2718, %v2711, %v2715
    %v2720 = vand.u32 2147483647, %v2325
    %vm2721 = vcmp.eq.f32.partialorder %v2720, 8.507059e+37
    %v2722 = vand.u32 %v2325, 2147483648
    %v2723 = vor.u32 1.1754944e-38, %v2722
    %v2724 = vsel %vm2721, %v2723, %v2719
    %v2725 = vmul.f32 1.0, %v2724
    %v2726 = vrcp.pop %v2326
    %v2727 = vmul.f32 %v2326, %v2726
    %v2728 = vsub.f32 1.0, %v2727
    %v2729 = vmul.f32 %v2726, %v2728
    %v2730 = vadd.f32 %v2726, %v2729
    %vm2731 = vweird.f32 %v2326
    %vm2732 = vweird.f32 %v2726
    %vm2733 = vmor %vm2731, %vm2732
    %v2734 = vsel %vm2733, %v2726, %v2730
    %v2735 = vand.u32 2147483647, %v2326
    %vm2736 = vcmp.eq.f32.partialorder %v2735, 8.507059e+37
    %v2737 = vand.u32 %v2326, 2147483648
    %v2738 = vor.u32 1.1754944e-38, %v2737
    %v2739 = vsel %vm2736, %v2738, %v2734
    %v2740 = vmul.f32 1.0, %v2739
    %v2741 = vrcp.pop %v2327
    %v2742 = vmul.f32 %v2327, %v2741
    %v2743 = vsub.f32 1.0, %v2742
    %v2744 = vmul.f32 %v2741, %v2743
    %v2745 = vadd.f32 %v2741, %v2744
    %vm2746 = vweird.f32 %v2327
    %vm2747 = vweird.f32 %v2741
    %vm2748 = vmor %vm2746, %vm2747
    %v2749 = vsel %vm2748, %v2741, %v2745
    %v2750 = vand.u32 2147483647, %v2327
    %vm2751 = vcmp.eq.f32.partialorder %v2750, 8.507059e+37
    %v2752 = vand.u32 %v2327, 2147483648
    %v2753 = vor.u32 1.1754944e-38, %v2752
    %v2754 = vsel %vm2751, %v2753, %v2749
    %v2755 = vmul.f32 1.0, %v2754
    %v2756 = vrcp.pop %v2328
    %v2757 = vmul.f32 %v2328, %v2756
    %v2758 = vsub.f32 1.0, %v2757
    %v2759 = vmul.f32 %v2756, %v2758
    %v2760 = vadd.f32 %v2756, %v2759
    %vm2761 = vweird.f32 %v2328
    %vm2762 = vweird.f32 %v2756
    %vm2763 = vmor %vm2761, %vm2762
    %v2764 = vsel %vm2763, %v2756, %v2760
    %v2765 = vand.u32 2147483647, %v2328
    %vm2766 = vcmp.eq.f32.partialorder %v2765, 8.507059e+37
    %v2767 = vand.u32 %v2328, 2147483648
    %v2768 = vor.u32 1.1754944e-38, %v2767
    %v2769 = vsel %vm2766, %v2768, %v2764
    %v2770 = vmul.f32 1.0, %v2769
    %v2771 = vrcp.pop %v2329
    %v2772 = vmul.f32 %v2329, %v2771
    %v2773 = vsub.f32 1.0, %v2772
    %v2774 = vmul.f32 %v2771, %v2773
    %v2775 = vadd.f32 %v2771, %v2774
    %vm2776 = vweird.f32 %v2329
    %vm2777 = vweird.f32 %v2771
    %vm2778 = vmor %vm2776, %vm2777
    %v2779 = vsel %vm2778, %v2771, %v2775
    %v2780 = vand.u32 2147483647, %v2329
    %vm2781 = vcmp.eq.f32.partialorder %v2780, 8.507059e+37
    %v2782 = vand.u32 %v2329, 2147483648
    %v2783 = vor.u32 1.1754944e-38, %v2782
    %v2784 = vsel %vm2781, %v2783, %v2779
    %v2785 = vmul.f32 1.0, %v2784
    %v2786 = vrcp.pop %v2330
    %v2787 = vmul.f32 %v2330, %v2786
    %v2788 = vsub.f32 1.0, %v2787
    %v2789 = vmul.f32 %v2786, %v2788
    %v2790 = vadd.f32 %v2786, %v2789
    %vm2791 = vweird.f32 %v2330
    %vm2792 = vweird.f32 %v2786
    %vm2793 = vmor %vm2791, %vm2792
    %v2794 = vsel %vm2793, %v2786, %v2790
    %v2795 = vand.u32 2147483647, %v2330
    %vm2796 = vcmp.eq.f32.partialorder %v2795, 8.507059e+37
    %v2797 = vand.u32 %v2330, 2147483648
    %v2798 = vor.u32 1.1754944e-38, %v2797
    %v2799 = vsel %vm2796, %v2798, %v2794
    %v2800 = vmul.f32 1.0, %v2799
    %v2801 = vrcp.pop %v2331
    %v2802 = vmul.f32 %v2331, %v2801
    %v2803 = vsub.f32 1.0, %v2802
    %v2804 = vmul.f32 %v2801, %v2803
    %v2805 = vadd.f32 %v2801, %v2804
    %vm2806 = vweird.f32 %v2331
    %vm2807 = vweird.f32 %v2801
    %vm2808 = vmor %vm2806, %vm2807
    %v2809 = vsel %vm2808, %v2801, %v2805
    %v2810 = vand.u32 2147483647, %v2331
    %vm2811 = vcmp.eq.f32.partialorder %v2810, 8.507059e+37
    %v2812 = vand.u32 %v2331, 2147483648
    %v2813 = vor.u32 1.1754944e-38, %v2812
    %v2814 = vsel %vm2811, %v2813, %v2809
    %v2815 = vmul.f32 1.0, %v2814
    %v2816 = vrcp.pop %v2332
    %v2817 = vmul.f32 %v2332, %v2816
    %v2818 = vsub.f32 1.0, %v2817
    %v2819 = vmul.f32 %v2816, %v2818
    %v2820 = vadd.f32 %v2816, %v2819
    %vm2821 = vweird.f32 %v2332
    %vm2822 = vweird.f32 %v2816
    %vm2823 = vmor %vm2821, %vm2822
    %v2824 = vsel %vm2823, %v2816, %v2820
    %v2825 = vand.u32 2147483647, %v2332
    %vm2826 = vcmp.eq.f32.partialorder %v2825, 8.507059e+37
    %v2827 = vand.u32 %v2332, 2147483648
    %v2828 = vor.u32 1.1754944e-38, %v2827
    %v2829 = vsel %vm2826, %v2828, %v2824
    %v2830 = vmul.f32 1.0, %v2829
    %v2831 = vrcp.pop %v2333
    %v2832 = vmul.f32 %v2333, %v2831
    %v2833 = vsub.f32 1.0, %v2832
    %v2834 = vmul.f32 %v2831, %v2833
    %v2835 = vadd.f32 %v2831, %v2834
    %vm2836 = vweird.f32 %v2333
    %vm2837 = vweird.f32 %v2831
    %vm2838 = vmor %vm2836, %vm2837
    %v2839 = vsel %vm2838, %v2831, %v2835
    %v2840 = vand.u32 2147483647, %v2333
    %vm2841 = vcmp.eq.f32.partialorder %v2840, 8.507059e+37
    %v2842 = vand.u32 %v2333, 2147483648
    %v2843 = vor.u32 1.1754944e-38, %v2842
    %v2844 = vsel %vm2841, %v2843, %v2839
    %v2845 = vmul.f32 1.0, %v2844
    %v2846 = vrcp.pop %v2334
    %v2847 = vmul.f32 %v2334, %v2846
    %v2848 = vsub.f32 1.0, %v2847
    %v2849 = vmul.f32 %v2846, %v2848
    %v2850 = vadd.f32 %v2846, %v2849
    %vm2851 = vweird.f32 %v2334
    %vm2852 = vweird.f32 %v2846
    %vm2853 = vmor %vm2851, %vm2852
    %v2854 = vsel %vm2853, %v2846, %v2850
    %v2855 = vand.u32 2147483647, %v2334
    %vm2856 = vcmp.eq.f32.partialorder %v2855, 8.507059e+37
    %v2857 = vand.u32 %v2334, 2147483648
    %v2858 = vor.u32 1.1754944e-38, %v2857
    %v2859 = vsel %vm2856, %v2858, %v2854
    %v2860 = vmul.f32 1.0, %v2859
    %v2861 = vrcp.pop %v2335
    %v2862 = vmul.f32 %v2335, %v2861
    %v2863 = vsub.f32 1.0, %v2862
    %v2864 = vmul.f32 %v2861, %v2863
    %v2865 = vadd.f32 %v2861, %v2864
    %vm2866 = vweird.f32 %v2335
    %vm2867 = vweird.f32 %v2861
    %vm2868 = vmor %vm2866, %vm2867
    %v2869 = vsel %vm2868, %v2861, %v2865
    %v2870 = vand.u32 2147483647, %v2335
    %vm2871 = vcmp.eq.f32.partialorder %v2870, 8.507059e+37
    %v2872 = vand.u32 %v2335, 2147483648
    %v2873 = vor.u32 1.1754944e-38, %v2872
    %v2874 = vsel %vm2871, %v2873, %v2869
    %v2875 = vmul.f32 1.0, %v2874
    %v2876 = vrcp.pop %v2336
    %v2877 = vmul.f32 %v2336, %v2876
    %v2878 = vsub.f32 1.0, %v2877
    %v2879 = vmul.f32 %v2876, %v2878
    %v2880 = vadd.f32 %v2876, %v2879
    %vm2881 = vweird.f32 %v2336
    %vm2882 = vweird.f32 %v2876
    %vm2883 = vmor %vm2881, %vm2882
    %v2884 = vsel %vm2883, %v2876, %v2880
    %v2885 = vand.u32 2147483647, %v2336
    %vm2886 = vcmp.eq.f32.partialorder %v2885, 8.507059e+37
    %v2887 = vand.u32 %v2336, 2147483648
    %v2888 = vor.u32 1.1754944e-38, %v2887
    %v2889 = vsel %vm2886, %v2888, %v2884
    %v2890 = vmul.f32 1.0, %v2889
    %v2891 = vrcp.pop %v2337
    %v2892 = vmul.f32 %v2337, %v2891
    %v2893 = vsub.f32 1.0, %v2892
    %v2894 = vmul.f32 %v2891, %v2893
    %v2895 = vadd.f32 %v2891, %v2894
    %vm2896 = vweird.f32 %v2337
    %vm2897 = vweird.f32 %v2891
    %vm2898 = vmor %vm2896, %vm2897
    %v2899 = vsel %vm2898, %v2891, %v2895
    %v2900 = vand.u32 2147483647, %v2337
    %vm2901 = vcmp.eq.f32.partialorder %v2900, 8.507059e+37
    %v2902 = vand.u32 %v2337, 2147483648
    %v2903 = vor.u32 1.1754944e-38, %v2902
    %v2904 = vsel %vm2901, %v2903, %v2899
    %v2905 = vmul.f32 1.0, %v2904
    %v2906 = vrcp.pop %v2338
    %v2907 = vmul.f32 %v2338, %v2906
    %v2908 = vsub.f32 1.0, %v2907
    %v2909 = vmul.f32 %v2906, %v2908
    %v2910 = vadd.f32 %v2906, %v2909
    %vm2911 = vweird.f32 %v2338
    %vm2912 = vweird.f32 %v2906
    %vm2913 = vmor %vm2911, %vm2912
    %v2914 = vsel %vm2913, %v2906, %v2910
    %v2915 = vand.u32 2147483647, %v2338
    %vm2916 = vcmp.eq.f32.partialorder %v2915, 8.507059e+37
    %v2917 = vand.u32 %v2338, 2147483648
    %v2918 = vor.u32 1.1754944e-38, %v2917
    %v2919 = vsel %vm2916, %v2918, %v2914
    %v2920 = vmul.f32 1.0, %v2919
    %v2921 = vrcp.pop %v2339
    %v2922 = vmul.f32 %v2339, %v2921
    %v2923 = vsub.f32 1.0, %v2922
    %v2924 = vmul.f32 %v2921, %v2923
    %v2925 = vadd.f32 %v2921, %v2924
    %vm2926 = vweird.f32 %v2339
    %vm2927 = vweird.f32 %v2921
    %vm2928 = vmor %vm2926, %vm2927
    %v2929 = vsel %vm2928, %v2921, %v2925
    %v2930 = vand.u32 2147483647, %v2339
    %vm2931 = vcmp.eq.f32.partialorder %v2930, 8.507059e+37
    %v2932 = vand.u32 %v2339, 2147483648
    %v2933 = vor.u32 1.1754944e-38, %v2932
    %v2934 = vsel %vm2931, %v2933, %v2929
    %v2935 = vmul.f32 1.0, %v2934
    %v2936 = vrcp.pop %v2340
    %v2937 = vmul.f32 %v2340, %v2936
    %v2938 = vsub.f32 1.0, %v2937
    %v2939 = vmul.f32 %v2936, %v2938
    %v2940 = vadd.f32 %v2936, %v2939
    %vm2941 = vweird.f32 %v2340
    %vm2942 = vweird.f32 %v2936
    %vm2943 = vmor %vm2941, %vm2942
    %v2944 = vsel %vm2943, %v2936, %v2940
    %v2945 = vand.u32 2147483647, %v2340
    %vm2946 = vcmp.eq.f32.partialorder %v2945, 8.507059e+37
    %v2947 = vand.u32 %v2340, 2147483648
    %v2948 = vor.u32 1.1754944e-38, %v2947
    %v2949 = vsel %vm2946, %v2948, %v2944
    %v2950 = vmul.f32 1.0, %v2949
    %v2951 = vrcp.pop %v2341
    %v2952 = vmul.f32 %v2341, %v2951
    %v2953 = vsub.f32 1.0, %v2952
    %v2954 = vmul.f32 %v2951, %v2953
    %v2955 = vadd.f32 %v2951, %v2954
    %vm2956 = vweird.f32 %v2341
    %vm2957 = vweird.f32 %v2951
    %vm2958 = vmor %vm2956, %vm2957
    %v2959 = vsel %vm2958, %v2951, %v2955
    %v2960 = vand.u32 2147483647, %v2341
    %vm2961 = vcmp.eq.f32.partialorder %v2960, 8.507059e+37
    %v2962 = vand.u32 %v2341, 2147483648
    %v2963 = vor.u32 1.1754944e-38, %v2962
    %v2964 = vsel %vm2961, %v2963, %v2959
    %v2965 = vmul.f32 1.0, %v2964
    %v2966 = vrcp.pop %v2342
    %v2967 = vmul.f32 %v2342, %v2966
    %v2968 = vsub.f32 1.0, %v2967
    %v2969 = vmul.f32 %v2966, %v2968
    %v2970 = vadd.f32 %v2966, %v2969
    %vm2971 = vweird.f32 %v2342
    %vm2972 = vweird.f32 %v2966
    %vm2973 = vmor %vm2971, %vm2972
    %v2974 = vsel %vm2973, %v2966, %v2970
    %v2975 = vand.u32 2147483647, %v2342
    %vm2976 = vcmp.eq.f32.partialorder %v2975, 8.507059e+37
    %v2977 = vand.u32 %v2342, 2147483648
    %v2978 = vor.u32 1.1754944e-38, %v2977
    %v2979 = vsel %vm2976, %v2978, %v2974
    %v2980 = vmul.f32 1.0, %v2979
    %v2981 = vrcp.pop %v2343
    %v2982 = vmul.f32 %v2343, %v2981
    %v2983 = vsub.f32 1.0, %v2982
    %v2984 = vmul.f32 %v2981, %v2983
    %v2985 = vadd.f32 %v2981, %v2984
    %vm2986 = vweird.f32 %v2343
    %vm2987 = vweird.f32 %v2981
    %vm2988 = vmor %vm2986, %vm2987
    %v2989 = vsel %vm2988, %v2981, %v2985
    %v2990 = vand.u32 2147483647, %v2343
    %vm2991 = vcmp.eq.f32.partialorder %v2990, 8.507059e+37
    %v2992 = vand.u32 %v2343, 2147483648
    %v2993 = vor.u32 1.1754944e-38, %v2992
    %v2994 = vsel %vm2991, %v2993, %v2989
    %v2995 = vmul.f32 1.0, %v2994
    %v2996 = vrcp.pop %v2344
    %v2997 = vmul.f32 %v2344, %v2996
    %v2998 = vsub.f32 1.0, %v2997
    %v2999 = vmul.f32 %v2996, %v2998
    %v3000 = vadd.f32 %v2996, %v2999
    %vm3001 = vweird.f32 %v2344
    %vm3002 = vweird.f32 %v2996
    %vm3003 = vmor %vm3001, %vm3002
    %v3004 = vsel %vm3003, %v2996, %v3000
    %v3005 = vand.u32 2147483647, %v2344
    %vm3006 = vcmp.eq.f32.partialorder %v3005, 8.507059e+37
    %v3007 = vand.u32 %v2344, 2147483648
    %v3008 = vor.u32 1.1754944e-38, %v3007
    %v3009 = vsel %vm3006, %v3008, %v3004
    %v3010 = vmul.f32 1.0, %v3009
    %v3011 = vrcp.pop %v2345
    %v3012 = vmul.f32 %v2345, %v3011
    %v3013 = vsub.f32 1.0, %v3012
    %v3014 = vmul.f32 %v3011, %v3013
    %v3015 = vadd.f32 %v3011, %v3014
    %vm3016 = vweird.f32 %v2345
    %vm3017 = vweird.f32 %v3011
    %vm3018 = vmor %vm3016, %vm3017
    %v3019 = vsel %vm3018, %v3011, %v3015
    %v3020 = vand.u32 2147483647, %v2345
    %vm3021 = vcmp.eq.f32.partialorder %v3020, 8.507059e+37
    %v3022 = vand.u32 %v2345, 2147483648
    %v3023 = vor.u32 1.1754944e-38, %v3022
    %v3024 = vsel %vm3021, %v3023, %v3019
    %v3025 = vmul.f32 1.0, %v3024
    %v3026 = vrcp.pop %v2346
    %v3027 = vmul.f32 %v2346, %v3026
    %v3028 = vsub.f32 1.0, %v3027
    %v3029 = vmul.f32 %v3026, %v3028
    %v3030 = vadd.f32 %v3026, %v3029
    %vm3031 = vweird.f32 %v2346
    %vm3032 = vweird.f32 %v3026
    %vm3033 = vmor %vm3031, %vm3032
    %v3034 = vsel %vm3033, %v3026, %v3030
    %v3035 = vand.u32 2147483647, %v2346
    %vm3036 = vcmp.eq.f32.partialorder %v3035, 8.507059e+37
    %v3037 = vand.u32 %v2346, 2147483648
    %v3038 = vor.u32 1.1754944e-38, %v3037
    %v3039 = vsel %vm3036, %v3038, %v3034
    %v3040 = vmul.f32 1.0, %v3039
    %v3041 = vrcp.pop %v2347
    %v3042 = vmul.f32 %v2347, %v3041
    %v3043 = vsub.f32 1.0, %v3042
    %v3044 = vmul.f32 %v3041, %v3043
    %v3045 = vadd.f32 %v3041, %v3044
    %vm3046 = vweird.f32 %v2347
    %vm3047 = vweird.f32 %v3041
    %vm3048 = vmor %vm3046, %vm3047
    %v3049 = vsel %vm3048, %v3041, %v3045
    %v3050 = vand.u32 2147483647, %v2347
    %vm3051 = vcmp.eq.f32.partialorder %v3050, 8.507059e+37
    %v3052 = vand.u32 %v2347, 2147483648
    %v3053 = vor.u32 1.1754944e-38, %v3052
    %v3054 = vsel %vm3051, %v3053, %v3049
    %v3055 = vmul.f32 1.0, %v3054
    %v3056 = vrcp.pop %v2348
    %v3057 = vmul.f32 %v2348, %v3056
    %v3058 = vsub.f32 1.0, %v3057
    %v3059 = vmul.f32 %v3056, %v3058
    %v3060 = vadd.f32 %v3056, %v3059
    %vm3061 = vweird.f32 %v2348
    %vm3062 = vweird.f32 %v3056
    %vm3063 = vmor %vm3061, %vm3062
    %v3064 = vsel %vm3063, %v3056, %v3060
    %v3065 = vand.u32 2147483647, %v2348
    %vm3066 = vcmp.eq.f32.partialorder %v3065, 8.507059e+37
    %v3067 = vand.u32 %v2348, 2147483648
    %v3068 = vor.u32 1.1754944e-38, %v3067
    %v3069 = vsel %vm3066, %v3068, %v3064
    %v3070 = vmul.f32 1.0, %v3069
    %v3071 = vrcp.pop %v2349
    %v3072 = vmul.f32 %v2349, %v3071
    %v3073 = vsub.f32 1.0, %v3072
    %v3074 = vmul.f32 %v3071, %v3073
    %v3075 = vadd.f32 %v3071, %v3074
    %vm3076 = vweird.f32 %v2349
    %vm3077 = vweird.f32 %v3071
    %vm3078 = vmor %vm3076, %vm3077
    %v3079 = vsel %vm3078, %v3071, %v3075
    %v3080 = vand.u32 2147483647, %v2349
    %vm3081 = vcmp.eq.f32.partialorder %v3080, 8.507059e+37
    %v3082 = vand.u32 %v2349, 2147483648
    %v3083 = vor.u32 1.1754944e-38, %v3082
    %v3084 = vsel %vm3081, %v3083, %v3079
    %v3085 = vmul.f32 1.0, %v3084
    %v3086 = vrcp.pop %v2350
    %v3087 = vmul.f32 %v2350, %v3086
    %v3088 = vsub.f32 1.0, %v3087
    %v3089 = vmul.f32 %v3086, %v3088
    %v3090 = vadd.f32 %v3086, %v3089
    %vm3091 = vweird.f32 %v2350
    %vm3092 = vweird.f32 %v3086
    %vm3093 = vmor %vm3091, %vm3092
    %v3094 = vsel %vm3093, %v3086, %v3090
    %v3095 = vand.u32 2147483647, %v2350
    %vm3096 = vcmp.eq.f32.partialorder %v3095, 8.507059e+37
    %v3097 = vand.u32 %v2350, 2147483648
    %v3098 = vor.u32 1.1754944e-38, %v3097
    %v3099 = vsel %vm3096, %v3098, %v3094
    %v3100 = vmul.f32 1.0, %v3099
    %v3101 = vrcp.pop %v2351
    %v3102 = vmul.f32 %v2351, %v3101
    %v3103 = vsub.f32 1.0, %v3102
    %v3104 = vmul.f32 %v3101, %v3103
    %v3105 = vadd.f32 %v3101, %v3104
    %vm3106 = vweird.f32 %v2351
    %vm3107 = vweird.f32 %v3101
    %vm3108 = vmor %vm3106, %vm3107
    %v3109 = vsel %vm3108, %v3101, %v3105
    %v3110 = vand.u32 2147483647, %v2351
    %vm3111 = vcmp.eq.f32.partialorder %v3110, 8.507059e+37
    %v3112 = vand.u32 %v2351, 2147483648
    %v3113 = vor.u32 1.1754944e-38, %v3112
    %v3114 = vsel %vm3111, %v3113, %v3109
    %v3115 = vmul.f32 1.0, %v3114
    %v3116 = vrcp.pop %v2352
    %v3117 = vmul.f32 %v2352, %v3116
    %v3118 = vsub.f32 1.0, %v3117
    %v3119 = vmul.f32 %v3116, %v3118
    %v3120 = vadd.f32 %v3116, %v3119
    %vm3121 = vweird.f32 %v2352
    %vm3122 = vweird.f32 %v3116
    %vm3123 = vmor %vm3121, %vm3122
    %v3124 = vsel %vm3123, %v3116, %v3120
    %v3125 = vand.u32 2147483647, %v2352
    %vm3126 = vcmp.eq.f32.partialorder %v3125, 8.507059e+37
    %v3127 = vand.u32 %v2352, 2147483648
    %v3128 = vor.u32 1.1754944e-38, %v3127
    %v3129 = vsel %vm3126, %v3128, %v3124
    %v3130 = vmul.f32 1.0, %v3129
    %v3131 = vrcp.pop %v2353
    %v3132 = vmul.f32 %v2353, %v3131
    %v3133 = vsub.f32 1.0, %v3132
    %v3134 = vmul.f32 %v3131, %v3133
    %v3135 = vadd.f32 %v3131, %v3134
    %vm3136 = vweird.f32 %v2353
    %vm3137 = vweird.f32 %v3131
    %vm3138 = vmor %vm3136, %vm3137
    %v3139 = vsel %vm3138, %v3131, %v3135
    %v3140 = vand.u32 2147483647, %v2353
    %vm3141 = vcmp.eq.f32.partialorder %v3140, 8.507059e+37
    %v3142 = vand.u32 %v2353, 2147483648
    %v3143 = vor.u32 1.1754944e-38, %v3142
    %v3144 = vsel %vm3141, %v3143, %v3139
    %v3145 = vmul.f32 1.0, %v3144
    %v3146 = vrcp.pop %v2354
    %v3147 = vmul.f32 %v2354, %v3146
    %v3148 = vsub.f32 1.0, %v3147
    %v3149 = vmul.f32 %v3146, %v3148
    %v3150 = vadd.f32 %v3146, %v3149
    %vm3151 = vweird.f32 %v2354
    %vm3152 = vweird.f32 %v3146
    %vm3153 = vmor %vm3151, %vm3152
    %v3154 = vsel %vm3153, %v3146, %v3150
    %v3155 = vand.u32 2147483647, %v2354
    %vm3156 = vcmp.eq.f32.partialorder %v3155, 8.507059e+37
    %v3157 = vand.u32 %v2354, 2147483648
    %v3158 = vor.u32 1.1754944e-38, %v3157
    %v3159 = vsel %vm3156, %v3158, %v3154
    %v3160 = vmul.f32 1.0, %v3159
    %v3161 = vrcp.pop %v2355
    %v3162 = vmul.f32 %v2355, %v3161
    %v3163 = vsub.f32 1.0, %v3162
    %v3164 = vmul.f32 %v3161, %v3163
    %v3165 = vadd.f32 %v3161, %v3164
    %vm3166 = vweird.f32 %v2355
    %vm3167 = vweird.f32 %v3161
    %vm3168 = vmor %vm3166, %vm3167
    %v3169 = vsel %vm3168, %v3161, %v3165
    %v3170 = vand.u32 2147483647, %v2355
    %vm3171 = vcmp.eq.f32.partialorder %v3170, 8.507059e+37
    %v3172 = vand.u32 %v2355, 2147483648
    %v3173 = vor.u32 1.1754944e-38, %v3172
    %v3174 = vsel %vm3171, %v3173, %v3169
    %v3175 = vmul.f32 1.0, %v3174
    %v3176 = vrcp.pop %v2356
    %v3177 = vmul.f32 %v2356, %v3176
    %v3178 = vsub.f32 1.0, %v3177
    %v3179 = vmul.f32 %v3176, %v3178
    %v3180 = vadd.f32 %v3176, %v3179
    %vm3181 = vweird.f32 %v2356
    %vm3182 = vweird.f32 %v3176
    %vm3183 = vmor %vm3181, %vm3182
    %v3184 = vsel %vm3183, %v3176, %v3180
    %v3185 = vand.u32 2147483647, %v2356
    %vm3186 = vcmp.eq.f32.partialorder %v3185, 8.507059e+37
    %v3187 = vand.u32 %v2356, 2147483648
    %v3188 = vor.u32 1.1754944e-38, %v3187
    %v3189 = vsel %vm3186, %v3188, %v3184
    %v3190 = vmul.f32 1.0, %v3189
    %v3191 = vrcp.pop %v2357
    %v3192 = vmul.f32 %v2357, %v3191
    %v3193 = vsub.f32 1.0, %v3192
    %v3194 = vmul.f32 %v3191, %v3193
    %v3195 = vadd.f32 %v3191, %v3194
    %vm3196 = vweird.f32 %v2357
    %vm3197 = vweird.f32 %v3191
    %vm3198 = vmor %vm3196, %vm3197
    %v3199 = vsel %vm3198, %v3191, %v3195
    %v3200 = vand.u32 2147483647, %v2357
    %vm3201 = vcmp.eq.f32.partialorder %v3200, 8.507059e+37
    %v3202 = vand.u32 %v2357, 2147483648
    %v3203 = vor.u32 1.1754944e-38, %v3202
    %v3204 = vsel %vm3201, %v3203, %v3199
    %v3205 = vmul.f32 1.0, %v3204
    %v3206 = vrcp.pop %v2358
    %v3207 = vmul.f32 %v2358, %v3206
    %v3208 = vsub.f32 1.0, %v3207
    %v3209 = vmul.f32 %v3206, %v3208
    %v3210 = vadd.f32 %v3206, %v3209
    %vm3211 = vweird.f32 %v2358
    %vm3212 = vweird.f32 %v3206
    %vm3213 = vmor %vm3211, %vm3212
    %v3214 = vsel %vm3213, %v3206, %v3210
    %v3215 = vand.u32 2147483647, %v2358
    %vm3216 = vcmp.eq.f32.partialorder %v3215, 8.507059e+37
    %v3217 = vand.u32 %v2358, 2147483648
    %v3218 = vor.u32 1.1754944e-38, %v3217
    %v3219 = vsel %vm3216, %v3218, %v3214
    %v3220 = vmul.f32 1.0, %v3219
    %v3221 = vrcp.pop %v2359
    %v3222 = vmul.f32 %v2359, %v3221
    %v3223 = vsub.f32 1.0, %v3222
    %v3224 = vmul.f32 %v3221, %v3223
    %v3225 = vadd.f32 %v3221, %v3224
    %vm3226 = vweird.f32 %v2359
    %vm3227 = vweird.f32 %v3221
    %vm3228 = vmor %vm3226, %vm3227
    %v3229 = vsel %vm3228, %v3221, %v3225
    %v3230 = vand.u32 2147483647, %v2359
    %vm3231 = vcmp.eq.f32.partialorder %v3230, 8.507059e+37
    %v3232 = vand.u32 %v2359, 2147483648
    %v3233 = vor.u32 1.1754944e-38, %v3232
    %v3234 = vsel %vm3231, %v3233, %v3229
    %v3235 = vmul.f32 1.0, %v3234
    %v3236 = vrcp.pop %v2360
    %v3237 = vmul.f32 %v2360, %v3236
    %v3238 = vsub.f32 1.0, %v3237
    %v3239 = vmul.f32 %v3236, %v3238
    %v3240 = vadd.f32 %v3236, %v3239
    %vm3241 = vweird.f32 %v2360
    %vm3242 = vweird.f32 %v3236
    %vm3243 = vmor %vm3241, %vm3242
    %v3244 = vsel %vm3243, %v3236, %v3240
    %v3245 = vand.u32 2147483647, %v2360
    %vm3246 = vcmp.eq.f32.partialorder %v3245, 8.507059e+37
    %v3247 = vand.u32 %v2360, 2147483648
    %v3248 = vor.u32 1.1754944e-38, %v3247
    %v3249 = vsel %vm3246, %v3248, %v3244
    %v3250 = vmul.f32 1.0, %v3249
    %v3251 = vrcp.pop %v2361
    %v3252 = vmul.f32 %v2361, %v3251
    %v3253 = vsub.f32 1.0, %v3252
    %v3254 = vmul.f32 %v3251, %v3253
    %v3255 = vadd.f32 %v3251, %v3254
    %vm3256 = vweird.f32 %v2361
    %vm3257 = vweird.f32 %v3251
    %vm3258 = vmor %vm3256, %vm3257
    %v3259 = vsel %vm3258, %v3251, %v3255
    %v3260 = vand.u32 2147483647, %v2361
    %vm3261 = vcmp.eq.f32.partialorder %v3260, 8.507059e+37
    %v3262 = vand.u32 %v2361, 2147483648
    %v3263 = vor.u32 1.1754944e-38, %v3262
    %v3264 = vsel %vm3261, %v3263, %v3259
    %v3265 = vmul.f32 1.0, %v3264
    %v3266 = vrcp.pop %v2362
    %v3267 = vmul.f32 %v2362, %v3266
    %v3268 = vsub.f32 1.0, %v3267
    %v3269 = vmul.f32 %v3266, %v3268
    %v3270 = vadd.f32 %v3266, %v3269
    %vm3271 = vweird.f32 %v2362
    %vm3272 = vweird.f32 %v3266
    %vm3273 = vmor %vm3271, %vm3272
    %v3274 = vsel %vm3273, %v3266, %v3270
    %v3275 = vand.u32 2147483647, %v2362
    %vm3276 = vcmp.eq.f32.partialorder %v3275, 8.507059e+37
    %v3277 = vand.u32 %v2362, 2147483648
    %v3278 = vor.u32 1.1754944e-38, %v3277
    %v3279 = vsel %vm3276, %v3278, %v3274
    %v3280 = vmul.f32 1.0, %v3279
    %v3281 = vrcp.pop %v2363
    %v3282 = vmul.f32 %v2363, %v3281
    %v3283 = vsub.f32 1.0, %v3282
    %v3284 = vmul.f32 %v3281, %v3283
    %v3285 = vadd.f32 %v3281, %v3284
    %vm3286 = vweird.f32 %v2363
    %vm3287 = vweird.f32 %v3281
    %vm3288 = vmor %vm3286, %vm3287
    %v3289 = vsel %vm3288, %v3281, %v3285
    %v3290 = vand.u32 2147483647, %v2363
    %vm3291 = vcmp.eq.f32.partialorder %v3290, 8.507059e+37
    %v3292 = vand.u32 %v2363, 2147483648
    %v3293 = vor.u32 1.1754944e-38, %v3292
    %v3294 = vsel %vm3291, %v3293, %v3289
    %v3295 = vmul.f32 1.0, %v3294
    %v3296 = vrcp.pop %v2364
    %v3297 = vmul.f32 %v2364, %v3296
    %v3298 = vsub.f32 1.0, %v3297
    %v3299 = vmul.f32 %v3296, %v3298
    %v3300 = vadd.f32 %v3296, %v3299
    %vm3301 = vweird.f32 %v2364
    %vm3302 = vweird.f32 %v3296
    %vm3303 = vmor %vm3301, %vm3302
    %v3304 = vsel %vm3303, %v3296, %v3300
    %v3305 = vand.u32 2147483647, %v2364
    %vm3306 = vcmp.eq.f32.partialorder %v3305, 8.507059e+37
    %v3307 = vand.u32 %v2364, 2147483648
    %v3308 = vor.u32 1.1754944e-38, %v3307
    %v3309 = vsel %vm3306, %v3308, %v3304
    %v3310 = vmul.f32 1.0, %v3309
    %v3311 = vrcp.pop %v2365
    %v3312 = vmul.f32 %v2365, %v3311
    %v3313 = vsub.f32 1.0, %v3312
    %v3314 = vmul.f32 %v3311, %v3313
    %v3315 = vadd.f32 %v3311, %v3314
    %vm3316 = vweird.f32 %v2365
    %vm3317 = vweird.f32 %v3311
    %vm3318 = vmor %vm3316, %vm3317
    %v3319 = vsel %vm3318, %v3311, %v3315
    %v3320 = vand.u32 2147483647, %v2365
    %vm3321 = vcmp.eq.f32.partialorder %v3320, 8.507059e+37
    %v3322 = vand.u32 %v2365, 2147483648
    %v3323 = vor.u32 1.1754944e-38, %v3322
    %v3324 = vsel %vm3321, %v3323, %v3319
    %v3325 = vmul.f32 1.0, %v3324
    %3326 = vst [vmem:[#allocation14] sm:$0xff] %v2380
    %3327 = vst [vmem:[#allocation14 + $0x8] sm:$0xff] %v2395
    %3328 = vst [vmem:[#allocation14 + $0x10] sm:$0xff] %v2410
    %3329 = vst [vmem:[#allocation14 + $0x18] sm:$0xff] %v2425
    %3330 = vst [vmem:[#allocation14 + $0x20] sm:$0xff] %v2440
    %3331 = vst [vmem:[#allocation14 + $0x28] sm:$0xff] %v2455
    %3332 = vst [vmem:[#allocation14 + $0x30] sm:$0xff] %v2470
    %3333 = vst [vmem:[#allocation14 + $0x38] sm:$0xff] %v2485
    %3334 = vst [vmem:[#allocation14 + $0x40] sm:$0xff] %v2500
    %3335 = vst [vmem:[#allocation14 + $0x48] sm:$0xff] %v2515
    %3336 = vst [vmem:[#allocation14 + $0x50] sm:$0xff] %v2530
    %3337 = vst [vmem:[#allocation14 + $0x58] sm:$0xff] %v2545
    %3338 = vst [vmem:[#allocation14 + $0x60] sm:$0xff] %v2560
    %3339 = vst [vmem:[#allocation14 + $0x68] sm:$0xff] %v2575
    %3340 = vst [vmem:[#allocation14 + $0x70] sm:$0xff] %v2590
    %3341 = vst [vmem:[#allocation14 + $0x78] sm:$0xff] %v2605
    %3342 = vst [vmem:[#allocation14 + $0x80] sm:$0xff] %v2620
    %3343 = vst [vmem:[#allocation14 + $0x88] sm:$0xff] %v2635
    %3344 = vst [vmem:[#allocation14 + $0x90] sm:$0xff] %v2650
    %3345 = vst [vmem:[#allocation14 + $0x98] sm:$0xff] %v2665
    %3346 = vst [vmem:[#allocation14 + $0xa0] sm:$0xff] %v2680
    %3347 = vst [vmem:[#allocation14 + $0xa8] sm:$0xff] %v2695
    %3348 = vst [vmem:[#allocation14 + $0xb0] sm:$0xff] %v2710
    %3349 = vst [vmem:[#allocation14 + $0xb8] sm:$0xff] %v2725
    %3350 = vst [vmem:[#allocation14 + $0xc0] sm:$0xff] %v2740
    %3351 = vst [vmem:[#allocation14 + $0xc8] sm:$0xff] %v2755
    %3352 = vst [vmem:[#allocation14 + $0xd0] sm:$0xff] %v2770
    %3353 = vst [vmem:[#allocation14 + $0xd8] sm:$0xff] %v2785
    %3354 = vst [vmem:[#allocation14 + $0xe0] sm:$0xff] %v2800
    %3355 = vst [vmem:[#allocation14 + $0xe8] sm:$0xff] %v2815
    %3356 = vst [vmem:[#allocation14 + $0xf0] sm:$0xff] %v2830
    %3357 = vst [vmem:[#allocation14 + $0xf8] sm:$0xff] %v2845
    %3358 = vst [vmem:[#allocation14 + $0x100] sm:$0xff] %v2860
    %3359 = vst [vmem:[#allocation14 + $0x108] sm:$0xff] %v2875
    %3360 = vst [vmem:[#allocation14 + $0x110] sm:$0xff] %v2890
    %3361 = vst [vmem:[#allocation14 + $0x118] sm:$0xff] %v2905
    %3362 = vst [vmem:[#allocation14 + $0x120] sm:$0xff] %v2920
    %3363 = vst [vmem:[#allocation14 + $0x128] sm:$0xff] %v2935
    %3364 = vst [vmem:[#allocation14 + $0x130] sm:$0xff] %v2950
    %3365 = vst [vmem:[#allocation14 + $0x138] sm:$0xff] %v2965
    %3366 = vst [vmem:[#allocation14 + $0x140] sm:$0xff] %v2980
    %3367 = vst [vmem:[#allocation14 + $0x148] sm:$0xff] %v2995
    %3368 = vst [vmem:[#allocation14 + $0x150] sm:$0xff] %v3010
    %3369 = vst [vmem:[#allocation14 + $0x158] sm:$0xff] %v3025
    %3370 = vst [vmem:[#allocation14 + $0x160] sm:$0xff] %v3040
    %3371 = vst [vmem:[#allocation14 + $0x168] sm:$0xff] %v3055
    %3372 = vst [vmem:[#allocation14 + $0x170] sm:$0xff] %v3070
    %3373 = vst [vmem:[#allocation14 + $0x178] sm:$0xff] %v3085
    %3374 = vst [vmem:[#allocation14 + $0x180] sm:$0xff] %v3100
    %3375 = vst [vmem:[#allocation14 + $0x188] sm:$0xff] %v3115
    %3376 = vst [vmem:[#allocation14 + $0x190] sm:$0xff] %v3130
    %3377 = vst [vmem:[#allocation14 + $0x198] sm:$0xff] %v3145
    %3378 = vst [vmem:[#allocation14 + $0x1a0] sm:$0xff] %v3160
    %3379 = vst [vmem:[#allocation14 + $0x1a8] sm:$0xff] %v3175
    %3380 = vst [vmem:[#allocation14 + $0x1b0] sm:$0xff] %v3190
    %3381 = vst [vmem:[#allocation14 + $0x1b8] sm:$0xff] %v3205
    %3382 = vst [vmem:[#allocation14 + $0x1c0] sm:$0xff] %v3220
    %3383 = vst [vmem:[#allocation14 + $0x1c8] sm:$0xff] %v3235
    %3384 = vst [vmem:[#allocation14 + $0x1d0] sm:$0xff] %v3250
    %3385 = vst [vmem:[#allocation14 + $0x1d8] sm:$0xff] %v3265
    %3386 = vst [vmem:[#allocation14 + $0x1e0] sm:$0xff] %v3280
    %3387 = vst [vmem:[#allocation14 + $0x1e8] sm:$0xff] %v3295
    %3388 = vst [vmem:[#allocation14 + $0x1f0] sm:$0xff] %v3310
    %3389 = vst [vmem:[#allocation14 + $0x1f8] sm:$0xff] %v3325
    %3390 = vst [vmem:[#allocation15] sm:$0xff] %v1015
    %3391 = vst [vmem:[#allocation15 + $0x8] sm:$0xff] %v1018
    %3392 = vst [vmem:[#allocation15 + $0x10] sm:$0xff] %v1021
    %3393 = vst [vmem:[#allocation15 + $0x18] sm:$0xff] %v1024
    %3394 = vst [vmem:[#allocation15 + $0x20] sm:$0xff] %v1027
    %3395 = vst [vmem:[#allocation15 + $0x28] sm:$0xff] %v1030
    %3396 = vst [vmem:[#allocation15 + $0x30] sm:$0xff] %v1033
    %3397 = vst [vmem:[#allocation15 + $0x38] sm:$0xff] %v1036
    %3398 = vst [vmem:[#allocation15 + $0x40] sm:$0xff] %v1039
    %3399 = vst [vmem:[#allocation15 + $0x48] sm:$0xff] %v1042
    %3400 = vst [vmem:[#allocation15 + $0x50] sm:$0xff] %v1045
    %3401 = vst [vmem:[#allocation15 + $0x58] sm:$0xff] %v1048
    %3402 = vst [vmem:[#allocation15 + $0x60] sm:$0xff] %v1051
    %3403 = vst [vmem:[#allocation15 + $0x68] sm:$0xff] %v1054
    %3404 = vst [vmem:[#allocation15 + $0x70] sm:$0xff] %v1057
    %3405 = vst [vmem:[#allocation15 + $0x78] sm:$0xff] %v1060
    // Predicated region
    $region70: #{tpu_custom_call.1} parent=1 // pred_check
      _
    $region71: #{tpu_custom_call.1} parent=1 // pred_check_branch
      %3407 = sbr.rel (0) target = $region73
    $region72: #{tpu_custom_call.1} parent=1 // pred_region
      %3409 = vsyncadd [#allocation4], 0
      %s3410 = sshll.u32 [#allocation14], 4
      %s3411 = int_to_ptr.vmem [resolvable:$true] %s3410
      %s3412 = sshll.u32 %s10, 4
      %s3413 = int_to_ptr.hbm [resolvable:$true] %s3412
      %3418 = dma.vmem_to_hbm [thread:$0]  %s3411, 8192, %s3413, [#allocation4], 512, 512, 32
    $region73: #{tpu_custom_call.1} parent=1 // pred_fallthru
      _
    // Predicated region
    $region74: #{tpu_custom_call.1} parent=1 // pred_check
      _
    $region75: #{tpu_custom_call.1} parent=1 // pred_check_branch
      %3420 = sbr.rel (0) target = $region77
    $region76: #{tpu_custom_call.1} parent=1 // pred_region
      %3422 = vsyncadd [#allocation16], 0
      %s3423 = sshll.u32 [#allocation15], 4
      %s3424 = int_to_ptr.vmem [resolvable:$true] %s3423
      %s3425 = sshll.u32 %s11, 4
      %s3426 = int_to_ptr.hbm [resolvable:$true] %s3425
      %3431 = dma.vmem_to_hbm [thread:$0]  %s3424, 2048, %s3426, [#allocation16], 128, 128, 8
    $region77: #{tpu_custom_call.1} parent=1 // pred_fallthru
      _
    // Predicated region
    $region78: #{tpu_custom_call.1} parent=1 // pred_check
      _
    $region79: #{tpu_custom_call.1} parent=1 // pred_check_branch
      %3433 = sbr.rel (0) target = $region81
    $region80: #{tpu_custom_call.1} parent=1 // pred_region
      %3435 = dma.done [#allocation4], 8192
    $region81: #{tpu_custom_call.1} parent=1 // pred_fallthru
      _
    // Predicated region
    $region82: #{tpu_custom_call.1} parent=1 // pred_check
      _
    $region83: #{tpu_custom_call.1} parent=1 // pred_check_branch
      %3437 = sbr.rel (0) target = $region85
    $region84: #{tpu_custom_call.1} parent=1 // pred_region
      %3439 = dma.done [#allocation16], 2048
    $region85: #{tpu_custom_call.1} parent=1 // pred_fallthru
      _
    %3440 = vsyncpa [#allocation3], 1
    %3441 = vsyncpa [#allocation6], 1
    %3442 = vsyncpa [#allocation9], 1
    %3443 = vsyncpa [#allocation12], 1
    %3444 = vsyncpa [#allocation4], 1
    %3445 = vsyncpa [#allocation16], 1

</llo_original>
